<compile_context>
chip_gen: v7x
topology: tpu7x:2x2x1
jax: 0.10.0
libtpu: 0.0.40
codegen_flags: <defaults>
</compile_context>

<pallas_src>
import jax
import jax.numpy as jnp
from jax import lax
from jax.experimental import pallas as pl
from jax.experimental.pallas import tpu as pltpu

# ---------------- configuration (small, consistent with the module) ---------
B = 2          # batch
DIM = 32       # channel dim (dim)
H = 8
W = 8
N = H * W      # sequence length = H*W = 64
HIDDEN_RATE = 4
HIDDEN = int(DIM * HIDDEN_RATE)   # 128
NUM_HEADS = 4
HEAD_DIM = DIM // NUM_HEADS       # 8
SCALE = 1.0 / (HEAD_DIM ** 0.5)
LN_EPS = 1e-5

# rows of the packed small-parameter operand (f32, lane-padded to HIDDEN)
_LN1_G, _LN1_B, _LN2_G, _LN2_B, _B_Q, _B_V, _B_O, _C2, _C1 = range(9)
_N_SMALL_ROWS = 9


def _gelu_tanh(x):
    # TODO(synk): nn.GELU default is the exact erf form; tanh approximation is
    # used here for a clean EUP lowering (numerically very close).
    c = 0.7978845608028654  # sqrt(2/pi)
    return 0.5 * x * (1.0 + jnp.tanh(c * (x + 0.044715 * x * x * x)))


def _layernorm(x, gamma, beta):
    mu = jnp.mean(x, axis=-1, keepdims=True)
    xc = x - mu
    var = jnp.mean(xc * xc, axis=-1, keepdims=True)
    return xc * lax.rsqrt(var + LN_EPS) * gamma + beta


# ---------------- fused kernel: attn branch + mlp branch ---------------------
def fused_block_kernel(x_ref, sm_ref, wqkv_ref, wo_ref, w1_ref, w2_ref, o_ref):
    # x_ref: (B, DIM, N) — native NCHW(-flattened) layout.  One small on-chip
    # transpose per batch stacks it into a token-major (B*N, DIM) activation.
    x = jnp.concatenate(
        [jnp.transpose(x_ref[b]) for b in range(B)], axis=0
    ).astype(jnp.float32)                                       # (B*N, DIM) f32

    sm = sm_ref[...]                                            # (9, HIDDEN) f32
    ln1_g = sm[_LN1_G:_LN1_G + 1, :DIM]
    ln1_b = sm[_LN1_B:_LN1_B + 1, :DIM]
    ln2_g = sm[_LN2_G:_LN2_G + 1, :DIM]
    ln2_b = sm[_LN2_B:_LN2_B + 1, :DIM]
    b_q = sm[_B_Q:_B_Q + 1, :DIM]     # already multiplied by SCALE at pack time
    b_v = sm[_B_V:_B_V + 1, :DIM]
    b_o = sm[_B_O:_B_O + 1, :DIM]
    c2 = sm[_C2:_C2 + 1, :DIM]
    c1 = sm[_C1:_C1 + 1, :]

    # ------------------- x = x + MHSA(LN1(x)) -------------------
    xn = _layernorm(x, ln1_g, ln1_b).astype(jnp.bfloat16)       # (BN, DIM) bf16
    # One fused QKV matmul; heads packed along lanes; SCALE folded into w_q/b_q.
    qkv = jnp.dot(xn, wqkv_ref[...],
                  preferred_element_type=jnp.float32)           # (BN, 3*DIM) f32
    # K bias is dropped: softmax is shift-invariant along the key axis.
    q = (qkv[:, 0:DIM] + b_q).reshape(B, N, DIM).astype(jnp.bfloat16)
    k = qkv[:, DIM:2 * DIM].reshape(B, N, DIM).astype(jnp.bfloat16)
    v = (qkv[:, 2 * DIM:3 * DIM] + b_v).reshape(B, N, DIM).astype(jnp.bfloat16)

    heads = []
    for h in range(NUM_HEADS):                                  # static unroll (4)
        sl = slice(h * HEAD_DIM, (h + 1) * HEAD_DIM)
        # Batched (over B) NT score matmul — no explicit k transpose.
        s = lax.dot_general(q[:, :, sl], k[:, :, sl],
                            (((2,), (2,)), ((0,), (0,))),
                            preferred_element_type=jnp.float32)  # (B, N, N)
        s = s - jnp.max(s, axis=-1, keepdims=True)
        p = jnp.exp(s)
        p = p * pl.reciprocal(jnp.sum(p, axis=-1, keepdims=True), approx=True)
        heads.append(lax.dot_general(p.astype(jnp.bfloat16), v[:, :, sl],
                                     (((2,), (1,)), ((0,), (0,))),
                                     preferred_element_type=jnp.float32))
    # Re-pack heads along lanes -> single (BN,DIM)x(DIM,DIM) output projection.
    attn = jnp.concatenate(heads, axis=-1).reshape(B * N, DIM)   # (BN, DIM) f32
    attn = jnp.dot(attn.astype(jnp.bfloat16), wo_ref[...],
                   preferred_element_type=jnp.float32) + b_o
    x = x + attn                                                 # residual

    # ------------------- x = x + MLP(LN2(x)) -------------------
    xn2 = _layernorm(x, ln2_g, ln2_b).astype(jnp.bfloat16)
    hid = jnp.dot(xn2, w1_ref[...],
                  preferred_element_type=jnp.float32) + c1       # (BN, HIDDEN)
    hid = _gelu_tanh(hid).astype(jnp.bfloat16)
    x = x + (jnp.dot(hid, w2_ref[...],
                     preferred_element_type=jnp.float32) + c2)   # residual

    # Write back in native (B, DIM, N) layout so the wrapper only reshapes.
    for b in range(B):
        o_ref[b] = jnp.transpose(x[b * N:(b + 1) * N, :]).astype(o_ref.dtype)


# ---------------- parameter packing ------------------------------------------
def _pack_params(p):
    bf16 = jnp.bfloat16
    # Heads packed along output lanes; SCALE folded into the q weights / bias.
    wq = jnp.transpose(p["w_q"] * SCALE, (1, 0, 2)).reshape(DIM, DIM)
    wk = jnp.transpose(p["w_k"], (1, 0, 2)).reshape(DIM, DIM)
    wv = jnp.transpose(p["w_v"], (1, 0, 2)).reshape(DIM, DIM)
    w_qkv = jnp.concatenate([wq, wk, wv], axis=1).astype(bf16)   # (DIM, 3*DIM)
    w_o = p["w_o"].reshape(DIM, DIM).astype(bf16)                # (DIM, DIM)
    w1 = p["w1"].astype(bf16)                                    # (DIM, HIDDEN)
    w2 = p["w2"].astype(bf16)                                    # (HIDDEN, DIM)

    def pad(v):  # (1, w) -> (1, HIDDEN), zero lane-padded
        return jnp.pad(v, ((0, 0), (0, HIDDEN - v.shape[-1])))

    smalls = jnp.concatenate([
        pad(p["ln1_g"]), pad(p["ln1_b"]), pad(p["ln2_g"]), pad(p["ln2_b"]),
        pad((p["b_q"] * SCALE).reshape(1, DIM)),
        pad(p["b_v"].reshape(1, DIM)),
        pad(p["b_o"]), pad(p["c2"]),
        p["c1"],
    ], axis=0).astype(jnp.float32)                               # (9, HIDDEN)
    return smalls, w_qkv, w_o, w1, w2


# ---------------- wrapper -----------------------------------------------------
@jax.jit
def basic_block_forward(x_nchw, params):
    # (B, C, H, W) -> (B, C, H*W): pure reshape (no HBM layout round-trip).
    x = x_nchw.reshape(B, DIM, N)
    smalls, w_qkv, w_o, w1, w2 = _pack_params(params)

    vmem = pl.BlockSpec(memory_space=pltpu.MemorySpace.VMEM)
    out = pl.pallas_call(
        fused_block_kernel,
        out_shape=jax.ShapeDtypeStruct((B, DIM, N), x.dtype),
        in_specs=[vmem] * 6,
        out_specs=vmem,
    )(x, smalls, w_qkv, w_o, w1, w2)

    # (B, C, H*W) -> (B, C, H, W): pure reshape.
    return out.reshape(B, DIM, H, W)


# ---------------- pure-JAX f32 reference (sanity check) ----------------------
def reference_forward(x_nchw, p):
    x = jnp.transpose(x_nchw, (0, 2, 3, 1)).reshape(B, N, DIM)

    def ln(v, g, b):
        mu = jnp.mean(v, -1, keepdims=True)
        var = jnp.mean((v - mu) ** 2, -1, keepdims=True)
        return (v - mu) / jnp.sqrt(var + LN_EPS) * g + b

    xn = ln(x, p["ln1_g"], p["ln1_b"])
    q = jnp.einsum("bnd,hde->bhne", xn, p["w_q"]) + p["b_q"][None]
    k = jnp.einsum("bnd,hde->bhne", xn, p["w_k"]) + p["b_k"][None]
    v = jnp.einsum("bnd,hde->bhne", xn, p["w_v"]) + p["b_v"][None]
    s = jnp.einsum("bhne,bhme->bhnm", q, k) * SCALE
    a = jax.nn.softmax(s, axis=-1)
    o = jnp.einsum("bhnm,bhme->bhne", a, v)
    attn = jnp.einsum("bhne,hed->bnd", o, p["w_o"]) + p["b_o"]
    x = x + attn

    xn2 = ln(x, p["ln2_g"], p["ln2_b"])
    hid = _gelu_tanh(xn2 @ p["w1"] + p["c1"])
    x = x + (hid @ p["w2"] + p["c2"])
    return jnp.transpose(x.reshape(B, H, W, DIM), (0, 3, 1, 2))


def init_params(key):
    ks = jax.random.split(key, 16)
    s = 0.02
    f32 = jnp.float32
    return {
        "ln1_g": 1.0 + 0.1 * jax.random.normal(ks[0], (1, DIM), f32),
        "ln1_b": 0.1 * jax.random.normal(ks[1], (1, DIM), f32),
        "ln2_g": 1.0 + 0.1 * jax.random.normal(ks[2], (1, DIM), f32),
        "ln2_b": 0.1 * jax.random.normal(ks[3], (1, DIM), f32),
        "w_q": s * jax.random.normal(ks[4], (NUM_HEADS, DIM, HEAD_DIM), f32),
        "w_k": s * jax.random.normal(ks[5], (NUM_HEADS, DIM, HEAD_DIM), f32),
        "w_v": s * jax.random.normal(ks[6], (NUM_HEADS, DIM, HEAD_DIM), f32),
        "b_q": s * jax.random.normal(ks[7], (NUM_HEADS, 1, HEAD_DIM), f32),
        "b_k": s * jax.random.normal(ks[8], (NUM_HEADS, 1, HEAD_DIM), f32),
        "b_v": s * jax.random.normal(ks[9], (NUM_HEADS, 1, HEAD_DIM), f32),
        "w_o": s * jax.random.normal(ks[10], (NUM_HEADS, HEAD_DIM, DIM), f32),
        "b_o": s * jax.random.normal(ks[11], (1, DIM), f32),
        "w1": s * jax.random.normal(ks[12], (DIM, HIDDEN), f32),
        "c1": s * jax.random.normal(ks[13], (1, HIDDEN), f32),
        "w2": s * jax.random.normal(ks[14], (HIDDEN, DIM), f32),
        "c2": s * jax.random.normal(ks[15], (1, DIM), f32),
    }


if __name__ == "__main__":
    key = jax.random.PRNGKey(0)
    kx, kp = jax.random.split(key)
    x = jax.random.normal(kx, (B, DIM, H, W), jnp.float32)   # NCHW like PyTorch
    params = init_params(kp)

    out = basic_block_forward(x, params)
    out = jax.block_until_ready(out)

    ref = reference_forward(x, params)
    assert out.shape == (B, DIM, H, W)
    # bf16 MXU operands + approx reciprocal + dropped (no-op) K bias vs f32
    # reference -> tolerance 2e-3.
    max_err = float(jnp.max(jnp.abs(out - ref)))
    assert jnp.allclose(out, ref, atol=2e-3, rtol=2e-3), (
        f"mismatch vs reference (max abs err {max_err})")

    print("KERNEL_OK")
</pallas_src>

<mosaic_0001>
module attributes {stable_mosaic.version = 11 : i64} {
  func.func @fused_block_kernel(%arg0: memref<2x32x64xf32, #tpu.memory_space<vmem>>, %arg1: memref<9x128xf32, #tpu.memory_space<vmem>>, %arg2: memref<32x96xbf16, #tpu.memory_space<vmem>>, %arg3: memref<32x32xbf16, #tpu.memory_space<vmem>>, %arg4: memref<32x128xbf16, #tpu.memory_space<vmem>>, %arg5: memref<128x32xbf16, #tpu.memory_space<vmem>>, %arg6: memref<2x32x64xf32, #tpu.memory_space<vmem>>) attributes {dimension_semantics = [], scalar_prefetch = 0 : i64, scratch_operands = 0 : i64, tpu.core_type = #tpu.core_type<tc>} {
    %c0 = arith.constant 0 : index
    %c0_0 = arith.constant 0 : index
    %c0_1 = arith.constant 0 : index
    %0 = vector.load %arg0[%c0, %c0_0, %c0_1] : memref<2x32x64xf32, #tpu.memory_space<vmem>>, vector<1x32x64xf32>
    %1 = vector.shape_cast %0 : vector<1x32x64xf32> to vector<32x64xf32>
    %2 = tpu.transpose %1, [1, 0] : vector<32x64xf32> -> vector<64x32xf32>
    %c1 = arith.constant 1 : index
    %c0_2 = arith.constant 0 : index
    %c0_3 = arith.constant 0 : index
    %3 = vector.load %arg0[%c1, %c0_2, %c0_3] : memref<2x32x64xf32, #tpu.memory_space<vmem>>, vector<1x32x64xf32>
    %4 = vector.shape_cast %3 : vector<1x32x64xf32> to vector<32x64xf32>
    %5 = tpu.transpose %4, [1, 0] : vector<32x64xf32> -> vector<64x32xf32>
    %6 = tpu.concatenate %2, %5 in 0 : vector<64x32xf32>, vector<64x32xf32> -> vector<128x32xf32>
    %c0_4 = arith.constant 0 : index
    %c0_5 = arith.constant 0 : index
    %7 = vector.load %arg1[%c0_4, %c0_5] : memref<9x128xf32, #tpu.memory_space<vmem>>, vector<9x128xf32>
    %8 = vector.extract_strided_slice %7 {offsets = [0, 0], sizes = [1, 32], strides = [1, 1]} : vector<9x128xf32> to vector<1x32xf32>
    %9 = vector.extract_strided_slice %7 {offsets = [1, 0], sizes = [1, 32], strides = [1, 1]} : vector<9x128xf32> to vector<1x32xf32>
    %10 = vector.extract_strided_slice %7 {offsets = [2, 0], sizes = [1, 32], strides = [1, 1]} : vector<9x128xf32> to vector<1x32xf32>
    %11 = vector.extract_strided_slice %7 {offsets = [3, 0], sizes = [1, 32], strides = [1, 1]} : vector<9x128xf32> to vector<1x32xf32>
    %12 = vector.extract_strided_slice %7 {offsets = [4, 0], sizes = [1, 32], strides = [1, 1]} : vector<9x128xf32> to vector<1x32xf32>
    %13 = vector.extract_strided_slice %7 {offsets = [5, 0], sizes = [1, 32], strides = [1, 1]} : vector<9x128xf32> to vector<1x32xf32>
    %14 = vector.extract_strided_slice %7 {offsets = [6, 0], sizes = [1, 32], strides = [1, 1]} : vector<9x128xf32> to vector<1x32xf32>
    %15 = vector.extract_strided_slice %7 {offsets = [7, 0], sizes = [1, 32], strides = [1, 1]} : vector<9x128xf32> to vector<1x32xf32>
    %16 = vector.extract_strided_slice %7 {offsets = [8, 0], sizes = [1, 128], strides = [1, 1]} : vector<9x128xf32> to vector<1x128xf32>
    %cst = arith.constant dense<0.000000e+00> : vector<128xf32>
    %17 = vector.multi_reduction <add>, %6, %cst [1] : vector<128x32xf32> to vector<128xf32>
    %18 = vector.shape_cast %17 : vector<128xf32> to vector<128x1xf32>
    %cst_6 = arith.constant 3.200000e+01 : f32
    %19 = vector.broadcast %cst_6 : f32 to vector<128x1xf32>
    %20 = arith.divf %18, %19 : vector<128x1xf32>
    %21 = vector.broadcast %20 : vector<128x1xf32> to vector<128x32xf32>
    %22 = arith.subf %6, %21 : vector<128x32xf32>
    %23 = arith.mulf %22, %22 : vector<128x32xf32>
    %cst_7 = arith.constant dense<0.000000e+00> : vector<128xf32>
    %24 = vector.multi_reduction <add>, %23, %cst_7 [1] : vector<128x32xf32> to vector<128xf32>
    %25 = vector.shape_cast %24 : vector<128xf32> to vector<128x1xf32>
    %cst_8 = arith.constant 3.200000e+01 : f32
    %26 = vector.broadcast %cst_8 : f32 to vector<128x1xf32>
    %27 = arith.divf %25, %26 : vector<128x1xf32>
    %cst_9 = arith.constant 9.99999974E-6 : f32
    %28 = vector.broadcast %cst_9 : f32 to vector<128x1xf32>
    %29 = arith.addf %27, %28 : vector<128x1xf32>
    %30 = math.rsqrt %29 : vector<128x1xf32>
    %31 = vector.broadcast %30 : vector<128x1xf32> to vector<128x32xf32>
    %32 = arith.mulf %22, %31 : vector<128x32xf32>
    %33 = vector.broadcast %8 : vector<1x32xf32> to vector<128x32xf32>
    %34 = arith.mulf %32, %33 : vector<128x32xf32>
    %35 = vector.broadcast %9 : vector<1x32xf32> to vector<128x32xf32>
    %36 = arith.addf %34, %35 : vector<128x32xf32>
    %37 = arith.truncf %36 : vector<128x32xf32> to vector<128x32xbf16>
    %c0_10 = arith.constant 0 : index
    %c0_11 = arith.constant 0 : index
    %38 = vector.load %arg2[%c0_10, %c0_11] : memref<32x96xbf16, #tpu.memory_space<vmem>>, vector<32x96xbf16>
    %cst_12 = arith.constant dense<0.000000e+00> : vector<128x96xf32>
    %39 = tpu.matmul %37, %38, %cst_12 {dimension_numbers = #tpu.dot_dimension_numbers<[1], [0], [0], [1], [0, 0, 1, 1], [], []>} : vector<128x32xbf16>, vector<32x96xbf16>, vector<128x96xf32> -> vector<128x96xf32>
    %40 = vector.extract_strided_slice %39 {offsets = [0, 0], sizes = [128, 32], strides = [1, 1]} : vector<128x96xf32> to vector<128x32xf32>
    %41 = vector.broadcast %12 : vector<1x32xf32> to vector<128x32xf32>
    %42 = arith.addf %40, %41 : vector<128x32xf32>
    %43 = vector.shape_cast %42 : vector<128x32xf32> to vector<2x64x32xf32>
    %44 = arith.truncf %43 : vector<2x64x32xf32> to vector<2x64x32xbf16>
    %45 = vector.extract_strided_slice %39 {offsets = [0, 32], sizes = [128, 32], strides = [1, 1]} : vector<128x96xf32> to vector<128x32xf32>
    %46 = vector.shape_cast %45 : vector<128x32xf32> to vector<2x64x32xf32>
    %47 = arith.truncf %46 : vector<2x64x32xf32> to vector<2x64x32xbf16>
    %48 = vector.extract_strided_slice %39 {offsets = [0, 64], sizes = [128, 32], strides = [1, 1]} : vector<128x96xf32> to vector<128x32xf32>
    %49 = vector.broadcast %13 : vector<1x32xf32> to vector<128x32xf32>
    %50 = arith.addf %48, %49 : vector<128x32xf32>
    %51 = vector.shape_cast %50 : vector<128x32xf32> to vector<2x64x32xf32>
    %52 = arith.truncf %51 : vector<2x64x32xf32> to vector<2x64x32xbf16>
    %53 = vector.extract_strided_slice %44 {offsets = [0, 0, 0], sizes = [2, 64, 8], strides = [1, 1, 1]} : vector<2x64x32xbf16> to vector<2x64x8xbf16>
    %54 = vector.extract_strided_slice %47 {offsets = [0, 0, 0], sizes = [2, 64, 8], strides = [1, 1, 1]} : vector<2x64x32xbf16> to vector<2x64x8xbf16>
    %cst_13 = arith.constant dense<0.000000e+00> : vector<2x64x64xf32>
    %55 = tpu.matmul %53, %54, %cst_13 {dimension_numbers = #tpu.dot_dimension_numbers<[2], [2], [1], [1], [0, 0, 0, 1, 1, 1], [0], [0]>} : vector<2x64x8xbf16>, vector<2x64x8xbf16>, vector<2x64x64xf32> -> vector<2x64x64xf32>
    %cst_14 = arith.constant dense<0xFF800000> : vector<2x64xf32>
    %56 = vector.multi_reduction <maximumf>, %55, %cst_14 [2] : vector<2x64x64xf32> to vector<2x64xf32>
    %57 = vector.shape_cast %56 : vector<2x64xf32> to vector<2x64x1xf32>
    %58 = vector.broadcast %57 : vector<2x64x1xf32> to vector<2x64x64xf32>
    %59 = arith.subf %55, %58 : vector<2x64x64xf32>
    %60 = math.exp %59 : vector<2x64x64xf32>
    %cst_15 = arith.constant dense<0.000000e+00> : vector<2x64xf32>
    %61 = vector.multi_reduction <add>, %60, %cst_15 [2] : vector<2x64x64xf32> to vector<2x64xf32>
    %62 = vector.shape_cast %61 : vector<2x64xf32> to vector<2x64x1xf32>
    %63 = tpu.reciprocal %62 {approx = true} : vector<2x64x1xf32> -> vector<2x64x1xf32>
    %64 = vector.broadcast %63 : vector<2x64x1xf32> to vector<2x64x64xf32>
    %65 = arith.mulf %60, %64 : vector<2x64x64xf32>
    %66 = arith.truncf %65 : vector<2x64x64xf32> to vector<2x64x64xbf16>
    %67 = vector.extract_strided_slice %52 {offsets = [0, 0, 0], sizes = [2, 64, 8], strides = [1, 1, 1]} : vector<2x64x32xbf16> to vector<2x64x8xbf16>
    %cst_16 = arith.constant dense<0.000000e+00> : vector<2x64x8xf32>
    %68 = tpu.matmul %66, %67, %cst_16 {dimension_numbers = #tpu.dot_dimension_numbers<[2], [1], [1], [2], [0, 0, 0, 1, 1, 2], [0], [0]>} : vector<2x64x64xbf16>, vector<2x64x8xbf16>, vector<2x64x8xf32> -> vector<2x64x8xf32>
    %69 = vector.extract_strided_slice %44 {offsets = [0, 0, 8], sizes = [2, 64, 8], strides = [1, 1, 1]} : vector<2x64x32xbf16> to vector<2x64x8xbf16>
    %70 = vector.extract_strided_slice %47 {offsets = [0, 0, 8], sizes = [2, 64, 8], strides = [1, 1, 1]} : vector<2x64x32xbf16> to vector<2x64x8xbf16>
    %cst_17 = arith.constant dense<0.000000e+00> : vector<2x64x64xf32>
    %71 = tpu.matmul %69, %70, %cst_17 {dimension_numbers = #tpu.dot_dimension_numbers<[2], [2], [1], [1], [0, 0, 0, 1, 1, 1], [0], [0]>} : vector<2x64x8xbf16>, vector<2x64x8xbf16>, vector<2x64x64xf32> -> vector<2x64x64xf32>
    %cst_18 = arith.constant dense<0xFF800000> : vector<2x64xf32>
    %72 = vector.multi_reduction <maximumf>, %71, %cst_18 [2] : vector<2x64x64xf32> to vector<2x64xf32>
    %73 = vector.shape_cast %72 : vector<2x64xf32> to vector<2x64x1xf32>
    %74 = vector.broadcast %73 : vector<2x64x1xf32> to vector<2x64x64xf32>
    %75 = arith.subf %71, %74 : vector<2x64x64xf32>
    %76 = math.exp %75 : vector<2x64x64xf32>
    %cst_19 = arith.constant dense<0.000000e+00> : vector<2x64xf32>
    %77 = vector.multi_reduction <add>, %76, %cst_19 [2] : vector<2x64x64xf32> to vector<2x64xf32>
    %78 = vector.shape_cast %77 : vector<2x64xf32> to vector<2x64x1xf32>
    %79 = tpu.reciprocal %78 {approx = true} : vector<2x64x1xf32> -> vector<2x64x1xf32>
    %80 = vector.broadcast %79 : vector<2x64x1xf32> to vector<2x64x64xf32>
    %81 = arith.mulf %76, %80 : vector<2x64x64xf32>
    %82 = arith.truncf %81 : vector<2x64x64xf32> to vector<2x64x64xbf16>
    %83 = vector.extract_strided_slice %52 {offsets = [0, 0, 8], sizes = [2, 64, 8], strides = [1, 1, 1]} : vector<2x64x32xbf16> to vector<2x64x8xbf16>
    %cst_20 = arith.constant dense<0.000000e+00> : vector<2x64x8xf32>
    %84 = tpu.matmul %82, %83, %cst_20 {dimension_numbers = #tpu.dot_dimension_numbers<[2], [1], [1], [2], [0, 0, 0, 1, 1, 2], [0], [0]>} : vector<2x64x64xbf16>, vector<2x64x8xbf16>, vector<2x64x8xf32> -> vector<2x64x8xf32>
    %85 = vector.extract_strided_slice %44 {offsets = [0, 0, 16], sizes = [2, 64, 8], strides = [1, 1, 1]} : vector<2x64x32xbf16> to vector<2x64x8xbf16>
    %86 = vector.extract_strided_slice %47 {offsets = [0, 0, 16], sizes = [2, 64, 8], strides = [1, 1, 1]} : vector<2x64x32xbf16> to vector<2x64x8xbf16>
    %cst_21 = arith.constant dense<0.000000e+00> : vector<2x64x64xf32>
    %87 = tpu.matmul %85, %86, %cst_21 {dimension_numbers = #tpu.dot_dimension_numbers<[2], [2], [1], [1], [0, 0, 0, 1, 1, 1], [0], [0]>} : vector<2x64x8xbf16>, vector<2x64x8xbf16>, vector<2x64x64xf32> -> vector<2x64x64xf32>
    %cst_22 = arith.constant dense<0xFF800000> : vector<2x64xf32>
    %88 = vector.multi_reduction <maximumf>, %87, %cst_22 [2] : vector<2x64x64xf32> to vector<2x64xf32>
    %89 = vector.shape_cast %88 : vector<2x64xf32> to vector<2x64x1xf32>
    %90 = vector.broadcast %89 : vector<2x64x1xf32> to vector<2x64x64xf32>
    %91 = arith.subf %87, %90 : vector<2x64x64xf32>
    %92 = math.exp %91 : vector<2x64x64xf32>
    %cst_23 = arith.constant dense<0.000000e+00> : vector<2x64xf32>
    %93 = vector.multi_reduction <add>, %92, %cst_23 [2] : vector<2x64x64xf32> to vector<2x64xf32>
    %94 = vector.shape_cast %93 : vector<2x64xf32> to vector<2x64x1xf32>
    %95 = tpu.reciprocal %94 {approx = true} : vector<2x64x1xf32> -> vector<2x64x1xf32>
    %96 = vector.broadcast %95 : vector<2x64x1xf32> to vector<2x64x64xf32>
    %97 = arith.mulf %92, %96 : vector<2x64x64xf32>
    %98 = arith.truncf %97 : vector<2x64x64xf32> to vector<2x64x64xbf16>
    %99 = vector.extract_strided_slice %52 {offsets = [0, 0, 16], sizes = [2, 64, 8], strides = [1, 1, 1]} : vector<2x64x32xbf16> to vector<2x64x8xbf16>
    %cst_24 = arith.constant dense<0.000000e+00> : vector<2x64x8xf32>
    %100 = tpu.matmul %98, %99, %cst_24 {dimension_numbers = #tpu.dot_dimension_numbers<[2], [1], [1], [2], [0, 0, 0, 1, 1, 2], [0], [0]>} : vector<2x64x64xbf16>, vector<2x64x8xbf16>, vector<2x64x8xf32> -> vector<2x64x8xf32>
    %101 = vector.extract_strided_slice %44 {offsets = [0, 0, 24], sizes = [2, 64, 8], strides = [1, 1, 1]} : vector<2x64x32xbf16> to vector<2x64x8xbf16>
    %102 = vector.extract_strided_slice %47 {offsets = [0, 0, 24], sizes = [2, 64, 8], strides = [1, 1, 1]} : vector<2x64x32xbf16> to vector<2x64x8xbf16>
    %cst_25 = arith.constant dense<0.000000e+00> : vector<2x64x64xf32>
    %103 = tpu.matmul %101, %102, %cst_25 {dimension_numbers = #tpu.dot_dimension_numbers<[2], [2], [1], [1], [0, 0, 0, 1, 1, 1], [0], [0]>} : vector<2x64x8xbf16>, vector<2x64x8xbf16>, vector<2x64x64xf32> -> vector<2x64x64xf32>
    %cst_26 = arith.constant dense<0xFF800000> : vector<2x64xf32>
    %104 = vector.multi_reduction <maximumf>, %103, %cst_26 [2] : vector<2x64x64xf32> to vector<2x64xf32>
    %105 = vector.shape_cast %104 : vector<2x64xf32> to vector<2x64x1xf32>
    %106 = vector.broadcast %105 : vector<2x64x1xf32> to vector<2x64x64xf32>
    %107 = arith.subf %103, %106 : vector<2x64x64xf32>
    %108 = math.exp %107 : vector<2x64x64xf32>
    %cst_27 = arith.constant dense<0.000000e+00> : vector<2x64xf32>
    %109 = vector.multi_reduction <add>, %108, %cst_27 [2] : vector<2x64x64xf32> to vector<2x64xf32>
    %110 = vector.shape_cast %109 : vector<2x64xf32> to vector<2x64x1xf32>
    %111 = tpu.reciprocal %110 {approx = true} : vector<2x64x1xf32> -> vector<2x64x1xf32>
    %112 = vector.broadcast %111 : vector<2x64x1xf32> to vector<2x64x64xf32>
    %113 = arith.mulf %108, %112 : vector<2x64x64xf32>
    %114 = arith.truncf %113 : vector<2x64x64xf32> to vector<2x64x64xbf16>
    %115 = vector.extract_strided_slice %52 {offsets = [0, 0, 24], sizes = [2, 64, 8], strides = [1, 1, 1]} : vector<2x64x32xbf16> to vector<2x64x8xbf16>
    %cst_28 = arith.constant dense<0.000000e+00> : vector<2x64x8xf32>
    %116 = tpu.matmul %114, %115, %cst_28 {dimension_numbers = #tpu.dot_dimension_numbers<[2], [1], [1], [2], [0, 0, 0, 1, 1, 2], [0], [0]>} : vector<2x64x64xbf16>, vector<2x64x8xbf16>, vector<2x64x8xf32> -> vector<2x64x8xf32>
    %117 = tpu.concatenate %68, %84, %100, %116 in 2 : vector<2x64x8xf32>, vector<2x64x8xf32>, vector<2x64x8xf32>, vector<2x64x8xf32> -> vector<2x64x32xf32>
    %118 = vector.shape_cast %117 : vector<2x64x32xf32> to vector<128x32xf32>
    %119 = arith.truncf %118 : vector<128x32xf32> to vector<128x32xbf16>
    %c0_29 = arith.constant 0 : index
    %c0_30 = arith.constant 0 : index
    %120 = vector.load %arg3[%c0_29, %c0_30] : memref<32x32xbf16, #tpu.memory_space<vmem>>, vector<32x32xbf16>
    %cst_31 = arith.constant dense<0.000000e+00> : vector<128x32xf32>
    %121 = tpu.matmul %119, %120, %cst_31 {dimension_numbers = #tpu.dot_dimension_numbers<[1], [0], [0], [1], [0, 0, 1, 1], [], []>} : vector<128x32xbf16>, vector<32x32xbf16>, vector<128x32xf32> -> vector<128x32xf32>
    %122 = vector.broadcast %14 : vector<1x32xf32> to vector<128x32xf32>
    %123 = arith.addf %121, %122 : vector<128x32xf32>
    %124 = arith.addf %6, %123 : vector<128x32xf32>
    %cst_32 = arith.constant dense<0.000000e+00> : vector<128xf32>
    %125 = vector.multi_reduction <add>, %124, %cst_32 [1] : vector<128x32xf32> to vector<128xf32>
    %126 = vector.shape_cast %125 : vector<128xf32> to vector<128x1xf32>
    %cst_33 = arith.constant 3.200000e+01 : f32
    %127 = vector.broadcast %cst_33 : f32 to vector<128x1xf32>
    %128 = arith.divf %126, %127 : vector<128x1xf32>
    %129 = vector.broadcast %128 : vector<128x1xf32> to vector<128x32xf32>
    %130 = arith.subf %124, %129 : vector<128x32xf32>
    %131 = arith.mulf %130, %130 : vector<128x32xf32>
    %cst_34 = arith.constant dense<0.000000e+00> : vector<128xf32>
    %132 = vector.multi_reduction <add>, %131, %cst_34 [1] : vector<128x32xf32> to vector<128xf32>
    %133 = vector.shape_cast %132 : vector<128xf32> to vector<128x1xf32>
    %cst_35 = arith.constant 3.200000e+01 : f32
    %134 = vector.broadcast %cst_35 : f32 to vector<128x1xf32>
    %135 = arith.divf %133, %134 : vector<128x1xf32>
    %cst_36 = arith.constant 9.99999974E-6 : f32
    %136 = vector.broadcast %cst_36 : f32 to vector<128x1xf32>
    %137 = arith.addf %135, %136 : vector<128x1xf32>
    %138 = math.rsqrt %137 : vector<128x1xf32>
    %139 = vector.broadcast %138 : vector<128x1xf32> to vector<128x32xf32>
    %140 = arith.mulf %130, %139 : vector<128x32xf32>
    %141 = vector.broadcast %10 : vector<1x32xf32> to vector<128x32xf32>
    %142 = arith.mulf %140, %141 : vector<128x32xf32>
    %143 = vector.broadcast %11 : vector<1x32xf32> to vector<128x32xf32>
    %144 = arith.addf %142, %143 : vector<128x32xf32>
    %145 = arith.truncf %144 : vector<128x32xf32> to vector<128x32xbf16>
    %c0_37 = arith.constant 0 : index
    %c0_38 = arith.constant 0 : index
    %146 = vector.load %arg4[%c0_37, %c0_38] : memref<32x128xbf16, #tpu.memory_space<vmem>>, vector<32x128xbf16>
    %cst_39 = arith.constant dense<0.000000e+00> : vector<128x128xf32>
    %147 = tpu.matmul %145, %146, %cst_39 {dimension_numbers = #tpu.dot_dimension_numbers<[1], [0], [0], [1], [0, 0, 1, 1], [], []>} : vector<128x32xbf16>, vector<32x128xbf16>, vector<128x128xf32> -> vector<128x128xf32>
    %148 = vector.broadcast %16 : vector<1x128xf32> to vector<128x128xf32>
    %149 = arith.addf %147, %148 : vector<128x128xf32>
    %cst_40 = arith.constant 5.000000e-01 : f32
    %150 = vector.broadcast %cst_40 : f32 to vector<128x128xf32>
    %151 = arith.mulf %150, %149 : vector<128x128xf32>
    %cst_41 = arith.constant 4.471500e-02 : f32
    %152 = vector.broadcast %cst_41 : f32 to vector<128x128xf32>
    %153 = arith.mulf %152, %149 : vector<128x128xf32>
    %154 = arith.mulf %153, %149 : vector<128x128xf32>
    %155 = arith.mulf %154, %149 : vector<128x128xf32>
    %156 = arith.addf %149, %155 : vector<128x128xf32>
    %cst_42 = arith.constant 0.797884583 : f32
    %157 = vector.broadcast %cst_42 : f32 to vector<128x128xf32>
    %158 = arith.mulf %157, %156 : vector<128x128xf32>
    %159 = math.tanh %158 : vector<128x128xf32>
    %cst_43 = arith.constant 1.000000e+00 : f32
    %160 = vector.broadcast %cst_43 : f32 to vector<128x128xf32>
    %161 = arith.addf %160, %159 : vector<128x128xf32>
    %162 = arith.mulf %151, %161 : vector<128x128xf32>
    %163 = arith.truncf %162 : vector<128x128xf32> to vector<128x128xbf16>
    %c0_44 = arith.constant 0 : index
    %c0_45 = arith.constant 0 : index
    %164 = vector.load %arg5[%c0_44, %c0_45] : memref<128x32xbf16, #tpu.memory_space<vmem>>, vector<128x32xbf16>
    %cst_46 = arith.constant dense<0.000000e+00> : vector<128x32xf32>
    %165 = tpu.matmul %163, %164, %cst_46 {dimension_numbers = #tpu.dot_dimension_numbers<[1], [0], [0], [1], [0, 0, 1, 1], [], []>} : vector<128x128xbf16>, vector<128x32xbf16>, vector<128x32xf32> -> vector<128x32xf32>
    %166 = vector.broadcast %15 : vector<1x32xf32> to vector<128x32xf32>
    %167 = arith.addf %165, %166 : vector<128x32xf32>
    %168 = arith.addf %124, %167 : vector<128x32xf32>
    %169 = vector.extract_strided_slice %168 {offsets = [0, 0], sizes = [64, 32], strides = [1, 1]} : vector<128x32xf32> to vector<64x32xf32>
    %170 = tpu.transpose %169, [1, 0] : vector<64x32xf32> -> vector<32x64xf32>
    %c0_47 = arith.constant 0 : index
    %c0_48 = arith.constant 0 : index
    %c0_49 = arith.constant 0 : index
    %171 = vector.load %arg6[%c0_47, %c0_48, %c0_49] : memref<2x32x64xf32, #tpu.memory_space<vmem>>, vector<1x32x64xf32>
    %172 = vector.shape_cast %171 : vector<1x32x64xf32> to vector<32x64xf32>
    %173 = vector.shape_cast %170 : vector<32x64xf32> to vector<1x32x64xf32>
    tpu.vector_store %arg6[%c0_47, %c0_48, %c0_49], %173 {strides = array<i32>} : memref<2x32x64xf32, #tpu.memory_space<vmem>>, vector<1x32x64xf32>,
    %174 = vector.extract_strided_slice %168 {offsets = [64, 0], sizes = [64, 32], strides = [1, 1]} : vector<128x32xf32> to vector<64x32xf32>
    %175 = tpu.transpose %174, [1, 0] : vector<64x32xf32> -> vector<32x64xf32>
    %c1_50 = arith.constant 1 : index
    %c0_51 = arith.constant 0 : index
    %c0_52 = arith.constant 0 : index
    %176 = vector.load %arg6[%c1_50, %c0_51, %c0_52] : memref<2x32x64xf32, #tpu.memory_space<vmem>>, vector<1x32x64xf32>
    %177 = vector.shape_cast %176 : vector<1x32x64xf32> to vector<32x64xf32>
    %178 = vector.shape_cast %175 : vector<32x64xf32> to vector<1x32x64xf32>
    tpu.vector_store %arg6[%c1_50, %c0_51, %c0_52], %178 {strides = array<i32>} : memref<2x32x64xf32, #tpu.memory_space<vmem>>, vector<1x32x64xf32>,
    return
  }
}

</mosaic_0001>

<llo_original>
// kernel: basic_block_forward.1
$region0: #{basic_block_forward.1}
  #allocation0 [shape = 'u32[]', space=smem, size = 0x4, offset = 0x4, fixed_abs, tag = 'smem constant byte address 0x4 - core index']
  #allocation1 [shape = 'u32[144,128]{1,0:T(1,128)}', space=vmem, size = 0x12000, scoped, tag = 'internal scratch']
  %s0 = inlined_call_operand.vmem [shape: f32[2,32,64], index: 0, kind: input, shape index: {}]
  %s1 = inlined_call_operand.vmem [shape: f32[9,128], index: 1, kind: input, shape index: {}]
  %s2 = inlined_call_operand.vmem [shape: bf16[32,96], index: 2, kind: input, shape index: {}]
  %s3 = inlined_call_operand.vmem [shape: bf16[32,32], index: 3, kind: input, shape index: {}]
  %s4 = inlined_call_operand.vmem [shape: bf16[32,128], index: 4, kind: input, shape index: {}]
  %s5 = inlined_call_operand.vmem [shape: bf16[128,32], index: 5, kind: input, shape index: {}]
  %s6 = inlined_call_operand.vmem [shape: f32[2,32,64], index: 6, kind: output, shape index: {}]
  %s7 = sld [smem:[#allocation0]]
  $region34: #{basic_block_forward.1} parent=0
    _
  %s9 = ssub.s32 1, %s7
  %s10 = scalar_select 0, %s9, %s7
  // Predicated region
  $region2: #{basic_block_forward.1} parent=0 // pred_check
    _
  $region3: #{basic_block_forward.1} parent=0 // pred_check_branch
    %12 = sbr.rel (0) target = $region5
  $region4: #{basic_block_forward.1} parent=0 // pred_region
    _
  $region5: #{basic_block_forward.1} parent=0 // pred_fallthru
    _
  // Predicated region
  $region6: #{basic_block_forward.1} parent=0 // pred_check
    _
  $region7: #{basic_block_forward.1} parent=0 // pred_check_branch
    %14 = sbr.rel (0) target = $region9
  $region8: #{basic_block_forward.1} parent=0 // pred_region
    _
  $region9: #{basic_block_forward.1} parent=0 // pred_fallthru
    _
  // Predicated region
  $region10: #{basic_block_forward.1} parent=0 // pred_check
    _
  $region11: #{basic_block_forward.1} parent=0 // pred_check_branch
    %16 = sbr.rel (0) target = $region13
  $region12: #{basic_block_forward.1} parent=0 // pred_region
    _
  $region13: #{basic_block_forward.1} parent=0 // pred_fallthru
    _
  // Predicated region
  $region14: #{basic_block_forward.1} parent=0 // pred_check
    _
  $region15: #{basic_block_forward.1} parent=0 // pred_check_branch
    %18 = sbr.rel (0) target = $region17
  $region16: #{basic_block_forward.1} parent=0 // pred_region
    _
  $region17: #{basic_block_forward.1} parent=0 // pred_fallthru
    _
  // Predicated region
  $region18: #{basic_block_forward.1} parent=0 // pred_check
    _
  $region19: #{basic_block_forward.1} parent=0 // pred_check_branch
    %20 = sbr.rel (0) target = $region21
  $region20: #{basic_block_forward.1} parent=0 // pred_region
    _
  $region21: #{basic_block_forward.1} parent=0 // pred_fallthru
    _
  // Predicated region
  $region22: #{basic_block_forward.1} parent=0 // pred_check
    _
  $region23: #{basic_block_forward.1} parent=0 // pred_check_branch
    %22 = sbr.rel (0) target = $region25
  $region24: #{basic_block_forward.1} parent=0 // pred_region
    _
  $region25: #{basic_block_forward.1} parent=0 // pred_fallthru
    _
  %v24 = vld [vmem:[%s0] sm:$0xff]
  %v25 = vld [vmem:[%s0 + $0x8] sm:$0xff]
  %v26 = vld [vmem:[%s0 + $0x10] sm:$0xff]
  %v27 = vld [vmem:[%s0 + $0x18] sm:$0xff]
  %28 = vxpose.xlu0.b32.start [1/16] %v24, 128
  %29 = vxpose.xlu0.b32.cont [2/16] %v25, 128
  %30 = vxpose.xlu0.b32.cont [3/16] %v26, 128
  %31 = vxpose.xlu0.b32.cont [4/16] %v27, 128
  %32 = vxpose.xlu0.b32.cont [5/16] 0.0, 128
  %33 = vxpose.xlu0.b32.cont [6/16] 0.0, 128
  %34 = vxpose.xlu0.b32.cont [7/16] 0.0, 128
  %35 = vxpose.xlu0.b32.cont [8/16] 0.0, 128
  %36 = vxpose.xlu0.b32.cont [9/16] 0.0, 128
  %37 = vxpose.xlu0.b32.cont [10/16] 0.0, 128
  %38 = vxpose.xlu0.b32.cont [11/16] 0.0, 128
  %39 = vxpose.xlu0.b32.cont [12/16] 0.0, 128
  %40 = vxpose.xlu0.b32.cont [13/16] 0.0, 128
  %41 = vxpose.xlu0.b32.cont [14/16] 0.0, 128
  %42 = vxpose.xlu0.b32.cont [15/16] 0.0, 128
  %43 = vxpose.xlu0.b32.end [16/16] 0.0, 128
  %v44 = vpop.trf.xlu0
  %v45 = vpop.trf.xlu0
  %v46 = vpop.trf.xlu0
  %v47 = vpop.trf.xlu0
  %v48 = vpop.trf.xlu0
  %v49 = vpop.trf.xlu0
  %v50 = vpop.trf.xlu0
  %v51 = vpop.trf.xlu0
  %v52 = vpop.trf.xlu0
  %v53 = vpop.trf.xlu0
  %v54 = vpop.trf.xlu0
  %v55 = vpop.trf.xlu0
  %v56 = vpop.trf.xlu0
  %v57 = vpop.trf.xlu0
  %v58 = vpop.trf.xlu0
  %v59 = vpop.trf.xlu0
  %s60 = scalar_lea.vmem %s0, 32
  %v61 = vld [vmem:[%s60] sm:$0xff]
  %v62 = vld [vmem:[%s60 + $0x8] sm:$0xff]
  %v63 = vld [vmem:[%s60 + $0x10] sm:$0xff]
  %v64 = vld [vmem:[%s60 + $0x18] sm:$0xff]
  %65 = vxpose.xlu0.b32.start [1/16] %v61, 128
  %66 = vxpose.xlu0.b32.cont [2/16] %v62, 128
  %67 = vxpose.xlu0.b32.cont [3/16] %v63, 128
  %68 = vxpose.xlu0.b32.cont [4/16] %v64, 128
  %69 = vxpose.xlu0.b32.cont [5/16] 0.0, 128
  %70 = vxpose.xlu0.b32.cont [6/16] 0.0, 128
  %71 = vxpose.xlu0.b32.cont [7/16] 0.0, 128
  %72 = vxpose.xlu0.b32.cont [8/16] 0.0, 128
  %73 = vxpose.xlu0.b32.cont [9/16] 0.0, 128
  %74 = vxpose.xlu0.b32.cont [10/16] 0.0, 128
  %75 = vxpose.xlu0.b32.cont [11/16] 0.0, 128
  %76 = vxpose.xlu0.b32.cont [12/16] 0.0, 128
  %77 = vxpose.xlu0.b32.cont [13/16] 0.0, 128
  %78 = vxpose.xlu0.b32.cont [14/16] 0.0, 128
  %79 = vxpose.xlu0.b32.cont [15/16] 0.0, 128
  %80 = vxpose.xlu0.b32.end [16/16] 0.0, 128
  %v81 = vpop.trf.xlu0
  %v82 = vpop.trf.xlu0
  %v83 = vpop.trf.xlu0
  %v84 = vpop.trf.xlu0
  %v85 = vpop.trf.xlu0
  %v86 = vpop.trf.xlu0
  %v87 = vpop.trf.xlu0
  %v88 = vpop.trf.xlu0
  %v89 = vpop.trf.xlu0
  %v90 = vpop.trf.xlu0
  %v91 = vpop.trf.xlu0
  %v92 = vpop.trf.xlu0
  %v93 = vpop.trf.xlu0
  %v94 = vpop.trf.xlu0
  %v95 = vpop.trf.xlu0
  %v96 = vpop.trf.xlu0
  %v97 = vld [vmem:[%s1] sm:$0xff]
  %v98 = vld [vmem:[%s1 + $0x8] sm:$0x1]
  %vm99 = vcmask 261120
  %v100 = vsel %vm99, %v44, 0.0
  %101 = vadd.xlane.f32.xlu0 %v100
  %v102 = vpop.xlane.xlu0 %101
  %v103 = vsel %vm99, %v45, 0.0
  %104 = vadd.xlane.f32.xlu0 %v103
  %v105 = vpop.xlane.xlu0 %104
  %v106 = vsel %vm99, %v46, 0.0
  %107 = vadd.xlane.f32.xlu0 %v106
  %v108 = vpop.xlane.xlu0 %107
  %v109 = vsel %vm99, %v47, 0.0
  %110 = vadd.xlane.f32.xlu0 %v109
  %v111 = vpop.xlane.xlu0 %110
  %v112 = vsel %vm99, %v48, 0.0
  %113 = vadd.xlane.f32.xlu0 %v112
  %v114 = vpop.xlane.xlu0 %113
  %v115 = vsel %vm99, %v49, 0.0
  %116 = vadd.xlane.f32.xlu0 %v115
  %v117 = vpop.xlane.xlu0 %116
  %v118 = vsel %vm99, %v50, 0.0
  %119 = vadd.xlane.f32.xlu0 %v118
  %v120 = vpop.xlane.xlu0 %119
  %v121 = vsel %vm99, %v51, 0.0
  %122 = vadd.xlane.f32.xlu0 %v121
  %v123 = vpop.xlane.xlu0 %122
  %v124 = vsel %vm99, %v81, 0.0
  %125 = vadd.xlane.f32.xlu0 %v124
  %v126 = vpop.xlane.xlu0 %125
  %v127 = vsel %vm99, %v82, 0.0
  %128 = vadd.xlane.f32.xlu0 %v127
  %v129 = vpop.xlane.xlu0 %128
  %v130 = vsel %vm99, %v83, 0.0
  %131 = vadd.xlane.f32.xlu0 %v130
  %v132 = vpop.xlane.xlu0 %131
  %v133 = vsel %vm99, %v84, 0.0
  %134 = vadd.xlane.f32.xlu0 %v133
  %v135 = vpop.xlane.xlu0 %134
  %v136 = vsel %vm99, %v85, 0.0
  %137 = vadd.xlane.f32.xlu0 %v136
  %v138 = vpop.xlane.xlu0 %137
  %v139 = vsel %vm99, %v86, 0.0
  %140 = vadd.xlane.f32.xlu0 %v139
  %v141 = vpop.xlane.xlu0 %140
  %v142 = vsel %vm99, %v87, 0.0
  %143 = vadd.xlane.f32.xlu0 %v142
  %v144 = vpop.xlane.xlu0 %143
  %v145 = vsel %vm99, %v88, 0.0
  %146 = vadd.xlane.f32.xlu0 %v145
  %v147 = vpop.xlane.xlu0 %146
  %v148 = vrcp.pop 32.0
  %v149 = vmul.f32 %v102, %v148
  %v150 = vmul.f32 %v105, %v148
  %v151 = vmul.f32 %v108, %v148
  %v152 = vmul.f32 %v111, %v148
  %v153 = vmul.f32 %v114, %v148
  %v154 = vmul.f32 %v117, %v148
  %v155 = vmul.f32 %v120, %v148
  %v156 = vmul.f32 %v123, %v148
  %v157 = vmul.f32 %v126, %v148
  %v158 = vmul.f32 %v129, %v148
  %v159 = vmul.f32 %v132, %v148
  %v160 = vmul.f32 %v135, %v148
  %v161 = vmul.f32 %v138, %v148
  %v162 = vmul.f32 %v141, %v148
  %v163 = vmul.f32 %v144, %v148
  %v164 = vmul.f32 %v147, %v148
  %v165 = vsub.f32 %v44, %v149
  %v166 = vsub.f32 %v45, %v150
  %v167 = vsub.f32 %v46, %v151
  %v168 = vsub.f32 %v47, %v152
  %v169 = vsub.f32 %v48, %v153
  %v170 = vsub.f32 %v49, %v154
  %v171 = vsub.f32 %v50, %v155
  %v172 = vsub.f32 %v51, %v156
  %v173 = vsub.f32 %v81, %v157
  %v174 = vsub.f32 %v82, %v158
  %v175 = vsub.f32 %v83, %v159
  %v176 = vsub.f32 %v84, %v160
  %v177 = vsub.f32 %v85, %v161
  %v178 = vsub.f32 %v86, %v162
  %v179 = vsub.f32 %v87, %v163
  %v180 = vsub.f32 %v88, %v164
  %v181 = vmul.f32 %v165, %v165
  %v182 = vmul.f32 %v166, %v166
  %v183 = vmul.f32 %v167, %v167
  %v184 = vmul.f32 %v168, %v168
  %v185 = vmul.f32 %v169, %v169
  %v186 = vmul.f32 %v170, %v170
  %v187 = vmul.f32 %v171, %v171
  %v188 = vmul.f32 %v172, %v172
  %v189 = vmul.f32 %v173, %v173
  %v190 = vmul.f32 %v174, %v174
  %v191 = vmul.f32 %v175, %v175
  %v192 = vmul.f32 %v176, %v176
  %v193 = vmul.f32 %v177, %v177
  %v194 = vmul.f32 %v178, %v178
  %v195 = vmul.f32 %v179, %v179
  %v196 = vmul.f32 %v180, %v180
  %v197 = vsel %vm99, %v181, 0.0
  %198 = vadd.xlane.f32.xlu0 %v197
  %v199 = vpop.xlane.xlu0 %198
  %v200 = vsel %vm99, %v182, 0.0
  %201 = vadd.xlane.f32.xlu0 %v200
  %v202 = vpop.xlane.xlu0 %201
  %v203 = vsel %vm99, %v183, 0.0
  %204 = vadd.xlane.f32.xlu0 %v203
  %v205 = vpop.xlane.xlu0 %204
  %v206 = vsel %vm99, %v184, 0.0
  %207 = vadd.xlane.f32.xlu0 %v206
  %v208 = vpop.xlane.xlu0 %207
  %v209 = vsel %vm99, %v185, 0.0
  %210 = vadd.xlane.f32.xlu0 %v209
  %v211 = vpop.xlane.xlu0 %210
  %v212 = vsel %vm99, %v186, 0.0
  %213 = vadd.xlane.f32.xlu0 %v212
  %v214 = vpop.xlane.xlu0 %213
  %v215 = vsel %vm99, %v187, 0.0
  %216 = vadd.xlane.f32.xlu0 %v215
  %v217 = vpop.xlane.xlu0 %216
  %v218 = vsel %vm99, %v188, 0.0
  %219 = vadd.xlane.f32.xlu0 %v218
  %v220 = vpop.xlane.xlu0 %219
  %v221 = vsel %vm99, %v189, 0.0
  %222 = vadd.xlane.f32.xlu0 %v221
  %v223 = vpop.xlane.xlu0 %222
  %v224 = vsel %vm99, %v190, 0.0
  %225 = vadd.xlane.f32.xlu0 %v224
  %v226 = vpop.xlane.xlu0 %225
  %v227 = vsel %vm99, %v191, 0.0
  %228 = vadd.xlane.f32.xlu0 %v227
  %v229 = vpop.xlane.xlu0 %228
  %v230 = vsel %vm99, %v192, 0.0
  %231 = vadd.xlane.f32.xlu0 %v230
  %v232 = vpop.xlane.xlu0 %231
  %v233 = vsel %vm99, %v193, 0.0
  %234 = vadd.xlane.f32.xlu0 %v233
  %v235 = vpop.xlane.xlu0 %234
  %v236 = vsel %vm99, %v194, 0.0
  %237 = vadd.xlane.f32.xlu0 %v236
  %v238 = vpop.xlane.xlu0 %237
  %v239 = vsel %vm99, %v195, 0.0
  %240 = vadd.xlane.f32.xlu0 %v239
  %v241 = vpop.xlane.xlu0 %240
  %v242 = vsel %vm99, %v196, 0.0
  %243 = vadd.xlane.f32.xlu0 %v242
  %v244 = vpop.xlane.xlu0 %243
  %v245 = vmul.f32 %v199, %v148
  %v246 = vmul.f32 %v202, %v148
  %v247 = vmul.f32 %v205, %v148
  %v248 = vmul.f32 %v208, %v148
  %v249 = vmul.f32 %v211, %v148
  %v250 = vmul.f32 %v214, %v148
  %v251 = vmul.f32 %v217, %v148
  %v252 = vmul.f32 %v220, %v148
  %v253 = vmul.f32 %v223, %v148
  %v254 = vmul.f32 %v226, %v148
  %v255 = vmul.f32 %v229, %v148
  %v256 = vmul.f32 %v232, %v148
  %v257 = vmul.f32 %v235, %v148
  %v258 = vmul.f32 %v238, %v148
  %v259 = vmul.f32 %v241, %v148
  %v260 = vmul.f32 %v244, %v148
  %v261 = vadd.f32 %v245, 1e-05
  %v262 = vadd.f32 %v246, 1e-05
  %v263 = vadd.f32 %v247, 1e-05
  %v264 = vadd.f32 %v248, 1e-05
  %v265 = vadd.f32 %v249, 1e-05
  %v266 = vadd.f32 %v250, 1e-05
  %v267 = vadd.f32 %v251, 1e-05
  %v268 = vadd.f32 %v252, 1e-05
  %v269 = vadd.f32 %v253, 1e-05
  %v270 = vadd.f32 %v254, 1e-05
  %v271 = vadd.f32 %v255, 1e-05
  %v272 = vadd.f32 %v256, 1e-05
  %v273 = vadd.f32 %v257, 1e-05
  %v274 = vadd.f32 %v258, 1e-05
  %v275 = vadd.f32 %v259, 1e-05
  %v276 = vadd.f32 %v260, 1e-05
  %v277 = vrsqrt.pop %v261
  %v278 = vrsqrt.pop %v262
  %v279 = vrsqrt.pop %v263
  %v280 = vrsqrt.pop %v264
  %v281 = vrsqrt.pop %v265
  %v282 = vrsqrt.pop %v266
  %v283 = vrsqrt.pop %v267
  %v284 = vrsqrt.pop %v268
  %v285 = vrsqrt.pop %v269
  %v286 = vrsqrt.pop %v270
  %v287 = vrsqrt.pop %v271
  %v288 = vrsqrt.pop %v272
  %v289 = vrsqrt.pop %v273
  %v290 = vrsqrt.pop %v274
  %v291 = vrsqrt.pop %v275
  %v292 = vrsqrt.pop %v276
  %v293 = vmul.f32 %v165, %v277
  %v294 = vmul.f32 %v166, %v278
  %v295 = vmul.f32 %v167, %v279
  %v296 = vmul.f32 %v168, %v280
  %v297 = vmul.f32 %v169, %v281
  %v298 = vmul.f32 %v170, %v282
  %v299 = vmul.f32 %v171, %v283
  %v300 = vmul.f32 %v172, %v284
  %v301 = vmul.f32 %v173, %v285
  %v302 = vmul.f32 %v174, %v286
  %v303 = vmul.f32 %v175, %v287
  %v304 = vmul.f32 %v176, %v288
  %v305 = vmul.f32 %v177, %v289
  %v306 = vmul.f32 %v178, %v290
  %v307 = vmul.f32 %v179, %v291
  %v308 = vmul.f32 %v180, %v292
  %v309 = vlaneseq
  %v310 = vshrl.u32 %v309, 7
  %v311 = vsub.s32 0, %v310
  %v312 = vrot.slane %v97, %v311
  %v313 = vmul.f32 %v293, %v312
  %v314 = vmul.f32 %v294, %v312
  %v315 = vmul.f32 %v295, %v312
  %v316 = vmul.f32 %v296, %v312
  %v317 = vmul.f32 %v297, %v312
  %v318 = vmul.f32 %v298, %v312
  %v319 = vmul.f32 %v299, %v312
  %v320 = vmul.f32 %v300, %v312
  %v321 = vmul.f32 %v301, %v312
  %v322 = vmul.f32 %v302, %v312
  %v323 = vmul.f32 %v303, %v312
  %v324 = vmul.f32 %v304, %v312
  %v325 = vmul.f32 %v305, %v312
  %v326 = vmul.f32 %v306, %v312
  %v327 = vmul.f32 %v307, %v312
  %v328 = vmul.f32 %v308, %v312
  %v329 = vlaneseq
  %v330 = vshrl.u32 %v329, 7
  %v331 = vsub.s32 1, %v330
  %v332 = vrot.slane %v97, %v331
  %v333 = vadd.f32 %v313, %v332
  %v334 = vadd.f32 %v314, %v332
  %v335 = vadd.f32 %v315, %v332
  %v336 = vadd.f32 %v316, %v332
  %v337 = vadd.f32 %v317, %v332
  %v338 = vadd.f32 %v318, %v332
  %v339 = vadd.f32 %v319, %v332
  %v340 = vadd.f32 %v320, %v332
  %v341 = vadd.f32 %v321, %v332
  %v342 = vadd.f32 %v322, %v332
  %v343 = vadd.f32 %v323, %v332
  %v344 = vadd.f32 %v324, %v332
  %v345 = vadd.f32 %v325, %v332
  %v346 = vadd.f32 %v326, %v332
  %v347 = vadd.f32 %v327, %v332
  %v348 = vadd.f32 %v328, %v332
  %v349 = vpack.c.bf16 %v334, %v333
  %v350 = vpack.c.bf16 %v336, %v335
  %v351 = vpack.c.bf16 %v338, %v337
  %v352 = vpack.c.bf16 %v340, %v339
  %v353 = vpack.c.bf16 %v342, %v341
  %v354 = vpack.c.bf16 %v344, %v343
  %v355 = vpack.c.bf16 %v346, %v345
  %v356 = vpack.c.bf16 %v348, %v347
  %v357 = vld [vmem:[%s2] sm:$0xf]
  %v358 = vld [vmem:[%s2 + $0x4] sm:$0xf]
  %v359 = vld [vmem:[%s2 + $0x8] sm:$0xf]
  %v360 = vld [vmem:[%s2 + $0xc] sm:$0xf]
  %v365 = vunpack.c.l.b16 %v357
  %v366 = vunpack.c.l.b16 %v358
  %v367 = vunpack.c.l.b16 %v359
  %v368 = vunpack.c.l.b16 %v360
  %v369 = vpack.c.b16 %v366, %v365
  %v370 = vpack.c.b16 %v368, %v367
  %v374 = vsel %vm99, %v349, 0
  %v377 = vsel %vm99, %v350, 0
  %v380 = vsel %vm99, %v351, 0
  %v383 = vsel %vm99, %v352, 0
  %v386 = vsel %vm99, %v353, 0
  %v389 = vsel %vm99, %v354, 0
  %v392 = vsel %vm99, %v355, 0
  %v395 = vsel %vm99, %v356, 0
  %397 = vmatprep.subr.bf16.mxu0 0
  %398 = vmatpush1.bf16.msra.mxu0 %v369
  %399 = vmatprep.subr.bf16.mxu0 0
  %400 = vmatpush1.bf16.msra.mxu0 %v370
  %401 = vmatprep.subr.bf16.mxu0 0
  %402 = vmatpush1.bf16.msra.mxu0 0
  %403 = vmatprep.subr.bf16.mxu0 0
  %404 = vmatpush1.bf16.msra.mxu0 0
  %405 = vmatprep.subr.bf16.mxu0 0
  %406 = vmatpush1.bf16.msra.mxu0 0
  %407 = vmatprep.subr.bf16.mxu0 0
  %408 = vmatpush1.bf16.msra.mxu0 0
  %409 = vmatprep.subr.bf16.mxu0 0
  %410 = vmatpush1.bf16.msra.mxu0 0
  %411 = vmatprep.subr.bf16.mxu0 0
  %412 = vmatpush1.bf16.msra.mxu0 0
  %413 = vmatprep.subr.bf16.mxu0 0
  %414 = vmatpush1.bf16.msra.mxu0 0
  %415 = vmatprep.subr.bf16.mxu0 0
  %416 = vmatpush1.bf16.msra.mxu0 0
  %417 = vmatprep.subr.bf16.mxu0 0
  %418 = vmatpush1.bf16.msra.mxu0 0
  %419 = vmatprep.subr.bf16.mxu0 0
  %420 = vmatpush1.bf16.msra.mxu0 0
  %421 = vmatprep.subr.bf16.mxu0 0
  %422 = vmatpush1.bf16.msra.mxu0 0
  %423 = vmatprep.subr.bf16.mxu0 0
  %424 = vmatpush1.bf16.msra.mxu0 0
  %425 = vmatprep.subr.bf16.mxu0 0
  %426 = vmatpush1.bf16.msra.mxu0 0
  %427 = vmatprep.subr.bf16.mxu0 0
  %428 = vmatpush1.bf16.msra.mxu0 0
  %429 = vmatprep.mubr.bf16.mxu0 0
  %430 = vmatmul.mubr.bf16.gmra.mrb[0].mxu0 %v374
  %v431 = vpop.f32.mrb[0].mxu0
  %v432 = vadd.f32 0.0, %v431
  %v433 = vpop.f32.mrb[0].mxu0
  %v434 = vpop.f32.mrb[0].mxu0
  %v435 = vadd.f32 0.0, %v434
  %v436 = vpop.f32.mrb[0].mxu0
  %437 = vmatprep.mubr.bf16.mxu0 0
  %438 = vmatmul.mubr.bf16.gmra.mrb[0].mxu0 %v377
  %v439 = vpop.f32.mrb[0].mxu0
  %v440 = vadd.f32 0.0, %v439
  %v441 = vpop.f32.mrb[0].mxu0
  %v442 = vpop.f32.mrb[0].mxu0
  %v443 = vadd.f32 0.0, %v442
  %v444 = vpop.f32.mrb[0].mxu0
  %445 = vmatprep.mubr.bf16.mxu0 0
  %446 = vmatmul.mubr.bf16.gmra.mrb[0].mxu0 %v380
  %v447 = vpop.f32.mrb[0].mxu0
  %v448 = vadd.f32 0.0, %v447
  %v449 = vpop.f32.mrb[0].mxu0
  %v450 = vpop.f32.mrb[0].mxu0
  %v451 = vadd.f32 0.0, %v450
  %v452 = vpop.f32.mrb[0].mxu0
  %453 = vmatprep.mubr.bf16.mxu0 0
  %454 = vmatmul.mubr.bf16.gmra.mrb[0].mxu0 %v383
  %v455 = vpop.f32.mrb[0].mxu0
  %v456 = vadd.f32 0.0, %v455
  %v457 = vpop.f32.mrb[0].mxu0
  %v458 = vpop.f32.mrb[0].mxu0
  %v459 = vadd.f32 0.0, %v458
  %v460 = vpop.f32.mrb[0].mxu0
  %461 = vmatprep.mubr.bf16.mxu0 0
  %462 = vmatmul.mubr.bf16.gmra.mrb[0].mxu0 %v386
  %v463 = vpop.f32.mrb[0].mxu0
  %v464 = vadd.f32 0.0, %v463
  %v465 = vpop.f32.mrb[0].mxu0
  %v466 = vpop.f32.mrb[0].mxu0
  %v467 = vadd.f32 0.0, %v466
  %v468 = vpop.f32.mrb[0].mxu0
  %469 = vmatprep.mubr.bf16.mxu0 0
  %470 = vmatmul.mubr.bf16.gmra.mrb[0].mxu0 %v389
  %v471 = vpop.f32.mrb[0].mxu0
  %v472 = vadd.f32 0.0, %v471
  %v473 = vpop.f32.mrb[0].mxu0
  %v474 = vpop.f32.mrb[0].mxu0
  %v475 = vadd.f32 0.0, %v474
  %v476 = vpop.f32.mrb[0].mxu0
  %477 = vmatprep.mubr.bf16.mxu0 0
  %478 = vmatmul.mubr.bf16.gmra.mrb[0].mxu0 %v392
  %v479 = vpop.f32.mrb[0].mxu0
  %v480 = vadd.f32 0.0, %v479
  %v481 = vpop.f32.mrb[0].mxu0
  %v482 = vpop.f32.mrb[0].mxu0
  %v483 = vadd.f32 0.0, %v482
  %v484 = vpop.f32.mrb[0].mxu0
  %485 = vmatprep.mubr.bf16.mxu0 0
  %486 = vmatmul.mubr.bf16.gmra.mrb[0].mxu0 %v395
  %v487 = vpop.f32.mrb[0].mxu0
  %v488 = vadd.f32 0.0, %v487
  %v489 = vpop.f32.mrb[0].mxu0
  %v490 = vpop.f32.mrb[0].mxu0
  %v491 = vadd.f32 0.0, %v490
  %v492 = vpop.f32.mrb[0].mxu0
  %493 = vdwg.mxu0
  %v494 = vlaneseq
  %v495 = vshrl.u32 %v494, 7
  %v496 = vsub.s32 4, %v495
  %v497 = vrot.slane %v97, %v496
  %v498 = vadd.f32 %v432, %v497
  %v499 = vadd.f32 %v435, %v497
  %v500 = vadd.f32 %v440, %v497
  %v501 = vadd.f32 %v443, %v497
  %v502 = vadd.f32 %v448, %v497
  %v503 = vadd.f32 %v451, %v497
  %v504 = vadd.f32 %v456, %v497
  %v505 = vadd.f32 %v459, %v497
  %v506 = vadd.f32 %v464, %v497
  %v507 = vadd.f32 %v467, %v497
  %v508 = vadd.f32 %v472, %v497
  %v509 = vadd.f32 %v475, %v497
  %v510 = vadd.f32 %v480, %v497
  %v511 = vadd.f32 %v483, %v497
  %v512 = vadd.f32 %v488, %v497
  %v513 = vadd.f32 %v491, %v497
  %v514 = vpack.c.bf16 %v499, %v498
  %v515 = vpack.c.bf16 %v501, %v500
  %v516 = vpack.c.bf16 %v503, %v502
  %v517 = vpack.c.bf16 %v505, %v504
  %v518 = vpack.c.bf16 %v507, %v506
  %v519 = vpack.c.bf16 %v509, %v508
  %v520 = vpack.c.bf16 %v511, %v510
  %v521 = vpack.c.bf16 %v513, %v512
  %v522 = vpack.c.bf16 %v435, %v432
  %v523 = vpack.c.bf16 %v443, %v440
  %v524 = vpack.c.bf16 %v451, %v448
  %v525 = vpack.c.bf16 %v459, %v456
  %v526 = vpack.c.bf16 %v467, %v464
  %v527 = vpack.c.bf16 %v475, %v472
  %v528 = vpack.c.bf16 %v483, %v480
  %v529 = vpack.c.bf16 %v491, %v488
  %v530 = vlaneseq
  %v531 = vshrl.u32 %v530, 7
  %v532 = vsub.s32 5, %v531
  %v533 = vrot.slane %v97, %v532
  %535 = vrot.lane.b32.xlu0 %v533, 64
  %v536 = vpop.permute.xlu0 %535
  %v538 = vadd.f32 %v432, %v536
  %v539 = vadd.f32 %v435, %v536
  %v540 = vadd.f32 %v440, %v536
  %v541 = vadd.f32 %v443, %v536
  %v542 = vadd.f32 %v448, %v536
  %v543 = vadd.f32 %v451, %v536
  %v544 = vadd.f32 %v456, %v536
  %v545 = vadd.f32 %v459, %v536
  %v546 = vadd.f32 %v464, %v536
  %v547 = vadd.f32 %v467, %v536
  %v548 = vadd.f32 %v472, %v536
  %v549 = vadd.f32 %v475, %v536
  %v550 = vadd.f32 %v480, %v536
  %v551 = vadd.f32 %v483, %v536
  %v552 = vadd.f32 %v488, %v536
  %v553 = vadd.f32 %v491, %v536
  %v554 = vpack.c.bf16 %v539, %v538
  %v555 = vpack.c.bf16 %v541, %v540
  %v556 = vpack.c.bf16 %v543, %v542
  %v557 = vpack.c.bf16 %v545, %v544
  %v558 = vpack.c.bf16 %v547, %v546
  %v559 = vpack.c.bf16 %v549, %v548
  %v560 = vpack.c.bf16 %v551, %v550
  %v561 = vpack.c.bf16 %v553, %v552
  %566 = vrot.lane.b32.xlu0 %v522, 96
  %v567 = vpop.permute.xlu0 %566
  %568 = vrot.lane.b32.xlu0 %v523, 96
  %v569 = vpop.permute.xlu0 %568
  %570 = vrot.lane.b32.xlu0 %v524, 96
  %v571 = vpop.permute.xlu0 %570
  %572 = vrot.lane.b32.xlu0 %v525, 96
  %v573 = vpop.permute.xlu0 %572
  %vm574 = vcmask 64512
  %v576 = vsel %vm574, %v514, 0
  %v579 = vsel %vm574, %v515, 0
  %v582 = vsel %vm574, %v516, 0
  %v585 = vsel %vm574, %v517, 0
  %v588 = vsel %vm574, %v567, 0
  %v591 = vsel %vm574, %v569, 0
  %v594 = vsel %vm574, %v571, 0
  %v597 = vsel %vm574, %v573, 0
  %599 = vmatprep.subr.bf16.mxu0 0
  %600 = vmatpush1.bf16.xpose.msra.mxu0 %v588
  %601 = vmatprep.subr.bf16.mxu0 0
  %602 = vmatpush1.bf16.xpose.msra.mxu0 %v591
  %603 = vmatprep.subr.bf16.mxu0 0
  %604 = vmatpush1.bf16.xpose.msra.mxu0 %v594
  %605 = vmatprep.subr.bf16.mxu0 0
  %606 = vmatpush1.bf16.xpose.msra.mxu0 %v597
  %607 = vmatprep.subr.bf16.mxu0 0
  %608 = vmatpush1.bf16.xpose.msra.mxu0 0
  %609 = vmatprep.subr.bf16.mxu0 0
  %610 = vmatpush1.bf16.xpose.msra.mxu0 0
  %611 = vmatprep.subr.bf16.mxu0 0
  %612 = vmatpush1.bf16.xpose.msra.mxu0 0
  %613 = vmatprep.subr.bf16.mxu0 0
  %614 = vmatpush1.bf16.xpose.msra.mxu0 0
  %615 = vmatprep.subr.bf16.mxu0 0
  %616 = vmatpush1.bf16.xpose.msra.mxu0 0
  %617 = vmatprep.subr.bf16.mxu0 0
  %618 = vmatpush1.bf16.xpose.msra.mxu0 0
  %619 = vmatprep.subr.bf16.mxu0 0
  %620 = vmatpush1.bf16.xpose.msra.mxu0 0
  %621 = vmatprep.subr.bf16.mxu0 0
  %622 = vmatpush1.bf16.xpose.msra.mxu0 0
  %623 = vmatprep.subr.bf16.mxu0 0
  %624 = vmatpush1.bf16.xpose.msra.mxu0 0
  %625 = vmatprep.subr.bf16.mxu0 0
  %626 = vmatpush1.bf16.xpose.msra.mxu0 0
  %627 = vmatprep.subr.bf16.mxu0 0
  %628 = vmatpush1.bf16.xpose.msra.mxu0 0
  %629 = vmatprep.subr.bf16.mxu0 0
  %630 = vmatpush1.bf16.xpose.msra.mxu0 0
  %631 = vmatprep.mubr.bf16.mxu0 0
  %632 = vmatmul.mubr.bf16.gmra.mrb[0].mxu0 %v576
  %v633 = vpop.f32.mrb[0].mxu0
  %v634 = vadd.f32 0.0, %v633
  %v635 = vpop.f32.mrb[0].mxu0
  %v636 = vpop.f32.mrb[0].mxu0
  %v637 = vadd.f32 0.0, %v636
  %v638 = vpop.f32.mrb[0].mxu0
  %639 = vmatprep.mubr.bf16.mxu0 0
  %640 = vmatmul.mubr.bf16.gmra.mrb[0].mxu0 %v579
  %v641 = vpop.f32.mrb[0].mxu0
  %v642 = vadd.f32 0.0, %v641
  %v643 = vpop.f32.mrb[0].mxu0
  %v644 = vpop.f32.mrb[0].mxu0
  %v645 = vadd.f32 0.0, %v644
  %v646 = vpop.f32.mrb[0].mxu0
  %647 = vmatprep.mubr.bf16.mxu0 0
  %648 = vmatmul.mubr.bf16.gmra.mrb[0].mxu0 %v582
  %v649 = vpop.f32.mrb[0].mxu0
  %v650 = vadd.f32 0.0, %v649
  %v651 = vpop.f32.mrb[0].mxu0
  %v652 = vpop.f32.mrb[0].mxu0
  %v653 = vadd.f32 0.0, %v652
  %v654 = vpop.f32.mrb[0].mxu0
  %655 = vmatprep.mubr.bf16.mxu0 0
  %656 = vmatmul.mubr.bf16.gmra.mrb[0].mxu0 %v585
  %v657 = vpop.f32.mrb[0].mxu0
  %v658 = vadd.f32 0.0, %v657
  %v659 = vpop.f32.mrb[0].mxu0
  %v660 = vpop.f32.mrb[0].mxu0
  %v661 = vadd.f32 0.0, %v660
  %v662 = vpop.f32.mrb[0].mxu0
  %663 = vdwg.mxu0
  %668 = vrot.lane.b32.xlu0 %v526, 96
  %v669 = vpop.permute.xlu0 %668
  %670 = vrot.lane.b32.xlu0 %v527, 96
  %v671 = vpop.permute.xlu0 %670
  %672 = vrot.lane.b32.xlu0 %v528, 96
  %v673 = vpop.permute.xlu0 %672
  %674 = vrot.lane.b32.xlu0 %v529, 96
  %v675 = vpop.permute.xlu0 %674
  %v677 = vsel %vm574, %v518, 0
  %v680 = vsel %vm574, %v519, 0
  %v683 = vsel %vm574, %v520, 0
  %v686 = vsel %vm574, %v521, 0
  %v689 = vsel %vm574, %v669, 0
  %v692 = vsel %vm574, %v671, 0
  %v695 = vsel %vm574, %v673, 0
  %v698 = vsel %vm574, %v675, 0
  %700 = vmatprep.subr.bf16.mxu0 0
  %701 = vmatpush1.bf16.xpose.msra.mxu0 %v689
  %702 = vmatprep.subr.bf16.mxu0 0
  %703 = vmatpush1.bf16.xpose.msra.mxu0 %v692
  %704 = vmatprep.subr.bf16.mxu0 0
  %705 = vmatpush1.bf16.xpose.msra.mxu0 %v695
  %706 = vmatprep.subr.bf16.mxu0 0
  %707 = vmatpush1.bf16.xpose.msra.mxu0 %v698
  %708 = vmatprep.subr.bf16.mxu0 0
  %709 = vmatpush1.bf16.xpose.msra.mxu0 0
  %710 = vmatprep.subr.bf16.mxu0 0
  %711 = vmatpush1.bf16.xpose.msra.mxu0 0
  %712 = vmatprep.subr.bf16.mxu0 0
  %713 = vmatpush1.bf16.xpose.msra.mxu0 0
  %714 = vmatprep.subr.bf16.mxu0 0
  %715 = vmatpush1.bf16.xpose.msra.mxu0 0
  %716 = vmatprep.subr.bf16.mxu0 0
  %717 = vmatpush1.bf16.xpose.msra.mxu0 0
  %718 = vmatprep.subr.bf16.mxu0 0
  %719 = vmatpush1.bf16.xpose.msra.mxu0 0
  %720 = vmatprep.subr.bf16.mxu0 0
  %721 = vmatpush1.bf16.xpose.msra.mxu0 0
  %722 = vmatprep.subr.bf16.mxu0 0
  %723 = vmatpush1.bf16.xpose.msra.mxu0 0
  %724 = vmatprep.subr.bf16.mxu0 0
  %725 = vmatpush1.bf16.xpose.msra.mxu0 0
  %726 = vmatprep.subr.bf16.mxu0 0
  %727 = vmatpush1.bf16.xpose.msra.mxu0 0
  %728 = vmatprep.subr.bf16.mxu0 0
  %729 = vmatpush1.bf16.xpose.msra.mxu0 0
  %730 = vmatprep.subr.bf16.mxu0 0
  %731 = vmatpush1.bf16.xpose.msra.mxu0 0
  %732 = vmatprep.mubr.bf16.mxu0 0
  %733 = vmatmul.mubr.bf16.gmra.mrb[0].mxu0 %v677
  %v734 = vpop.f32.mrb[0].mxu0
  %v735 = vadd.f32 0.0, %v734
  %v736 = vpop.f32.mrb[0].mxu0
  %v737 = vpop.f32.mrb[0].mxu0
  %v738 = vadd.f32 0.0, %v737
  %v739 = vpop.f32.mrb[0].mxu0
  %740 = vmatprep.mubr.bf16.mxu0 0
  %741 = vmatmul.mubr.bf16.gmra.mrb[0].mxu0 %v680
  %v742 = vpop.f32.mrb[0].mxu0
  %v743 = vadd.f32 0.0, %v742
  %v744 = vpop.f32.mrb[0].mxu0
  %v745 = vpop.f32.mrb[0].mxu0
  %v746 = vadd.f32 0.0, %v745
  %v747 = vpop.f32.mrb[0].mxu0
  %748 = vmatprep.mubr.bf16.mxu0 0
  %749 = vmatmul.mubr.bf16.gmra.mrb[0].mxu0 %v683
  %v750 = vpop.f32.mrb[0].mxu0
  %v751 = vadd.f32 0.0, %v750
  %v752 = vpop.f32.mrb[0].mxu0
  %v753 = vpop.f32.mrb[0].mxu0
  %v754 = vadd.f32 0.0, %v753
  %v755 = vpop.f32.mrb[0].mxu0
  %756 = vmatprep.mubr.bf16.mxu0 0
  %757 = vmatmul.mubr.bf16.gmra.mrb[0].mxu0 %v686
  %v758 = vpop.f32.mrb[0].mxu0
  %v759 = vadd.f32 0.0, %v758
  %v760 = vpop.f32.mrb[0].mxu0
  %v761 = vpop.f32.mrb[0].mxu0
  %v762 = vadd.f32 0.0, %v761
  %v763 = vpop.f32.mrb[0].mxu0
  %764 = vdwg.mxu0
  %vm765 = vcmask 523264
  %v766 = vsel %vm765, %v634, -inf
  %767 = vmax.xlane.f32.xlu0 %v766
  %v768 = vpop.xlane.xlu0 %767
  %v769 = vsel %vm765, %v637, -inf
  %770 = vmax.xlane.f32.xlu0 %v769
  %v771 = vpop.xlane.xlu0 %770
  %v772 = vsel %vm765, %v642, -inf
  %773 = vmax.xlane.f32.xlu0 %v772
  %v774 = vpop.xlane.xlu0 %773
  %v775 = vsel %vm765, %v645, -inf
  %776 = vmax.xlane.f32.xlu0 %v775
  %v777 = vpop.xlane.xlu0 %776
  %v778 = vsel %vm765, %v650, -inf
  %779 = vmax.xlane.f32.xlu0 %v778
  %v780 = vpop.xlane.xlu0 %779
  %v781 = vsel %vm765, %v653, -inf
  %782 = vmax.xlane.f32.xlu0 %v781
  %v783 = vpop.xlane.xlu0 %782
  %v784 = vsel %vm765, %v658, -inf
  %785 = vmax.xlane.f32.xlu0 %v784
  %v786 = vpop.xlane.xlu0 %785
  %v787 = vsel %vm765, %v661, -inf
  %788 = vmax.xlane.f32.xlu0 %v787
  %v789 = vpop.xlane.xlu0 %788
  %v790 = vsel %vm765, %v735, -inf
  %791 = vmax.xlane.f32.xlu0 %v790
  %v792 = vpop.xlane.xlu0 %791
  %v793 = vsel %vm765, %v738, -inf
  %794 = vmax.xlane.f32.xlu0 %v793
  %v795 = vpop.xlane.xlu0 %794
  %v796 = vsel %vm765, %v743, -inf
  %797 = vmax.xlane.f32.xlu0 %v796
  %v798 = vpop.xlane.xlu0 %797
  %v799 = vsel %vm765, %v746, -inf
  %800 = vmax.xlane.f32.xlu0 %v799
  %v801 = vpop.xlane.xlu0 %800
  %v802 = vsel %vm765, %v751, -inf
  %803 = vmax.xlane.f32.xlu0 %v802
  %v804 = vpop.xlane.xlu0 %803
  %v805 = vsel %vm765, %v754, -inf
  %806 = vmax.xlane.f32.xlu0 %v805
  %v807 = vpop.xlane.xlu0 %806
  %v808 = vsel %vm765, %v759, -inf
  %809 = vmax.xlane.f32.xlu0 %v808
  %v810 = vpop.xlane.xlu0 %809
  %v811 = vsel %vm765, %v762, -inf
  %812 = vmax.xlane.f32.xlu0 %v811
  %v813 = vpop.xlane.xlu0 %812
  %v814 = vsub.f32 %v634, %v768
  %v815 = vsub.f32 %v637, %v771
  %v816 = vsub.f32 %v642, %v774
  %v817 = vsub.f32 %v645, %v777
  %v818 = vsub.f32 %v650, %v780
  %v819 = vsub.f32 %v653, %v783
  %v820 = vsub.f32 %v658, %v786
  %v821 = vsub.f32 %v661, %v789
  %v822 = vsub.f32 %v735, %v792
  %v823 = vsub.f32 %v738, %v795
  %v824 = vsub.f32 %v743, %v798
  %v825 = vsub.f32 %v746, %v801
  %v826 = vsub.f32 %v751, %v804
  %v827 = vsub.f32 %v754, %v807
  %v828 = vsub.f32 %v759, %v810
  %v829 = vsub.f32 %v762, %v813
  %v830 = vmul.f32 %v814, 1.442695
  %v831 = vpow.pop %v830
  %v832 = vmul.f32 %v815, 1.442695
  %v833 = vpow.pop %v832
  %v834 = vmul.f32 %v816, 1.442695
  %v835 = vpow.pop %v834
  %v836 = vmul.f32 %v817, 1.442695
  %v837 = vpow.pop %v836
  %v838 = vmul.f32 %v818, 1.442695
  %v839 = vpow.pop %v838
  %v840 = vmul.f32 %v819, 1.442695
  %v841 = vpow.pop %v840
  %v842 = vmul.f32 %v820, 1.442695
  %v843 = vpow.pop %v842
  %v844 = vmul.f32 %v821, 1.442695
  %v845 = vpow.pop %v844
  %v846 = vmul.f32 %v822, 1.442695
  %v847 = vpow.pop %v846
  %v848 = vmul.f32 %v823, 1.442695
  %v849 = vpow.pop %v848
  %v850 = vmul.f32 %v824, 1.442695
  %v851 = vpow.pop %v850
  %v852 = vmul.f32 %v825, 1.442695
  %v853 = vpow.pop %v852
  %v854 = vmul.f32 %v826, 1.442695
  %v855 = vpow.pop %v854
  %v856 = vmul.f32 %v827, 1.442695
  %v857 = vpow.pop %v856
  %v858 = vmul.f32 %v828, 1.442695
  %v859 = vpow.pop %v858
  %v860 = vmul.f32 %v829, 1.442695
  %v861 = vpow.pop %v860
  %v862 = vsel %vm765, %v831, 0.0
  %863 = vadd.xlane.f32.xlu0 %v862
  %v864 = vpop.xlane.xlu0 %863
  %v865 = vsel %vm765, %v833, 0.0
  %866 = vadd.xlane.f32.xlu0 %v865
  %v867 = vpop.xlane.xlu0 %866
  %v868 = vsel %vm765, %v835, 0.0
  %869 = vadd.xlane.f32.xlu0 %v868
  %v870 = vpop.xlane.xlu0 %869
  %v871 = vsel %vm765, %v837, 0.0
  %872 = vadd.xlane.f32.xlu0 %v871
  %v873 = vpop.xlane.xlu0 %872
  %v874 = vsel %vm765, %v839, 0.0
  %875 = vadd.xlane.f32.xlu0 %v874
  %v876 = vpop.xlane.xlu0 %875
  %v877 = vsel %vm765, %v841, 0.0
  %878 = vadd.xlane.f32.xlu0 %v877
  %v879 = vpop.xlane.xlu0 %878
  %v880 = vsel %vm765, %v843, 0.0
  %881 = vadd.xlane.f32.xlu0 %v880
  %v882 = vpop.xlane.xlu0 %881
  %v883 = vsel %vm765, %v845, 0.0
  %884 = vadd.xlane.f32.xlu0 %v883
  %v885 = vpop.xlane.xlu0 %884
  %v886 = vsel %vm765, %v847, 0.0
  %887 = vadd.xlane.f32.xlu0 %v886
  %v888 = vpop.xlane.xlu0 %887
  %v889 = vsel %vm765, %v849, 0.0
  %890 = vadd.xlane.f32.xlu0 %v889
  %v891 = vpop.xlane.xlu0 %890
  %v892 = vsel %vm765, %v851, 0.0
  %893 = vadd.xlane.f32.xlu0 %v892
  %v894 = vpop.xlane.xlu0 %893
  %v895 = vsel %vm765, %v853, 0.0
  %896 = vadd.xlane.f32.xlu0 %v895
  %v897 = vpop.xlane.xlu0 %896
  %v898 = vsel %vm765, %v855, 0.0
  %899 = vadd.xlane.f32.xlu0 %v898
  %v900 = vpop.xlane.xlu0 %899
  %v901 = vsel %vm765, %v857, 0.0
  %902 = vadd.xlane.f32.xlu0 %v901
  %v903 = vpop.xlane.xlu0 %902
  %v904 = vsel %vm765, %v859, 0.0
  %905 = vadd.xlane.f32.xlu0 %v904
  %v906 = vpop.xlane.xlu0 %905
  %v907 = vsel %vm765, %v861, 0.0
  %908 = vadd.xlane.f32.xlu0 %v907
  %v909 = vpop.xlane.xlu0 %908
  %v910 = vrcp.pop %v864
  %v911 = vrcp.pop %v867
  %v912 = vrcp.pop %v870
  %v913 = vrcp.pop %v873
  %v914 = vrcp.pop %v876
  %v915 = vrcp.pop %v879
  %v916 = vrcp.pop %v882
  %v917 = vrcp.pop %v885
  %v918 = vrcp.pop %v888
  %v919 = vrcp.pop %v891
  %v920 = vrcp.pop %v894
  %v921 = vrcp.pop %v897
  %v922 = vrcp.pop %v900
  %v923 = vrcp.pop %v903
  %v924 = vrcp.pop %v906
  %v925 = vrcp.pop %v909
  %v926 = vmul.f32 %v831, %v910
  %v927 = vmul.f32 %v833, %v911
  %v928 = vmul.f32 %v835, %v912
  %v929 = vmul.f32 %v837, %v913
  %v930 = vmul.f32 %v839, %v914
  %v931 = vmul.f32 %v841, %v915
  %v932 = vmul.f32 %v843, %v916
  %v933 = vmul.f32 %v845, %v917
  %v934 = vmul.f32 %v847, %v918
  %v935 = vmul.f32 %v849, %v919
  %v936 = vmul.f32 %v851, %v920
  %v937 = vmul.f32 %v853, %v921
  %v938 = vmul.f32 %v855, %v922
  %v939 = vmul.f32 %v857, %v923
  %v940 = vmul.f32 %v859, %v924
  %v941 = vmul.f32 %v861, %v925
  %v942 = vpack.c.bf16 %v927, %v926
  %v943 = vpack.c.bf16 %v929, %v928
  %v944 = vpack.c.bf16 %v931, %v930
  %v945 = vpack.c.bf16 %v933, %v932
  %v946 = vpack.c.bf16 %v935, %v934
  %v947 = vpack.c.bf16 %v937, %v936
  %v948 = vpack.c.bf16 %v939, %v938
  %v949 = vpack.c.bf16 %v941, %v940
  %954 = vrot.lane.b32.xlu0 %v554, 64
  %v955 = vpop.permute.xlu0 %954
  %956 = vrot.lane.b32.xlu0 %v555, 64
  %v957 = vpop.permute.xlu0 %956
  %958 = vrot.lane.b32.xlu0 %v556, 64
  %v959 = vpop.permute.xlu0 %958
  %960 = vrot.lane.b32.xlu0 %v557, 64
  %v961 = vpop.permute.xlu0 %960
  %v967 = vsel %vm765, %v942, 0
  %v970 = vsel %vm765, %v943, 0
  %v973 = vsel %vm765, %v944, 0
  %v976 = vsel %vm765, %v945, 0
  %978 = vmatprep.subr.bf16.mxu0 0
  %979 = vmatpush1.bf16.msra.mxu0 %v955
  %980 = vmatprep.subr.bf16.mxu0 0
  %981 = vmatpush1.bf16.msra.mxu0 %v957
  %982 = vmatprep.subr.bf16.mxu0 0
  %983 = vmatpush1.bf16.msra.mxu0 %v959
  %984 = vmatprep.subr.bf16.mxu0 0
  %985 = vmatpush1.bf16.msra.mxu0 %v961
  %986 = vmatprep.subr.bf16.mxu0 0
  %987 = vmatpush1.bf16.msra.mxu0 0
  %988 = vmatprep.subr.bf16.mxu0 0
  %989 = vmatpush1.bf16.msra.mxu0 0
  %990 = vmatprep.subr.bf16.mxu0 0
  %991 = vmatpush1.bf16.msra.mxu0 0
  %992 = vmatprep.subr.bf16.mxu0 0
  %993 = vmatpush1.bf16.msra.mxu0 0
  %994 = vmatprep.subr.bf16.mxu0 0
  %995 = vmatpush1.bf16.msra.mxu0 0
  %996 = vmatprep.subr.bf16.mxu0 0
  %997 = vmatpush1.bf16.msra.mxu0 0
  %998 = vmatprep.subr.bf16.mxu0 0
  %999 = vmatpush1.bf16.msra.mxu0 0
  %1000 = vmatprep.subr.bf16.mxu0 0
  %1001 = vmatpush1.bf16.msra.mxu0 0
  %1002 = vmatprep.subr.bf16.mxu0 0
  %1003 = vmatpush1.bf16.msra.mxu0 0
  %1004 = vmatprep.subr.bf16.mxu0 0
  %1005 = vmatpush1.bf16.msra.mxu0 0
  %1006 = vmatprep.subr.bf16.mxu0 0
  %1007 = vmatpush1.bf16.msra.mxu0 0
  %1008 = vmatprep.subr.bf16.mxu0 0
  %1009 = vmatpush1.bf16.msra.mxu0 0
  %1010 = vmatprep.mubr.bf16.mxu0 0
  %1011 = vmatmul.mubr.bf16.gmra.mrb[0].mxu0 %v967
  %v1012 = vpop.f32.mrb[0].mxu0
  %v1013 = vadd.f32 0.0, %v1012
  %v1014 = vpop.f32.mrb[0].mxu0
  %v1015 = vpop.f32.mrb[0].mxu0
  %v1016 = vadd.f32 0.0, %v1015
  %v1017 = vpop.f32.mrb[0].mxu0
  %1018 = vmatprep.mubr.bf16.mxu0 0
  %1019 = vmatmul.mubr.bf16.gmra.mrb[0].mxu0 %v970
  %v1020 = vpop.f32.mrb[0].mxu0
  %v1021 = vadd.f32 0.0, %v1020
  %v1022 = vpop.f32.mrb[0].mxu0
  %v1023 = vpop.f32.mrb[0].mxu0
  %v1024 = vadd.f32 0.0, %v1023
  %v1025 = vpop.f32.mrb[0].mxu0
  %1026 = vmatprep.mubr.bf16.mxu0 0
  %1027 = vmatmul.mubr.bf16.gmra.mrb[0].mxu0 %v973
  %v1028 = vpop.f32.mrb[0].mxu0
  %v1029 = vadd.f32 0.0, %v1028
  %v1030 = vpop.f32.mrb[0].mxu0
  %v1031 = vpop.f32.mrb[0].mxu0
  %v1032 = vadd.f32 0.0, %v1031
  %v1033 = vpop.f32.mrb[0].mxu0
  %1034 = vmatprep.mubr.bf16.mxu0 0
  %1035 = vmatmul.mubr.bf16.gmra.mrb[0].mxu0 %v976
  %v1036 = vpop.f32.mrb[0].mxu0
  %v1037 = vadd.f32 0.0, %v1036
  %v1038 = vpop.f32.mrb[0].mxu0
  %v1039 = vpop.f32.mrb[0].mxu0
  %v1040 = vadd.f32 0.0, %v1039
  %v1041 = vpop.f32.mrb[0].mxu0
  %1042 = vdwg.mxu0
  %1047 = vrot.lane.b32.xlu0 %v558, 64
  %v1048 = vpop.permute.xlu0 %1047
  %1049 = vrot.lane.b32.xlu0 %v559, 64
  %v1050 = vpop.permute.xlu0 %1049
  %1051 = vrot.lane.b32.xlu0 %v560, 64
  %v1052 = vpop.permute.xlu0 %1051
  %1053 = vrot.lane.b32.xlu0 %v561, 64
  %v1054 = vpop.permute.xlu0 %1053
  %v1060 = vsel %vm765, %v946, 0
  %v1063 = vsel %vm765, %v947, 0
  %v1066 = vsel %vm765, %v948, 0
  %v1069 = vsel %vm765, %v949, 0
  %1071 = vmatprep.subr.bf16.mxu0 0
  %1072 = vmatpush1.bf16.msra.mxu0 %v1048
  %1073 = vmatprep.subr.bf16.mxu0 0
  %1074 = vmatpush1.bf16.msra.mxu0 %v1050
  %1075 = vmatprep.subr.bf16.mxu0 0
  %1076 = vmatpush1.bf16.msra.mxu0 %v1052
  %1077 = vmatprep.subr.bf16.mxu0 0
  %1078 = vmatpush1.bf16.msra.mxu0 %v1054
  %1079 = vmatprep.subr.bf16.mxu0 0
  %1080 = vmatpush1.bf16.msra.mxu0 0
  %1081 = vmatprep.subr.bf16.mxu0 0
  %1082 = vmatpush1.bf16.msra.mxu0 0
  %1083 = vmatprep.subr.bf16.mxu0 0
  %1084 = vmatpush1.bf16.msra.mxu0 0
  %1085 = vmatprep.subr.bf16.mxu0 0
  %1086 = vmatpush1.bf16.msra.mxu0 0
  %1087 = vmatprep.subr.bf16.mxu0 0
  %1088 = vmatpush1.bf16.msra.mxu0 0
  %1089 = vmatprep.subr.bf16.mxu0 0
  %1090 = vmatpush1.bf16.msra.mxu0 0
  %1091 = vmatprep.subr.bf16.mxu0 0
  %1092 = vmatpush1.bf16.msra.mxu0 0
  %1093 = vmatprep.subr.bf16.mxu0 0
  %1094 = vmatpush1.bf16.msra.mxu0 0
  %1095 = vmatprep.subr.bf16.mxu0 0
  %1096 = vmatpush1.bf16.msra.mxu0 0
  %1097 = vmatprep.subr.bf16.mxu0 0
  %1098 = vmatpush1.bf16.msra.mxu0 0
  %1099 = vmatprep.subr.bf16.mxu0 0
  %1100 = vmatpush1.bf16.msra.mxu0 0
  %1101 = vmatprep.subr.bf16.mxu0 0
  %1102 = vmatpush1.bf16.msra.mxu0 0
  %1103 = vmatprep.mubr.bf16.mxu0 0
  %1104 = vmatmul.mubr.bf16.gmra.mrb[0].mxu0 %v1060
  %v1105 = vpop.f32.mrb[0].mxu0
  %v1106 = vadd.f32 0.0, %v1105
  %v1107 = vpop.f32.mrb[0].mxu0
  %v1108 = vpop.f32.mrb[0].mxu0
  %v1109 = vadd.f32 0.0, %v1108
  %v1110 = vpop.f32.mrb[0].mxu0
  %1111 = vmatprep.mubr.bf16.mxu0 0
  %1112 = vmatmul.mubr.bf16.gmra.mrb[0].mxu0 %v1063
  %v1113 = vpop.f32.mrb[0].mxu0
  %v1114 = vadd.f32 0.0, %v1113
  %v1115 = vpop.f32.mrb[0].mxu0
  %v1116 = vpop.f32.mrb[0].mxu0
  %v1117 = vadd.f32 0.0, %v1116
  %v1118 = vpop.f32.mrb[0].mxu0
  %1119 = vmatprep.mubr.bf16.mxu0 0
  %1120 = vmatmul.mubr.bf16.gmra.mrb[0].mxu0 %v1066
  %v1121 = vpop.f32.mrb[0].mxu0
  %v1122 = vadd.f32 0.0, %v1121
  %v1123 = vpop.f32.mrb[0].mxu0
  %v1124 = vpop.f32.mrb[0].mxu0
  %v1125 = vadd.f32 0.0, %v1124
  %v1126 = vpop.f32.mrb[0].mxu0
  %1127 = vmatprep.mubr.bf16.mxu0 0
  %1128 = vmatmul.mubr.bf16.gmra.mrb[0].mxu0 %v1069
  %v1129 = vpop.f32.mrb[0].mxu0
  %v1130 = vadd.f32 0.0, %v1129
  %v1131 = vpop.f32.mrb[0].mxu0
  %v1132 = vpop.f32.mrb[0].mxu0
  %v1133 = vadd.f32 0.0, %v1132
  %v1134 = vpop.f32.mrb[0].mxu0
  %1135 = vdwg.mxu0
  %1140 = vrot.lane.b32.xlu0 %v514, 120
  %v1141 = vpop.permute.xlu0 %1140
  %1142 = vrot.lane.b32.xlu0 %v515, 120
  %v1143 = vpop.permute.xlu0 %1142
  %1144 = vrot.lane.b32.xlu0 %v516, 120
  %v1145 = vpop.permute.xlu0 %1144
  %1146 = vrot.lane.b32.xlu0 %v517, 120
  %v1147 = vpop.permute.xlu0 %1146
  %1148 = vrot.lane.b32.xlu0 %v522, 88
  %v1149 = vpop.permute.xlu0 %1148
  %1150 = vrot.lane.b32.xlu0 %v523, 88
  %v1151 = vpop.permute.xlu0 %1150
  %1152 = vrot.lane.b32.xlu0 %v524, 88
  %v1153 = vpop.permute.xlu0 %1152
  %1154 = vrot.lane.b32.xlu0 %v525, 88
  %v1155 = vpop.permute.xlu0 %1154
  %v1157 = vsel %vm574, %v1141, 0
  %v1160 = vsel %vm574, %v1143, 0
  %v1163 = vsel %vm574, %v1145, 0
  %v1166 = vsel %vm574, %v1147, 0
  %v1169 = vsel %vm574, %v1149, 0
  %v1172 = vsel %vm574, %v1151, 0
  %v1175 = vsel %vm574, %v1153, 0
  %v1178 = vsel %vm574, %v1155, 0
  %1180 = vmatprep.subr.bf16.mxu0 0
  %1181 = vmatpush1.bf16.xpose.msra.mxu0 %v1169
  %1182 = vmatprep.subr.bf16.mxu0 0
  %1183 = vmatpush1.bf16.xpose.msra.mxu0 %v1172
  %1184 = vmatprep.subr.bf16.mxu0 0
  %1185 = vmatpush1.bf16.xpose.msra.mxu0 %v1175
  %1186 = vmatprep.subr.bf16.mxu0 0
  %1187 = vmatpush1.bf16.xpose.msra.mxu0 %v1178
  %1188 = vmatprep.subr.bf16.mxu0 0
  %1189 = vmatpush1.bf16.xpose.msra.mxu0 0
  %1190 = vmatprep.subr.bf16.mxu0 0
  %1191 = vmatpush1.bf16.xpose.msra.mxu0 0
  %1192 = vmatprep.subr.bf16.mxu0 0
  %1193 = vmatpush1.bf16.xpose.msra.mxu0 0
  %1194 = vmatprep.subr.bf16.mxu0 0
  %1195 = vmatpush1.bf16.xpose.msra.mxu0 0
  %1196 = vmatprep.subr.bf16.mxu0 0
  %1197 = vmatpush1.bf16.xpose.msra.mxu0 0
  %1198 = vmatprep.subr.bf16.mxu0 0
  %1199 = vmatpush1.bf16.xpose.msra.mxu0 0
  %1200 = vmatprep.subr.bf16.mxu0 0
  %1201 = vmatpush1.bf16.xpose.msra.mxu0 0
  %1202 = vmatprep.subr.bf16.mxu0 0
  %1203 = vmatpush1.bf16.xpose.msra.mxu0 0
  %1204 = vmatprep.subr.bf16.mxu0 0
  %1205 = vmatpush1.bf16.xpose.msra.mxu0 0
  %1206 = vmatprep.subr.bf16.mxu0 0
  %1207 = vmatpush1.bf16.xpose.msra.mxu0 0
  %1208 = vmatprep.subr.bf16.mxu0 0
  %1209 = vmatpush1.bf16.xpose.msra.mxu0 0
  %1210 = vmatprep.subr.bf16.mxu0 0
  %1211 = vmatpush1.bf16.xpose.msra.mxu0 0
  %1212 = vmatprep.mubr.bf16.mxu0 0
  %1213 = vmatmul.mubr.bf16.gmra.mrb[0].mxu0 %v1157
  %v1214 = vpop.f32.mrb[0].mxu0
  %v1215 = vadd.f32 0.0, %v1214
  %v1216 = vpop.f32.mrb[0].mxu0
  %v1217 = vpop.f32.mrb[0].mxu0
  %v1218 = vadd.f32 0.0, %v1217
  %v1219 = vpop.f32.mrb[0].mxu0
  %1220 = vmatprep.mubr.bf16.mxu0 0
  %1221 = vmatmul.mubr.bf16.gmra.mrb[0].mxu0 %v1160
  %v1222 = vpop.f32.mrb[0].mxu0
  %v1223 = vadd.f32 0.0, %v1222
  %v1224 = vpop.f32.mrb[0].mxu0
  %v1225 = vpop.f32.mrb[0].mxu0
  %v1226 = vadd.f32 0.0, %v1225
  %v1227 = vpop.f32.mrb[0].mxu0
  %1228 = vmatprep.mubr.bf16.mxu0 0
  %1229 = vmatmul.mubr.bf16.gmra.mrb[0].mxu0 %v1163
  %v1230 = vpop.f32.mrb[0].mxu0
  %v1231 = vadd.f32 0.0, %v1230
  %v1232 = vpop.f32.mrb[0].mxu0
  %v1233 = vpop.f32.mrb[0].mxu0
  %v1234 = vadd.f32 0.0, %v1233
  %v1235 = vpop.f32.mrb[0].mxu0
  %1236 = vmatprep.mubr.bf16.mxu0 0
  %1237 = vmatmul.mubr.bf16.gmra.mrb[0].mxu0 %v1166
  %v1238 = vpop.f32.mrb[0].mxu0
  %v1239 = vadd.f32 0.0, %v1238
  %v1240 = vpop.f32.mrb[0].mxu0
  %v1241 = vpop.f32.mrb[0].mxu0
  %v1242 = vadd.f32 0.0, %v1241
  %v1243 = vpop.f32.mrb[0].mxu0
  %1244 = vdwg.mxu0
  %1249 = vrot.lane.b32.xlu0 %v518, 120
  %v1250 = vpop.permute.xlu0 %1249
  %1251 = vrot.lane.b32.xlu0 %v519, 120
  %v1252 = vpop.permute.xlu0 %1251
  %1253 = vrot.lane.b32.xlu0 %v520, 120
  %v1254 = vpop.permute.xlu0 %1253
  %1255 = vrot.lane.b32.xlu0 %v521, 120
  %v1256 = vpop.permute.xlu0 %1255
  %1257 = vrot.lane.b32.xlu0 %v526, 88
  %v1258 = vpop.permute.xlu0 %1257
  %1259 = vrot.lane.b32.xlu0 %v527, 88
  %v1260 = vpop.permute.xlu0 %1259
  %1261 = vrot.lane.b32.xlu0 %v528, 88
  %v1262 = vpop.permute.xlu0 %1261
  %1263 = vrot.lane.b32.xlu0 %v529, 88
  %v1264 = vpop.permute.xlu0 %1263
  %v1266 = vsel %vm574, %v1250, 0
  %v1269 = vsel %vm574, %v1252, 0
  %v1272 = vsel %vm574, %v1254, 0
  %v1275 = vsel %vm574, %v1256, 0
  %v1278 = vsel %vm574, %v1258, 0
  %v1281 = vsel %vm574, %v1260, 0
  %v1284 = vsel %vm574, %v1262, 0
  %v1287 = vsel %vm574, %v1264, 0
  %1289 = vmatprep.subr.bf16.mxu0 0
  %1290 = vmatpush1.bf16.xpose.msra.mxu0 %v1278
  %1291 = vmatprep.subr.bf16.mxu0 0
  %1292 = vmatpush1.bf16.xpose.msra.mxu0 %v1281
  %1293 = vmatprep.subr.bf16.mxu0 0
  %1294 = vmatpush1.bf16.xpose.msra.mxu0 %v1284
  %1295 = vmatprep.subr.bf16.mxu0 0
  %1296 = vmatpush1.bf16.xpose.msra.mxu0 %v1287
  %1297 = vmatprep.subr.bf16.mxu0 0
  %1298 = vmatpush1.bf16.xpose.msra.mxu0 0
  %1299 = vmatprep.subr.bf16.mxu0 0
  %1300 = vmatpush1.bf16.xpose.msra.mxu0 0
  %1301 = vmatprep.subr.bf16.mxu0 0
  %1302 = vmatpush1.bf16.xpose.msra.mxu0 0
  %1303 = vmatprep.subr.bf16.mxu0 0
  %1304 = vmatpush1.bf16.xpose.msra.mxu0 0
  %1305 = vmatprep.subr.bf16.mxu0 0
  %1306 = vmatpush1.bf16.xpose.msra.mxu0 0
  %1307 = vmatprep.subr.bf16.mxu0 0
  %1308 = vmatpush1.bf16.xpose.msra.mxu0 0
  %1309 = vmatprep.subr.bf16.mxu0 0
  %1310 = vmatpush1.bf16.xpose.msra.mxu0 0
  %1311 = vmatprep.subr.bf16.mxu0 0
  %1312 = vmatpush1.bf16.xpose.msra.mxu0 0
  %1313 = vmatprep.subr.bf16.mxu0 0
  %1314 = vmatpush1.bf16.xpose.msra.mxu0 0
  %1315 = vmatprep.subr.bf16.mxu0 0
  %1316 = vmatpush1.bf16.xpose.msra.mxu0 0
  %1317 = vmatprep.subr.bf16.mxu0 0
  %1318 = vmatpush1.bf16.xpose.msra.mxu0 0
  %1319 = vmatprep.subr.bf16.mxu0 0
  %1320 = vmatpush1.bf16.xpose.msra.mxu0 0
  %1321 = vmatprep.mubr.bf16.mxu0 0
  %1322 = vmatmul.mubr.bf16.gmra.mrb[0].mxu0 %v1266
  %v1323 = vpop.f32.mrb[0].mxu0
  %v1324 = vadd.f32 0.0, %v1323
  %v1325 = vpop.f32.mrb[0].mxu0
  %v1326 = vpop.f32.mrb[0].mxu0
  %v1327 = vadd.f32 0.0, %v1326
  %v1328 = vpop.f32.mrb[0].mxu0
  %1329 = vmatprep.mubr.bf16.mxu0 0
  %1330 = vmatmul.mubr.bf16.gmra.mrb[0].mxu0 %v1269
  %v1331 = vpop.f32.mrb[0].mxu0
  %v1332 = vadd.f32 0.0, %v1331
  %v1333 = vpop.f32.mrb[0].mxu0
  %v1334 = vpop.f32.mrb[0].mxu0
  %v1335 = vadd.f32 0.0, %v1334
  %v1336 = vpop.f32.mrb[0].mxu0
  %1337 = vmatprep.mubr.bf16.mxu0 0
  %1338 = vmatmul.mubr.bf16.gmra.mrb[0].mxu0 %v1272
  %v1339 = vpop.f32.mrb[0].mxu0
  %v1340 = vadd.f32 0.0, %v1339
  %v1341 = vpop.f32.mrb[0].mxu0
  %v1342 = vpop.f32.mrb[0].mxu0
  %v1343 = vadd.f32 0.0, %v1342
  %v1344 = vpop.f32.mrb[0].mxu0
  %1345 = vmatprep.mubr.bf16.mxu0 0
  %1346 = vmatmul.mubr.bf16.gmra.mrb[0].mxu0 %v1275
  %v1347 = vpop.f32.mrb[0].mxu0
  %v1348 = vadd.f32 0.0, %v1347
  %v1349 = vpop.f32.mrb[0].mxu0
  %v1350 = vpop.f32.mrb[0].mxu0
  %v1351 = vadd.f32 0.0, %v1350
  %v1352 = vpop.f32.mrb[0].mxu0
  %1353 = vdwg.mxu0
  %v1354 = vsel %vm765, %v1215, -inf
  %1355 = vmax.xlane.f32.xlu0 %v1354
  %v1356 = vpop.xlane.xlu0 %1355
  %v1357 = vsel %vm765, %v1218, -inf
  %1358 = vmax.xlane.f32.xlu0 %v1357
  %v1359 = vpop.xlane.xlu0 %1358
  %v1360 = vsel %vm765, %v1223, -inf
  %1361 = vmax.xlane.f32.xlu0 %v1360
  %v1362 = vpop.xlane.xlu0 %1361
  %v1363 = vsel %vm765, %v1226, -inf
  %1364 = vmax.xlane.f32.xlu0 %v1363
  %v1365 = vpop.xlane.xlu0 %1364
  %v1366 = vsel %vm765, %v1231, -inf
  %1367 = vmax.xlane.f32.xlu0 %v1366
  %v1368 = vpop.xlane.xlu0 %1367
  %v1369 = vsel %vm765, %v1234, -inf
  %1370 = vmax.xlane.f32.xlu0 %v1369
  %v1371 = vpop.xlane.xlu0 %1370
  %v1372 = vsel %vm765, %v1239, -inf
  %1373 = vmax.xlane.f32.xlu0 %v1372
  %v1374 = vpop.xlane.xlu0 %1373
  %v1375 = vsel %vm765, %v1242, -inf
  %1376 = vmax.xlane.f32.xlu0 %v1375
  %v1377 = vpop.xlane.xlu0 %1376
  %v1378 = vsel %vm765, %v1324, -inf
  %1379 = vmax.xlane.f32.xlu0 %v1378
  %v1380 = vpop.xlane.xlu0 %1379
  %v1381 = vsel %vm765, %v1327, -inf
  %1382 = vmax.xlane.f32.xlu0 %v1381
  %v1383 = vpop.xlane.xlu0 %1382
  %v1384 = vsel %vm765, %v1332, -inf
  %1385 = vmax.xlane.f32.xlu0 %v1384
  %v1386 = vpop.xlane.xlu0 %1385
  %v1387 = vsel %vm765, %v1335, -inf
  %1388 = vmax.xlane.f32.xlu0 %v1387
  %v1389 = vpop.xlane.xlu0 %1388
  %v1390 = vsel %vm765, %v1340, -inf
  %1391 = vmax.xlane.f32.xlu0 %v1390
  %v1392 = vpop.xlane.xlu0 %1391
  %v1393 = vsel %vm765, %v1343, -inf
  %1394 = vmax.xlane.f32.xlu0 %v1393
  %v1395 = vpop.xlane.xlu0 %1394
  %v1396 = vsel %vm765, %v1348, -inf
  %1397 = vmax.xlane.f32.xlu0 %v1396
  %v1398 = vpop.xlane.xlu0 %1397
  %v1399 = vsel %vm765, %v1351, -inf
  %1400 = vmax.xlane.f32.xlu0 %v1399
  %v1401 = vpop.xlane.xlu0 %1400
  %v1402 = vsub.f32 %v1215, %v1356
  %v1403 = vsub.f32 %v1218, %v1359
  %v1404 = vsub.f32 %v1223, %v1362
  %v1405 = vsub.f32 %v1226, %v1365
  %v1406 = vsub.f32 %v1231, %v1368
  %v1407 = vsub.f32 %v1234, %v1371
  %v1408 = vsub.f32 %v1239, %v1374
  %v1409 = vsub.f32 %v1242, %v1377
  %v1410 = vsub.f32 %v1324, %v1380
  %v1411 = vsub.f32 %v1327, %v1383
  %v1412 = vsub.f32 %v1332, %v1386
  %v1413 = vsub.f32 %v1335, %v1389
  %v1414 = vsub.f32 %v1340, %v1392
  %v1415 = vsub.f32 %v1343, %v1395
  %v1416 = vsub.f32 %v1348, %v1398
  %v1417 = vsub.f32 %v1351, %v1401
  %v1418 = vmul.f32 %v1402, 1.442695
  %v1419 = vpow.pop %v1418
  %v1420 = vmul.f32 %v1403, 1.442695
  %v1421 = vpow.pop %v1420
  %v1422 = vmul.f32 %v1404, 1.442695
  %v1423 = vpow.pop %v1422
  %v1424 = vmul.f32 %v1405, 1.442695
  %v1425 = vpow.pop %v1424
  %v1426 = vmul.f32 %v1406, 1.442695
  %v1427 = vpow.pop %v1426
  %v1428 = vmul.f32 %v1407, 1.442695
  %v1429 = vpow.pop %v1428
  %v1430 = vmul.f32 %v1408, 1.442695
  %v1431 = vpow.pop %v1430
  %v1432 = vmul.f32 %v1409, 1.442695
  %v1433 = vpow.pop %v1432
  %v1434 = vmul.f32 %v1410, 1.442695
  %v1435 = vpow.pop %v1434
  %v1436 = vmul.f32 %v1411, 1.442695
  %v1437 = vpow.pop %v1436
  %v1438 = vmul.f32 %v1412, 1.442695
  %v1439 = vpow.pop %v1438
  %v1440 = vmul.f32 %v1413, 1.442695
  %v1441 = vpow.pop %v1440
  %v1442 = vmul.f32 %v1414, 1.442695
  %v1443 = vpow.pop %v1442
  %v1444 = vmul.f32 %v1415, 1.442695
  %v1445 = vpow.pop %v1444
  %v1446 = vmul.f32 %v1416, 1.442695
  %v1447 = vpow.pop %v1446
  %v1448 = vmul.f32 %v1417, 1.442695
  %v1449 = vpow.pop %v1448
  %v1450 = vsel %vm765, %v1419, 0.0
  %1451 = vadd.xlane.f32.xlu0 %v1450
  %v1452 = vpop.xlane.xlu0 %1451
  %v1453 = vsel %vm765, %v1421, 0.0
  %1454 = vadd.xlane.f32.xlu0 %v1453
  %v1455 = vpop.xlane.xlu0 %1454
  %v1456 = vsel %vm765, %v1423, 0.0
  %1457 = vadd.xlane.f32.xlu0 %v1456
  %v1458 = vpop.xlane.xlu0 %1457
  %v1459 = vsel %vm765, %v1425, 0.0
  %1460 = vadd.xlane.f32.xlu0 %v1459
  %v1461 = vpop.xlane.xlu0 %1460
  %v1462 = vsel %vm765, %v1427, 0.0
  %1463 = vadd.xlane.f32.xlu0 %v1462
  %v1464 = vpop.xlane.xlu0 %1463
  %v1465 = vsel %vm765, %v1429, 0.0
  %1466 = vadd.xlane.f32.xlu0 %v1465
  %v1467 = vpop.xlane.xlu0 %1466
  %v1468 = vsel %vm765, %v1431, 0.0
  %1469 = vadd.xlane.f32.xlu0 %v1468
  %v1470 = vpop.xlane.xlu0 %1469
  %v1471 = vsel %vm765, %v1433, 0.0
  %1472 = vadd.xlane.f32.xlu0 %v1471
  %v1473 = vpop.xlane.xlu0 %1472
  %v1474 = vsel %vm765, %v1435, 0.0
  %1475 = vadd.xlane.f32.xlu0 %v1474
  %v1476 = vpop.xlane.xlu0 %1475
  %v1477 = vsel %vm765, %v1437, 0.0
  %1478 = vadd.xlane.f32.xlu0 %v1477
  %v1479 = vpop.xlane.xlu0 %1478
  %v1480 = vsel %vm765, %v1439, 0.0
  %1481 = vadd.xlane.f32.xlu0 %v1480
  %v1482 = vpop.xlane.xlu0 %1481
  %v1483 = vsel %vm765, %v1441, 0.0
  %1484 = vadd.xlane.f32.xlu0 %v1483
  %v1485 = vpop.xlane.xlu0 %1484
  %v1486 = vsel %vm765, %v1443, 0.0
  %1487 = vadd.xlane.f32.xlu0 %v1486
  %v1488 = vpop.xlane.xlu0 %1487
  %v1489 = vsel %vm765, %v1445, 0.0
  %1490 = vadd.xlane.f32.xlu0 %v1489
  %v1491 = vpop.xlane.xlu0 %1490
  %v1492 = vsel %vm765, %v1447, 0.0
  %1493 = vadd.xlane.f32.xlu0 %v1492
  %v1494 = vpop.xlane.xlu0 %1493
  %v1495 = vsel %vm765, %v1449, 0.0
  %1496 = vadd.xlane.f32.xlu0 %v1495
  %v1497 = vpop.xlane.xlu0 %1496
  %v1498 = vrcp.pop %v1452
  %v1499 = vrcp.pop %v1455
  %v1500 = vrcp.pop %v1458
  %v1501 = vrcp.pop %v1461
  %v1502 = vrcp.pop %v1464
  %v1503 = vrcp.pop %v1467
  %v1504 = vrcp.pop %v1470
  %v1505 = vrcp.pop %v1473
  %v1506 = vrcp.pop %v1476
  %v1507 = vrcp.pop %v1479
  %v1508 = vrcp.pop %v1482
  %v1509 = vrcp.pop %v1485
  %v1510 = vrcp.pop %v1488
  %v1511 = vrcp.pop %v1491
  %v1512 = vrcp.pop %v1494
  %v1513 = vrcp.pop %v1497
  %v1514 = vmul.f32 %v1419, %v1498
  %v1515 = vmul.f32 %v1421, %v1499
  %v1516 = vmul.f32 %v1423, %v1500
  %v1517 = vmul.f32 %v1425, %v1501
  %v1518 = vmul.f32 %v1427, %v1502
  %v1519 = vmul.f32 %v1429, %v1503
  %v1520 = vmul.f32 %v1431, %v1504
  %v1521 = vmul.f32 %v1433, %v1505
  %v1522 = vmul.f32 %v1435, %v1506
  %v1523 = vmul.f32 %v1437, %v1507
  %v1524 = vmul.f32 %v1439, %v1508
  %v1525 = vmul.f32 %v1441, %v1509
  %v1526 = vmul.f32 %v1443, %v1510
  %v1527 = vmul.f32 %v1445, %v1511
  %v1528 = vmul.f32 %v1447, %v1512
  %v1529 = vmul.f32 %v1449, %v1513
  %v1530 = vpack.c.bf16 %v1515, %v1514
  %v1531 = vpack.c.bf16 %v1517, %v1516
  %v1532 = vpack.c.bf16 %v1519, %v1518
  %v1533 = vpack.c.bf16 %v1521, %v1520
  %v1534 = vpack.c.bf16 %v1523, %v1522
  %v1535 = vpack.c.bf16 %v1525, %v1524
  %v1536 = vpack.c.bf16 %v1527, %v1526
  %v1537 = vpack.c.bf16 %v1529, %v1528
  %1538 = vrot.lane.b32.xlu0 %v554, 56
  %v1539 = vpop.permute.xlu0 %1538
  %1540 = vrot.lane.b32.xlu0 %v555, 56
  %v1541 = vpop.permute.xlu0 %1540
  %1542 = vrot.lane.b32.xlu0 %v556, 56
  %v1543 = vpop.permute.xlu0 %1542
  %1544 = vrot.lane.b32.xlu0 %v557, 56
  %v1545 = vpop.permute.xlu0 %1544
  %v1551 = vsel %vm765, %v1530, 0
  %v1554 = vsel %vm765, %v1531, 0
  %v1557 = vsel %vm765, %v1532, 0
  %v1560 = vsel %vm765, %v1533, 0
  %1562 = vmatprep.subr.bf16.mxu0 0
  %1563 = vmatpush1.bf16.msra.mxu0 %v1539
  %1564 = vmatprep.subr.bf16.mxu0 0
  %1565 = vmatpush1.bf16.msra.mxu0 %v1541
  %1566 = vmatprep.subr.bf16.mxu0 0
  %1567 = vmatpush1.bf16.msra.mxu0 %v1543
  %1568 = vmatprep.subr.bf16.mxu0 0
  %1569 = vmatpush1.bf16.msra.mxu0 %v1545
  %1570 = vmatprep.subr.bf16.mxu0 0
  %1571 = vmatpush1.bf16.msra.mxu0 0
  %1572 = vmatprep.subr.bf16.mxu0 0
  %1573 = vmatpush1.bf16.msra.mxu0 0
  %1574 = vmatprep.subr.bf16.mxu0 0
  %1575 = vmatpush1.bf16.msra.mxu0 0
  %1576 = vmatprep.subr.bf16.mxu0 0
  %1577 = vmatpush1.bf16.msra.mxu0 0
  %1578 = vmatprep.subr.bf16.mxu0 0
  %1579 = vmatpush1.bf16.msra.mxu0 0
  %1580 = vmatprep.subr.bf16.mxu0 0
  %1581 = vmatpush1.bf16.msra.mxu0 0
  %1582 = vmatprep.subr.bf16.mxu0 0
  %1583 = vmatpush1.bf16.msra.mxu0 0
  %1584 = vmatprep.subr.bf16.mxu0 0
  %1585 = vmatpush1.bf16.msra.mxu0 0
  %1586 = vmatprep.subr.bf16.mxu0 0
  %1587 = vmatpush1.bf16.msra.mxu0 0
  %1588 = vmatprep.subr.bf16.mxu0 0
  %1589 = vmatpush1.bf16.msra.mxu0 0
  %1590 = vmatprep.subr.bf16.mxu0 0
  %1591 = vmatpush1.bf16.msra.mxu0 0
  %1592 = vmatprep.subr.bf16.mxu0 0
  %1593 = vmatpush1.bf16.msra.mxu0 0
  %1594 = vmatprep.mubr.bf16.mxu0 0
  %1595 = vmatmul.mubr.bf16.gmra.mrb[0].mxu0 %v1551
  %v1596 = vpop.f32.mrb[0].mxu0
  %v1597 = vadd.f32 0.0, %v1596
  %v1598 = vpop.f32.mrb[0].mxu0
  %v1599 = vpop.f32.mrb[0].mxu0
  %v1600 = vadd.f32 0.0, %v1599
  %v1601 = vpop.f32.mrb[0].mxu0
  %1602 = vmatprep.mubr.bf16.mxu0 0
  %1603 = vmatmul.mubr.bf16.gmra.mrb[0].mxu0 %v1554
  %v1604 = vpop.f32.mrb[0].mxu0
  %v1605 = vadd.f32 0.0, %v1604
  %v1606 = vpop.f32.mrb[0].mxu0
  %v1607 = vpop.f32.mrb[0].mxu0
  %v1608 = vadd.f32 0.0, %v1607
  %v1609 = vpop.f32.mrb[0].mxu0
  %1610 = vmatprep.mubr.bf16.mxu0 0
  %1611 = vmatmul.mubr.bf16.gmra.mrb[0].mxu0 %v1557
  %v1612 = vpop.f32.mrb[0].mxu0
  %v1613 = vadd.f32 0.0, %v1612
  %v1614 = vpop.f32.mrb[0].mxu0
  %v1615 = vpop.f32.mrb[0].mxu0
  %v1616 = vadd.f32 0.0, %v1615
  %v1617 = vpop.f32.mrb[0].mxu0
  %1618 = vmatprep.mubr.bf16.mxu0 0
  %1619 = vmatmul.mubr.bf16.gmra.mrb[0].mxu0 %v1560
  %v1620 = vpop.f32.mrb[0].mxu0
  %v1621 = vadd.f32 0.0, %v1620
  %v1622 = vpop.f32.mrb[0].mxu0
  %v1623 = vpop.f32.mrb[0].mxu0
  %v1624 = vadd.f32 0.0, %v1623
  %v1625 = vpop.f32.mrb[0].mxu0
  %1626 = vdwg.mxu0
  %1627 = vrot.lane.b32.xlu0 %v558, 56
  %v1628 = vpop.permute.xlu0 %1627
  %1629 = vrot.lane.b32.xlu0 %v559, 56
  %v1630 = vpop.permute.xlu0 %1629
  %1631 = vrot.lane.b32.xlu0 %v560, 56
  %v1632 = vpop.permute.xlu0 %1631
  %1633 = vrot.lane.b32.xlu0 %v561, 56
  %v1634 = vpop.permute.xlu0 %1633
  %v1640 = vsel %vm765, %v1534, 0
  %v1643 = vsel %vm765, %v1535, 0
  %v1646 = vsel %vm765, %v1536, 0
  %v1649 = vsel %vm765, %v1537, 0
  %1651 = vmatprep.subr.bf16.mxu0 0
  %1652 = vmatpush1.bf16.msra.mxu0 %v1628
  %1653 = vmatprep.subr.bf16.mxu0 0
  %1654 = vmatpush1.bf16.msra.mxu0 %v1630
  %1655 = vmatprep.subr.bf16.mxu0 0
  %1656 = vmatpush1.bf16.msra.mxu0 %v1632
  %1657 = vmatprep.subr.bf16.mxu0 0
  %1658 = vmatpush1.bf16.msra.mxu0 %v1634
  %1659 = vmatprep.subr.bf16.mxu0 0
  %1660 = vmatpush1.bf16.msra.mxu0 0
  %1661 = vmatprep.subr.bf16.mxu0 0
  %1662 = vmatpush1.bf16.msra.mxu0 0
  %1663 = vmatprep.subr.bf16.mxu0 0
  %1664 = vmatpush1.bf16.msra.mxu0 0
  %1665 = vmatprep.subr.bf16.mxu0 0
  %1666 = vmatpush1.bf16.msra.mxu0 0
  %1667 = vmatprep.subr.bf16.mxu0 0
  %1668 = vmatpush1.bf16.msra.mxu0 0
  %1669 = vmatprep.subr.bf16.mxu0 0
  %1670 = vmatpush1.bf16.msra.mxu0 0
  %1671 = vmatprep.subr.bf16.mxu0 0
  %1672 = vmatpush1.bf16.msra.mxu0 0
  %1673 = vmatprep.subr.bf16.mxu0 0
  %1674 = vmatpush1.bf16.msra.mxu0 0
  %1675 = vmatprep.subr.bf16.mxu0 0
  %1676 = vmatpush1.bf16.msra.mxu0 0
  %1677 = vmatprep.subr.bf16.mxu0 0
  %1678 = vmatpush1.bf16.msra.mxu0 0
  %1679 = vmatprep.subr.bf16.mxu0 0
  %1680 = vmatpush1.bf16.msra.mxu0 0
  %1681 = vmatprep.subr.bf16.mxu0 0
  %1682 = vmatpush1.bf16.msra.mxu0 0
  %1683 = vmatprep.mubr.bf16.mxu0 0
  %1684 = vmatmul.mubr.bf16.gmra.mrb[0].mxu0 %v1640
  %v1685 = vpop.f32.mrb[0].mxu0
  %v1686 = vadd.f32 0.0, %v1685
  %v1687 = vpop.f32.mrb[0].mxu0
  %v1688 = vpop.f32.mrb[0].mxu0
  %v1689 = vadd.f32 0.0, %v1688
  %v1690 = vpop.f32.mrb[0].mxu0
  %1691 = vmatprep.mubr.bf16.mxu0 0
  %1692 = vmatmul.mubr.bf16.gmra.mrb[0].mxu0 %v1643
  %v1693 = vpop.f32.mrb[0].mxu0
  %v1694 = vadd.f32 0.0, %v1693
  %v1695 = vpop.f32.mrb[0].mxu0
  %v1696 = vpop.f32.mrb[0].mxu0
  %v1697 = vadd.f32 0.0, %v1696
  %v1698 = vpop.f32.mrb[0].mxu0
  %1699 = vmatprep.mubr.bf16.mxu0 0
  %1700 = vmatmul.mubr.bf16.gmra.mrb[0].mxu0 %v1646
  %v1701 = vpop.f32.mrb[0].mxu0
  %v1702 = vadd.f32 0.0, %v1701
  %v1703 = vpop.f32.mrb[0].mxu0
  %v1704 = vpop.f32.mrb[0].mxu0
  %v1705 = vadd.f32 0.0, %v1704
  %v1706 = vpop.f32.mrb[0].mxu0
  %1707 = vmatprep.mubr.bf16.mxu0 0
  %1708 = vmatmul.mubr.bf16.gmra.mrb[0].mxu0 %v1649
  %v1709 = vpop.f32.mrb[0].mxu0
  %v1710 = vadd.f32 0.0, %v1709
  %v1711 = vpop.f32.mrb[0].mxu0
  %v1712 = vpop.f32.mrb[0].mxu0
  %v1713 = vadd.f32 0.0, %v1712
  %v1714 = vpop.f32.mrb[0].mxu0
  %1715 = vdwg.mxu0
  %1716 = vrot.lane.b32.xlu0 %v514, 112
  %v1717 = vpop.permute.xlu0 %1716
  %1718 = vrot.lane.b32.xlu0 %v515, 112
  %v1719 = vpop.permute.xlu0 %1718
  %1720 = vrot.lane.b32.xlu0 %v516, 112
  %v1721 = vpop.permute.xlu0 %1720
  %1722 = vrot.lane.b32.xlu0 %v517, 112
  %v1723 = vpop.permute.xlu0 %1722
  %1724 = vrot.lane.b32.xlu0 %v522, 80
  %v1725 = vpop.permute.xlu0 %1724
  %1726 = vrot.lane.b32.xlu0 %v523, 80
  %v1727 = vpop.permute.xlu0 %1726
  %1728 = vrot.lane.b32.xlu0 %v524, 80
  %v1729 = vpop.permute.xlu0 %1728
  %1730 = vrot.lane.b32.xlu0 %v525, 80
  %v1731 = vpop.permute.xlu0 %1730
  %v1733 = vsel %vm574, %v1717, 0
  %v1736 = vsel %vm574, %v1719, 0
  %v1739 = vsel %vm574, %v1721, 0
  %v1742 = vsel %vm574, %v1723, 0
  %v1745 = vsel %vm574, %v1725, 0
  %v1748 = vsel %vm574, %v1727, 0
  %v1751 = vsel %vm574, %v1729, 0
  %v1754 = vsel %vm574, %v1731, 0
  %1756 = vmatprep.subr.bf16.mxu0 0
  %1757 = vmatpush1.bf16.xpose.msra.mxu0 %v1745
  %1758 = vmatprep.subr.bf16.mxu0 0
  %1759 = vmatpush1.bf16.xpose.msra.mxu0 %v1748
  %1760 = vmatprep.subr.bf16.mxu0 0
  %1761 = vmatpush1.bf16.xpose.msra.mxu0 %v1751
  %1762 = vmatprep.subr.bf16.mxu0 0
  %1763 = vmatpush1.bf16.xpose.msra.mxu0 %v1754
  %1764 = vmatprep.subr.bf16.mxu0 0
  %1765 = vmatpush1.bf16.xpose.msra.mxu0 0
  %1766 = vmatprep.subr.bf16.mxu0 0
  %1767 = vmatpush1.bf16.xpose.msra.mxu0 0
  %1768 = vmatprep.subr.bf16.mxu0 0
  %1769 = vmatpush1.bf16.xpose.msra.mxu0 0
  %1770 = vmatprep.subr.bf16.mxu0 0
  %1771 = vmatpush1.bf16.xpose.msra.mxu0 0
  %1772 = vmatprep.subr.bf16.mxu0 0
  %1773 = vmatpush1.bf16.xpose.msra.mxu0 0
  %1774 = vmatprep.subr.bf16.mxu0 0
  %1775 = vmatpush1.bf16.xpose.msra.mxu0 0
  %1776 = vmatprep.subr.bf16.mxu0 0
  %1777 = vmatpush1.bf16.xpose.msra.mxu0 0
  %1778 = vmatprep.subr.bf16.mxu0 0
  %1779 = vmatpush1.bf16.xpose.msra.mxu0 0
  %1780 = vmatprep.subr.bf16.mxu0 0
  %1781 = vmatpush1.bf16.xpose.msra.mxu0 0
  %1782 = vmatprep.subr.bf16.mxu0 0
  %1783 = vmatpush1.bf16.xpose.msra.mxu0 0
  %1784 = vmatprep.subr.bf16.mxu0 0
  %1785 = vmatpush1.bf16.xpose.msra.mxu0 0
  %1786 = vmatprep.subr.bf16.mxu0 0
  %1787 = vmatpush1.bf16.xpose.msra.mxu0 0
  %1788 = vmatprep.mubr.bf16.mxu0 0
  %1789 = vmatmul.mubr.bf16.gmra.mrb[0].mxu0 %v1733
  %v1790 = vpop.f32.mrb[0].mxu0
  %v1791 = vadd.f32 0.0, %v1790
  %v1792 = vpop.f32.mrb[0].mxu0
  %v1793 = vpop.f32.mrb[0].mxu0
  %v1794 = vadd.f32 0.0, %v1793
  %v1795 = vpop.f32.mrb[0].mxu0
  %1796 = vmatprep.mubr.bf16.mxu0 0
  %1797 = vmatmul.mubr.bf16.gmra.mrb[0].mxu0 %v1736
  %v1798 = vpop.f32.mrb[0].mxu0
  %v1799 = vadd.f32 0.0, %v1798
  %v1800 = vpop.f32.mrb[0].mxu0
  %v1801 = vpop.f32.mrb[0].mxu0
  %v1802 = vadd.f32 0.0, %v1801
  %v1803 = vpop.f32.mrb[0].mxu0
  %1804 = vmatprep.mubr.bf16.mxu0 0
  %1805 = vmatmul.mubr.bf16.gmra.mrb[0].mxu0 %v1739
  %v1806 = vpop.f32.mrb[0].mxu0
  %v1807 = vadd.f32 0.0, %v1806
  %v1808 = vpop.f32.mrb[0].mxu0
  %v1809 = vpop.f32.mrb[0].mxu0
  %v1810 = vadd.f32 0.0, %v1809
  %v1811 = vpop.f32.mrb[0].mxu0
  %1812 = vmatprep.mubr.bf16.mxu0 0
  %1813 = vmatmul.mubr.bf16.gmra.mrb[0].mxu0 %v1742
  %v1814 = vpop.f32.mrb[0].mxu0
  %v1815 = vadd.f32 0.0, %v1814
  %v1816 = vpop.f32.mrb[0].mxu0
  %v1817 = vpop.f32.mrb[0].mxu0
  %v1818 = vadd.f32 0.0, %v1817
  %v1819 = vpop.f32.mrb[0].mxu0
  %1820 = vdwg.mxu0
  %1821 = vrot.lane.b32.xlu0 %v518, 112
  %v1822 = vpop.permute.xlu0 %1821
  %1823 = vrot.lane.b32.xlu0 %v519, 112
  %v1824 = vpop.permute.xlu0 %1823
  %1825 = vrot.lane.b32.xlu0 %v520, 112
  %v1826 = vpop.permute.xlu0 %1825
  %1827 = vrot.lane.b32.xlu0 %v521, 112
  %v1828 = vpop.permute.xlu0 %1827
  %1829 = vrot.lane.b32.xlu0 %v526, 80
  %v1830 = vpop.permute.xlu0 %1829
  %1831 = vrot.lane.b32.xlu0 %v527, 80
  %v1832 = vpop.permute.xlu0 %1831
  %1833 = vrot.lane.b32.xlu0 %v528, 80
  %v1834 = vpop.permute.xlu0 %1833
  %1835 = vrot.lane.b32.xlu0 %v529, 80
  %v1836 = vpop.permute.xlu0 %1835
  %v1838 = vsel %vm574, %v1822, 0
  %v1841 = vsel %vm574, %v1824, 0
  %v1844 = vsel %vm574, %v1826, 0
  %v1847 = vsel %vm574, %v1828, 0
  %v1850 = vsel %vm574, %v1830, 0
  %v1853 = vsel %vm574, %v1832, 0
  %v1856 = vsel %vm574, %v1834, 0
  %v1859 = vsel %vm574, %v1836, 0
  %1861 = vmatprep.subr.bf16.mxu0 0
  %1862 = vmatpush1.bf16.xpose.msra.mxu0 %v1850
  %1863 = vmatprep.subr.bf16.mxu0 0
  %1864 = vmatpush1.bf16.xpose.msra.mxu0 %v1853
  %1865 = vmatprep.subr.bf16.mxu0 0
  %1866 = vmatpush1.bf16.xpose.msra.mxu0 %v1856
  %1867 = vmatprep.subr.bf16.mxu0 0
  %1868 = vmatpush1.bf16.xpose.msra.mxu0 %v1859
  %1869 = vmatprep.subr.bf16.mxu0 0
  %1870 = vmatpush1.bf16.xpose.msra.mxu0 0
  %1871 = vmatprep.subr.bf16.mxu0 0
  %1872 = vmatpush1.bf16.xpose.msra.mxu0 0
  %1873 = vmatprep.subr.bf16.mxu0 0
  %1874 = vmatpush1.bf16.xpose.msra.mxu0 0
  %1875 = vmatprep.subr.bf16.mxu0 0
  %1876 = vmatpush1.bf16.xpose.msra.mxu0 0
  %1877 = vmatprep.subr.bf16.mxu0 0
  %1878 = vmatpush1.bf16.xpose.msra.mxu0 0
  %1879 = vmatprep.subr.bf16.mxu0 0
  %1880 = vmatpush1.bf16.xpose.msra.mxu0 0
  %1881 = vmatprep.subr.bf16.mxu0 0
  %1882 = vmatpush1.bf16.xpose.msra.mxu0 0
  %1883 = vmatprep.subr.bf16.mxu0 0
  %1884 = vmatpush1.bf16.xpose.msra.mxu0 0
  %1885 = vmatprep.subr.bf16.mxu0 0
  %1886 = vmatpush1.bf16.xpose.msra.mxu0 0
  %1887 = vmatprep.subr.bf16.mxu0 0
  %1888 = vmatpush1.bf16.xpose.msra.mxu0 0
  %1889 = vmatprep.subr.bf16.mxu0 0
  %1890 = vmatpush1.bf16.xpose.msra.mxu0 0
  %1891 = vmatprep.subr.bf16.mxu0 0
  %1892 = vmatpush1.bf16.xpose.msra.mxu0 0
  %1893 = vmatprep.mubr.bf16.mxu0 0
  %1894 = vmatmul.mubr.bf16.gmra.mrb[0].mxu0 %v1838
  %v1895 = vpop.f32.mrb[0].mxu0
  %v1896 = vadd.f32 0.0, %v1895
  %v1897 = vpop.f32.mrb[0].mxu0
  %v1898 = vpop.f32.mrb[0].mxu0
  %v1899 = vadd.f32 0.0, %v1898
  %v1900 = vpop.f32.mrb[0].mxu0
  %1901 = vmatprep.mubr.bf16.mxu0 0
  %1902 = vmatmul.mubr.bf16.gmra.mrb[0].mxu0 %v1841
  %v1903 = vpop.f32.mrb[0].mxu0
  %v1904 = vadd.f32 0.0, %v1903
  %v1905 = vpop.f32.mrb[0].mxu0
  %v1906 = vpop.f32.mrb[0].mxu0
  %v1907 = vadd.f32 0.0, %v1906
  %v1908 = vpop.f32.mrb[0].mxu0
  %1909 = vmatprep.mubr.bf16.mxu0 0
  %1910 = vmatmul.mubr.bf16.gmra.mrb[0].mxu0 %v1844
  %v1911 = vpop.f32.mrb[0].mxu0
  %v1912 = vadd.f32 0.0, %v1911
  %v1913 = vpop.f32.mrb[0].mxu0
  %v1914 = vpop.f32.mrb[0].mxu0
  %v1915 = vadd.f32 0.0, %v1914
  %v1916 = vpop.f32.mrb[0].mxu0
  %1917 = vmatprep.mubr.bf16.mxu0 0
  %1918 = vmatmul.mubr.bf16.gmra.mrb[0].mxu0 %v1847
  %v1919 = vpop.f32.mrb[0].mxu0
  %v1920 = vadd.f32 0.0, %v1919
  %v1921 = vpop.f32.mrb[0].mxu0
  %v1922 = vpop.f32.mrb[0].mxu0
  %v1923 = vadd.f32 0.0, %v1922
  %v1924 = vpop.f32.mrb[0].mxu0
  %1925 = vdwg.mxu0
  %v1926 = vsel %vm765, %v1791, -inf
  %1927 = vmax.xlane.f32.xlu0 %v1926
  %v1928 = vpop.xlane.xlu0 %1927
  %v1929 = vsel %vm765, %v1794, -inf
  %1930 = vmax.xlane.f32.xlu0 %v1929
  %v1931 = vpop.xlane.xlu0 %1930
  %v1932 = vsel %vm765, %v1799, -inf
  %1933 = vmax.xlane.f32.xlu0 %v1932
  %v1934 = vpop.xlane.xlu0 %1933
  %v1935 = vsel %vm765, %v1802, -inf
  %1936 = vmax.xlane.f32.xlu0 %v1935
  %v1937 = vpop.xlane.xlu0 %1936
  %v1938 = vsel %vm765, %v1807, -inf
  %1939 = vmax.xlane.f32.xlu0 %v1938
  %v1940 = vpop.xlane.xlu0 %1939
  %v1941 = vsel %vm765, %v1810, -inf
  %1942 = vmax.xlane.f32.xlu0 %v1941
  %v1943 = vpop.xlane.xlu0 %1942
  %v1944 = vsel %vm765, %v1815, -inf
  %1945 = vmax.xlane.f32.xlu0 %v1944
  %v1946 = vpop.xlane.xlu0 %1945
  %v1947 = vsel %vm765, %v1818, -inf
  %1948 = vmax.xlane.f32.xlu0 %v1947
  %v1949 = vpop.xlane.xlu0 %1948
  %v1950 = vsel %vm765, %v1896, -inf
  %1951 = vmax.xlane.f32.xlu0 %v1950
  %v1952 = vpop.xlane.xlu0 %1951
  %v1953 = vsel %vm765, %v1899, -inf
  %1954 = vmax.xlane.f32.xlu0 %v1953
  %v1955 = vpop.xlane.xlu0 %1954
  %v1956 = vsel %vm765, %v1904, -inf
  %1957 = vmax.xlane.f32.xlu0 %v1956
  %v1958 = vpop.xlane.xlu0 %1957
  %v1959 = vsel %vm765, %v1907, -inf
  %1960 = vmax.xlane.f32.xlu0 %v1959
  %v1961 = vpop.xlane.xlu0 %1960
  %v1962 = vsel %vm765, %v1912, -inf
  %1963 = vmax.xlane.f32.xlu0 %v1962
  %v1964 = vpop.xlane.xlu0 %1963
  %v1965 = vsel %vm765, %v1915, -inf
  %1966 = vmax.xlane.f32.xlu0 %v1965
  %v1967 = vpop.xlane.xlu0 %1966
  %v1968 = vsel %vm765, %v1920, -inf
  %1969 = vmax.xlane.f32.xlu0 %v1968
  %v1970 = vpop.xlane.xlu0 %1969
  %v1971 = vsel %vm765, %v1923, -inf
  %1972 = vmax.xlane.f32.xlu0 %v1971
  %v1973 = vpop.xlane.xlu0 %1972
  %v1974 = vsub.f32 %v1791, %v1928
  %v1975 = vsub.f32 %v1794, %v1931
  %v1976 = vsub.f32 %v1799, %v1934
  %v1977 = vsub.f32 %v1802, %v1937
  %v1978 = vsub.f32 %v1807, %v1940
  %v1979 = vsub.f32 %v1810, %v1943
  %v1980 = vsub.f32 %v1815, %v1946
  %v1981 = vsub.f32 %v1818, %v1949
  %v1982 = vsub.f32 %v1896, %v1952
  %v1983 = vsub.f32 %v1899, %v1955
  %v1984 = vsub.f32 %v1904, %v1958
  %v1985 = vsub.f32 %v1907, %v1961
  %v1986 = vsub.f32 %v1912, %v1964
  %v1987 = vsub.f32 %v1915, %v1967
  %v1988 = vsub.f32 %v1920, %v1970
  %v1989 = vsub.f32 %v1923, %v1973
  %v1990 = vmul.f32 %v1974, 1.442695
  %v1991 = vpow.pop %v1990
  %v1992 = vmul.f32 %v1975, 1.442695
  %v1993 = vpow.pop %v1992
  %v1994 = vmul.f32 %v1976, 1.442695
  %v1995 = vpow.pop %v1994
  %v1996 = vmul.f32 %v1977, 1.442695
  %v1997 = vpow.pop %v1996
  %v1998 = vmul.f32 %v1978, 1.442695
  %v1999 = vpow.pop %v1998
  %v2000 = vmul.f32 %v1979, 1.442695
  %v2001 = vpow.pop %v2000
  %v2002 = vmul.f32 %v1980, 1.442695
  %v2003 = vpow.pop %v2002
  %v2004 = vmul.f32 %v1981, 1.442695
  %v2005 = vpow.pop %v2004
  %v2006 = vmul.f32 %v1982, 1.442695
  %v2007 = vpow.pop %v2006
  %v2008 = vmul.f32 %v1983, 1.442695
  %v2009 = vpow.pop %v2008
  %v2010 = vmul.f32 %v1984, 1.442695
  %v2011 = vpow.pop %v2010
  %v2012 = vmul.f32 %v1985, 1.442695
  %v2013 = vpow.pop %v2012
  %v2014 = vmul.f32 %v1986, 1.442695
  %v2015 = vpow.pop %v2014
  %v2016 = vmul.f32 %v1987, 1.442695
  %v2017 = vpow.pop %v2016
  %v2018 = vmul.f32 %v1988, 1.442695
  %v2019 = vpow.pop %v2018
  %v2020 = vmul.f32 %v1989, 1.442695
  %v2021 = vpow.pop %v2020
  %v2022 = vsel %vm765, %v1991, 0.0
  %2023 = vadd.xlane.f32.xlu0 %v2022
  %v2024 = vpop.xlane.xlu0 %2023
  %v2025 = vsel %vm765, %v1993, 0.0
  %2026 = vadd.xlane.f32.xlu0 %v2025
  %v2027 = vpop.xlane.xlu0 %2026
  %v2028 = vsel %vm765, %v1995, 0.0
  %2029 = vadd.xlane.f32.xlu0 %v2028
  %v2030 = vpop.xlane.xlu0 %2029
  %v2031 = vsel %vm765, %v1997, 0.0
  %2032 = vadd.xlane.f32.xlu0 %v2031
  %v2033 = vpop.xlane.xlu0 %2032
  %v2034 = vsel %vm765, %v1999, 0.0
  %2035 = vadd.xlane.f32.xlu0 %v2034
  %v2036 = vpop.xlane.xlu0 %2035
  %v2037 = vsel %vm765, %v2001, 0.0
  %2038 = vadd.xlane.f32.xlu0 %v2037
  %v2039 = vpop.xlane.xlu0 %2038
  %v2040 = vsel %vm765, %v2003, 0.0
  %2041 = vadd.xlane.f32.xlu0 %v2040
  %v2042 = vpop.xlane.xlu0 %2041
  %v2043 = vsel %vm765, %v2005, 0.0
  %2044 = vadd.xlane.f32.xlu0 %v2043
  %v2045 = vpop.xlane.xlu0 %2044
  %v2046 = vsel %vm765, %v2007, 0.0
  %2047 = vadd.xlane.f32.xlu0 %v2046
  %v2048 = vpop.xlane.xlu0 %2047
  %v2049 = vsel %vm765, %v2009, 0.0
  %2050 = vadd.xlane.f32.xlu0 %v2049
  %v2051 = vpop.xlane.xlu0 %2050
  %v2052 = vsel %vm765, %v2011, 0.0
  %2053 = vadd.xlane.f32.xlu0 %v2052
  %v2054 = vpop.xlane.xlu0 %2053
  %v2055 = vsel %vm765, %v2013, 0.0
  %2056 = vadd.xlane.f32.xlu0 %v2055
  %v2057 = vpop.xlane.xlu0 %2056
  %v2058 = vsel %vm765, %v2015, 0.0
  %2059 = vadd.xlane.f32.xlu0 %v2058
  %v2060 = vpop.xlane.xlu0 %2059
  %v2061 = vsel %vm765, %v2017, 0.0
  %2062 = vadd.xlane.f32.xlu0 %v2061
  %v2063 = vpop.xlane.xlu0 %2062
  %v2064 = vsel %vm765, %v2019, 0.0
  %2065 = vadd.xlane.f32.xlu0 %v2064
  %v2066 = vpop.xlane.xlu0 %2065
  %v2067 = vsel %vm765, %v2021, 0.0
  %2068 = vadd.xlane.f32.xlu0 %v2067
  %v2069 = vpop.xlane.xlu0 %2068
  %v2070 = vrcp.pop %v2024
  %v2071 = vrcp.pop %v2027
  %v2072 = vrcp.pop %v2030
  %v2073 = vrcp.pop %v2033
  %v2074 = vrcp.pop %v2036
  %v2075 = vrcp.pop %v2039
  %v2076 = vrcp.pop %v2042
  %v2077 = vrcp.pop %v2045
  %v2078 = vrcp.pop %v2048
  %v2079 = vrcp.pop %v2051
  %v2080 = vrcp.pop %v2054
  %v2081 = vrcp.pop %v2057
  %v2082 = vrcp.pop %v2060
  %v2083 = vrcp.pop %v2063
  %v2084 = vrcp.pop %v2066
  %v2085 = vrcp.pop %v2069
  %v2086 = vmul.f32 %v1991, %v2070
  %v2087 = vmul.f32 %v1993, %v2071
  %v2088 = vmul.f32 %v1995, %v2072
  %v2089 = vmul.f32 %v1997, %v2073
  %v2090 = vmul.f32 %v1999, %v2074
  %v2091 = vmul.f32 %v2001, %v2075
  %v2092 = vmul.f32 %v2003, %v2076
  %v2093 = vmul.f32 %v2005, %v2077
  %v2094 = vmul.f32 %v2007, %v2078
  %v2095 = vmul.f32 %v2009, %v2079
  %v2096 = vmul.f32 %v2011, %v2080
  %v2097 = vmul.f32 %v2013, %v2081
  %v2098 = vmul.f32 %v2015, %v2082
  %v2099 = vmul.f32 %v2017, %v2083
  %v2100 = vmul.f32 %v2019, %v2084
  %v2101 = vmul.f32 %v2021, %v2085
  %v2102 = vpack.c.bf16 %v2087, %v2086
  %v2103 = vpack.c.bf16 %v2089, %v2088
  %v2104 = vpack.c.bf16 %v2091, %v2090
  %v2105 = vpack.c.bf16 %v2093, %v2092
  %v2106 = vpack.c.bf16 %v2095, %v2094
  %v2107 = vpack.c.bf16 %v2097, %v2096
  %v2108 = vpack.c.bf16 %v2099, %v2098
  %v2109 = vpack.c.bf16 %v2101, %v2100
  %2110 = vrot.lane.b32.xlu0 %v554, 48
  %v2111 = vpop.permute.xlu0 %2110
  %2112 = vrot.lane.b32.xlu0 %v555, 48
  %v2113 = vpop.permute.xlu0 %2112
  %2114 = vrot.lane.b32.xlu0 %v556, 48
  %v2115 = vpop.permute.xlu0 %2114
  %2116 = vrot.lane.b32.xlu0 %v557, 48
  %v2117 = vpop.permute.xlu0 %2116
  %v2123 = vsel %vm765, %v2102, 0
  %v2126 = vsel %vm765, %v2103, 0
  %v2129 = vsel %vm765, %v2104, 0
  %v2132 = vsel %vm765, %v2105, 0
  %2134 = vmatprep.subr.bf16.mxu0 0
  %2135 = vmatpush1.bf16.msra.mxu0 %v2111
  %2136 = vmatprep.subr.bf16.mxu0 0
  %2137 = vmatpush1.bf16.msra.mxu0 %v2113
  %2138 = vmatprep.subr.bf16.mxu0 0
  %2139 = vmatpush1.bf16.msra.mxu0 %v2115
  %2140 = vmatprep.subr.bf16.mxu0 0
  %2141 = vmatpush1.bf16.msra.mxu0 %v2117
  %2142 = vmatprep.subr.bf16.mxu0 0
  %2143 = vmatpush1.bf16.msra.mxu0 0
  %2144 = vmatprep.subr.bf16.mxu0 0
  %2145 = vmatpush1.bf16.msra.mxu0 0
  %2146 = vmatprep.subr.bf16.mxu0 0
  %2147 = vmatpush1.bf16.msra.mxu0 0
  %2148 = vmatprep.subr.bf16.mxu0 0
  %2149 = vmatpush1.bf16.msra.mxu0 0
  %2150 = vmatprep.subr.bf16.mxu0 0
  %2151 = vmatpush1.bf16.msra.mxu0 0
  %2152 = vmatprep.subr.bf16.mxu0 0
  %2153 = vmatpush1.bf16.msra.mxu0 0
  %2154 = vmatprep.subr.bf16.mxu0 0
  %2155 = vmatpush1.bf16.msra.mxu0 0
  %2156 = vmatprep.subr.bf16.mxu0 0
  %2157 = vmatpush1.bf16.msra.mxu0 0
  %2158 = vmatprep.subr.bf16.mxu0 0
  %2159 = vmatpush1.bf16.msra.mxu0 0
  %2160 = vmatprep.subr.bf16.mxu0 0
  %2161 = vmatpush1.bf16.msra.mxu0 0
  %2162 = vmatprep.subr.bf16.mxu0 0
  %2163 = vmatpush1.bf16.msra.mxu0 0
  %2164 = vmatprep.subr.bf16.mxu0 0
  %2165 = vmatpush1.bf16.msra.mxu0 0
  %2166 = vmatprep.mubr.bf16.mxu0 0
  %2167 = vmatmul.mubr.bf16.gmra.mrb[0].mxu0 %v2123
  %v2168 = vpop.f32.mrb[0].mxu0
  %v2169 = vadd.f32 0.0, %v2168
  %v2170 = vpop.f32.mrb[0].mxu0
  %v2171 = vpop.f32.mrb[0].mxu0
  %v2172 = vadd.f32 0.0, %v2171
  %v2173 = vpop.f32.mrb[0].mxu0
  %2174 = vmatprep.mubr.bf16.mxu0 0
  %2175 = vmatmul.mubr.bf16.gmra.mrb[0].mxu0 %v2126
  %v2176 = vpop.f32.mrb[0].mxu0
  %v2177 = vadd.f32 0.0, %v2176
  %v2178 = vpop.f32.mrb[0].mxu0
  %v2179 = vpop.f32.mrb[0].mxu0
  %v2180 = vadd.f32 0.0, %v2179
  %v2181 = vpop.f32.mrb[0].mxu0
  %2182 = vmatprep.mubr.bf16.mxu0 0
  %2183 = vmatmul.mubr.bf16.gmra.mrb[0].mxu0 %v2129
  %v2184 = vpop.f32.mrb[0].mxu0
  %v2185 = vadd.f32 0.0, %v2184
  %v2186 = vpop.f32.mrb[0].mxu0
  %v2187 = vpop.f32.mrb[0].mxu0
  %v2188 = vadd.f32 0.0, %v2187
  %v2189 = vpop.f32.mrb[0].mxu0
  %2190 = vmatprep.mubr.bf16.mxu0 0
  %2191 = vmatmul.mubr.bf16.gmra.mrb[0].mxu0 %v2132
  %v2192 = vpop.f32.mrb[0].mxu0
  %v2193 = vadd.f32 0.0, %v2192
  %v2194 = vpop.f32.mrb[0].mxu0
  %v2195 = vpop.f32.mrb[0].mxu0
  %v2196 = vadd.f32 0.0, %v2195
  %v2197 = vpop.f32.mrb[0].mxu0
  %2198 = vdwg.mxu0
  %2199 = vrot.lane.b32.xlu0 %v558, 48
  %v2200 = vpop.permute.xlu0 %2199
  %2201 = vrot.lane.b32.xlu0 %v559, 48
  %v2202 = vpop.permute.xlu0 %2201
  %2203 = vrot.lane.b32.xlu0 %v560, 48
  %v2204 = vpop.permute.xlu0 %2203
  %2205 = vrot.lane.b32.xlu0 %v561, 48
  %v2206 = vpop.permute.xlu0 %2205
  %v2212 = vsel %vm765, %v2106, 0
  %v2215 = vsel %vm765, %v2107, 0
  %v2218 = vsel %vm765, %v2108, 0
  %v2221 = vsel %vm765, %v2109, 0
  %2223 = vmatprep.subr.bf16.mxu0 0
  %2224 = vmatpush1.bf16.msra.mxu0 %v2200
  %2225 = vmatprep.subr.bf16.mxu0 0
  %2226 = vmatpush1.bf16.msra.mxu0 %v2202
  %2227 = vmatprep.subr.bf16.mxu0 0
  %2228 = vmatpush1.bf16.msra.mxu0 %v2204
  %2229 = vmatprep.subr.bf16.mxu0 0
  %2230 = vmatpush1.bf16.msra.mxu0 %v2206
  %2231 = vmatprep.subr.bf16.mxu0 0
  %2232 = vmatpush1.bf16.msra.mxu0 0
  %2233 = vmatprep.subr.bf16.mxu0 0
  %2234 = vmatpush1.bf16.msra.mxu0 0
  %2235 = vmatprep.subr.bf16.mxu0 0
  %2236 = vmatpush1.bf16.msra.mxu0 0
  %2237 = vmatprep.subr.bf16.mxu0 0
  %2238 = vmatpush1.bf16.msra.mxu0 0
  %2239 = vmatprep.subr.bf16.mxu0 0
  %2240 = vmatpush1.bf16.msra.mxu0 0
  %2241 = vmatprep.subr.bf16.mxu0 0
  %2242 = vmatpush1.bf16.msra.mxu0 0
  %2243 = vmatprep.subr.bf16.mxu0 0
  %2244 = vmatpush1.bf16.msra.mxu0 0
  %2245 = vmatprep.subr.bf16.mxu0 0
  %2246 = vmatpush1.bf16.msra.mxu0 0
  %2247 = vmatprep.subr.bf16.mxu0 0
  %2248 = vmatpush1.bf16.msra.mxu0 0
  %2249 = vmatprep.subr.bf16.mxu0 0
  %2250 = vmatpush1.bf16.msra.mxu0 0
  %2251 = vmatprep.subr.bf16.mxu0 0
  %2252 = vmatpush1.bf16.msra.mxu0 0
  %2253 = vmatprep.subr.bf16.mxu0 0
  %2254 = vmatpush1.bf16.msra.mxu0 0
  %2255 = vmatprep.mubr.bf16.mxu0 0
  %2256 = vmatmul.mubr.bf16.gmra.mrb[0].mxu0 %v2212
  %v2257 = vpop.f32.mrb[0].mxu0
  %v2258 = vadd.f32 0.0, %v2257
  %v2259 = vpop.f32.mrb[0].mxu0
  %v2260 = vpop.f32.mrb[0].mxu0
  %v2261 = vadd.f32 0.0, %v2260
  %v2262 = vpop.f32.mrb[0].mxu0
  %2263 = vmatprep.mubr.bf16.mxu0 0
  %2264 = vmatmul.mubr.bf16.gmra.mrb[0].mxu0 %v2215
  %v2265 = vpop.f32.mrb[0].mxu0
  %v2266 = vadd.f32 0.0, %v2265
  %v2267 = vpop.f32.mrb[0].mxu0
  %v2268 = vpop.f32.mrb[0].mxu0
  %v2269 = vadd.f32 0.0, %v2268
  %v2270 = vpop.f32.mrb[0].mxu0
  %2271 = vmatprep.mubr.bf16.mxu0 0
  %2272 = vmatmul.mubr.bf16.gmra.mrb[0].mxu0 %v2218
  %v2273 = vpop.f32.mrb[0].mxu0
  %v2274 = vadd.f32 0.0, %v2273
  %v2275 = vpop.f32.mrb[0].mxu0
  %v2276 = vpop.f32.mrb[0].mxu0
  %v2277 = vadd.f32 0.0, %v2276
  %v2278 = vpop.f32.mrb[0].mxu0
  %2279 = vmatprep.mubr.bf16.mxu0 0
  %2280 = vmatmul.mubr.bf16.gmra.mrb[0].mxu0 %v2221
  %v2281 = vpop.f32.mrb[0].mxu0
  %v2282 = vadd.f32 0.0, %v2281
  %v2283 = vpop.f32.mrb[0].mxu0
  %v2284 = vpop.f32.mrb[0].mxu0
  %v2285 = vadd.f32 0.0, %v2284
  %v2286 = vpop.f32.mrb[0].mxu0
  %2287 = vdwg.mxu0
  %2288 = vrot.lane.b32.xlu0 %v514, 104
  %v2289 = vpop.permute.xlu0 %2288
  %2290 = vrot.lane.b32.xlu0 %v515, 104
  %v2291 = vpop.permute.xlu0 %2290
  %2292 = vrot.lane.b32.xlu0 %v516, 104
  %v2293 = vpop.permute.xlu0 %2292
  %2294 = vrot.lane.b32.xlu0 %v517, 104
  %v2295 = vpop.permute.xlu0 %2294
  %2296 = vrot.lane.b32.xlu0 %v522, 72
  %v2297 = vpop.permute.xlu0 %2296
  %2298 = vrot.lane.b32.xlu0 %v523, 72
  %v2299 = vpop.permute.xlu0 %2298
  %2300 = vrot.lane.b32.xlu0 %v524, 72
  %v2301 = vpop.permute.xlu0 %2300
  %2302 = vrot.lane.b32.xlu0 %v525, 72
  %v2303 = vpop.permute.xlu0 %2302
  %v2305 = vsel %vm574, %v2289, 0
  %v2308 = vsel %vm574, %v2291, 0
  %v2311 = vsel %vm574, %v2293, 0
  %v2314 = vsel %vm574, %v2295, 0
  %v2317 = vsel %vm574, %v2297, 0
  %v2320 = vsel %vm574, %v2299, 0
  %v2323 = vsel %vm574, %v2301, 0
  %v2326 = vsel %vm574, %v2303, 0
  %2328 = vmatprep.subr.bf16.mxu0 0
  %2329 = vmatpush1.bf16.xpose.msra.mxu0 %v2317
  %2330 = vmatprep.subr.bf16.mxu0 0
  %2331 = vmatpush1.bf16.xpose.msra.mxu0 %v2320
  %2332 = vmatprep.subr.bf16.mxu0 0
  %2333 = vmatpush1.bf16.xpose.msra.mxu0 %v2323
  %2334 = vmatprep.subr.bf16.mxu0 0
  %2335 = vmatpush1.bf16.xpose.msra.mxu0 %v2326
  %2336 = vmatprep.subr.bf16.mxu0 0
  %2337 = vmatpush1.bf16.xpose.msra.mxu0 0
  %2338 = vmatprep.subr.bf16.mxu0 0
  %2339 = vmatpush1.bf16.xpose.msra.mxu0 0
  %2340 = vmatprep.subr.bf16.mxu0 0
  %2341 = vmatpush1.bf16.xpose.msra.mxu0 0
  %2342 = vmatprep.subr.bf16.mxu0 0
  %2343 = vmatpush1.bf16.xpose.msra.mxu0 0
  %2344 = vmatprep.subr.bf16.mxu0 0
  %2345 = vmatpush1.bf16.xpose.msra.mxu0 0
  %2346 = vmatprep.subr.bf16.mxu0 0
  %2347 = vmatpush1.bf16.xpose.msra.mxu0 0
  %2348 = vmatprep.subr.bf16.mxu0 0
  %2349 = vmatpush1.bf16.xpose.msra.mxu0 0
  %2350 = vmatprep.subr.bf16.mxu0 0
  %2351 = vmatpush1.bf16.xpose.msra.mxu0 0
  %2352 = vmatprep.subr.bf16.mxu0 0
  %2353 = vmatpush1.bf16.xpose.msra.mxu0 0
  %2354 = vmatprep.subr.bf16.mxu0 0
  %2355 = vmatpush1.bf16.xpose.msra.mxu0 0
  %2356 = vmatprep.subr.bf16.mxu0 0
  %2357 = vmatpush1.bf16.xpose.msra.mxu0 0
  %2358 = vmatprep.subr.bf16.mxu0 0
  %2359 = vmatpush1.bf16.xpose.msra.mxu0 0
  %2360 = vmatprep.mubr.bf16.mxu0 0
  %2361 = vmatmul.mubr.bf16.gmra.mrb[0].mxu0 %v2305
  %v2362 = vpop.f32.mrb[0].mxu0
  %v2363 = vadd.f32 0.0, %v2362
  %v2364 = vpop.f32.mrb[0].mxu0
  %v2365 = vpop.f32.mrb[0].mxu0
  %v2366 = vadd.f32 0.0, %v2365
  %v2367 = vpop.f32.mrb[0].mxu0
  %2368 = vmatprep.mubr.bf16.mxu0 0
  %2369 = vmatmul.mubr.bf16.gmra.mrb[0].mxu0 %v2308
  %v2370 = vpop.f32.mrb[0].mxu0
  %v2371 = vadd.f32 0.0, %v2370
  %v2372 = vpop.f32.mrb[0].mxu0
  %v2373 = vpop.f32.mrb[0].mxu0
  %v2374 = vadd.f32 0.0, %v2373
  %v2375 = vpop.f32.mrb[0].mxu0
  %2376 = vmatprep.mubr.bf16.mxu0 0
  %2377 = vmatmul.mubr.bf16.gmra.mrb[0].mxu0 %v2311
  %v2378 = vpop.f32.mrb[0].mxu0
  %v2379 = vadd.f32 0.0, %v2378
  %v2380 = vpop.f32.mrb[0].mxu0
  %v2381 = vpop.f32.mrb[0].mxu0
  %v2382 = vadd.f32 0.0, %v2381
  %v2383 = vpop.f32.mrb[0].mxu0
  %2384 = vmatprep.mubr.bf16.mxu0 0
  %2385 = vmatmul.mubr.bf16.gmra.mrb[0].mxu0 %v2314
  %v2386 = vpop.f32.mrb[0].mxu0
  %v2387 = vadd.f32 0.0, %v2386
  %v2388 = vpop.f32.mrb[0].mxu0
  %v2389 = vpop.f32.mrb[0].mxu0
  %v2390 = vadd.f32 0.0, %v2389
  %v2391 = vpop.f32.mrb[0].mxu0
  %2392 = vdwg.mxu0
  %2393 = vrot.lane.b32.xlu0 %v518, 104
  %v2394 = vpop.permute.xlu0 %2393
  %2395 = vrot.lane.b32.xlu0 %v519, 104
  %v2396 = vpop.permute.xlu0 %2395
  %2397 = vrot.lane.b32.xlu0 %v520, 104
  %v2398 = vpop.permute.xlu0 %2397
  %2399 = vrot.lane.b32.xlu0 %v521, 104
  %v2400 = vpop.permute.xlu0 %2399
  %2401 = vrot.lane.b32.xlu0 %v526, 72
  %v2402 = vpop.permute.xlu0 %2401
  %2403 = vrot.lane.b32.xlu0 %v527, 72
  %v2404 = vpop.permute.xlu0 %2403
  %2405 = vrot.lane.b32.xlu0 %v528, 72
  %v2406 = vpop.permute.xlu0 %2405
  %2407 = vrot.lane.b32.xlu0 %v529, 72
  %v2408 = vpop.permute.xlu0 %2407
  %v2410 = vsel %vm574, %v2394, 0
  %v2413 = vsel %vm574, %v2396, 0
  %v2416 = vsel %vm574, %v2398, 0
  %v2419 = vsel %vm574, %v2400, 0
  %v2422 = vsel %vm574, %v2402, 0
  %v2425 = vsel %vm574, %v2404, 0
  %v2428 = vsel %vm574, %v2406, 0
  %v2431 = vsel %vm574, %v2408, 0
  %2433 = vmatprep.subr.bf16.mxu0 0
  %2434 = vmatpush1.bf16.xpose.msra.mxu0 %v2422
  %2435 = vmatprep.subr.bf16.mxu0 0
  %2436 = vmatpush1.bf16.xpose.msra.mxu0 %v2425
  %2437 = vmatprep.subr.bf16.mxu0 0
  %2438 = vmatpush1.bf16.xpose.msra.mxu0 %v2428
  %2439 = vmatprep.subr.bf16.mxu0 0
  %2440 = vmatpush1.bf16.xpose.msra.mxu0 %v2431
  %2441 = vmatprep.subr.bf16.mxu0 0
  %2442 = vmatpush1.bf16.xpose.msra.mxu0 0
  %2443 = vmatprep.subr.bf16.mxu0 0
  %2444 = vmatpush1.bf16.xpose.msra.mxu0 0
  %2445 = vmatprep.subr.bf16.mxu0 0
  %2446 = vmatpush1.bf16.xpose.msra.mxu0 0
  %2447 = vmatprep.subr.bf16.mxu0 0
  %2448 = vmatpush1.bf16.xpose.msra.mxu0 0
  %2449 = vmatprep.subr.bf16.mxu0 0
  %2450 = vmatpush1.bf16.xpose.msra.mxu0 0
  %2451 = vmatprep.subr.bf16.mxu0 0
  %2452 = vmatpush1.bf16.xpose.msra.mxu0 0
  %2453 = vmatprep.subr.bf16.mxu0 0
  %2454 = vmatpush1.bf16.xpose.msra.mxu0 0
  %2455 = vmatprep.subr.bf16.mxu0 0
  %2456 = vmatpush1.bf16.xpose.msra.mxu0 0
  %2457 = vmatprep.subr.bf16.mxu0 0
  %2458 = vmatpush1.bf16.xpose.msra.mxu0 0
  %2459 = vmatprep.subr.bf16.mxu0 0
  %2460 = vmatpush1.bf16.xpose.msra.mxu0 0
  %2461 = vmatprep.subr.bf16.mxu0 0
  %2462 = vmatpush1.bf16.xpose.msra.mxu0 0
  %2463 = vmatprep.subr.bf16.mxu0 0
  %2464 = vmatpush1.bf16.xpose.msra.mxu0 0
  %2465 = vmatprep.mubr.bf16.mxu0 0
  %2466 = vmatmul.mubr.bf16.gmra.mrb[0].mxu0 %v2410
  %v2467 = vpop.f32.mrb[0].mxu0
  %v2468 = vadd.f32 0.0, %v2467
  %v2469 = vpop.f32.mrb[0].mxu0
  %v2470 = vpop.f32.mrb[0].mxu0
  %v2471 = vadd.f32 0.0, %v2470
  %v2472 = vpop.f32.mrb[0].mxu0
  %2473 = vmatprep.mubr.bf16.mxu0 0
  %2474 = vmatmul.mubr.bf16.gmra.mrb[0].mxu0 %v2413
  %v2475 = vpop.f32.mrb[0].mxu0
  %v2476 = vadd.f32 0.0, %v2475
  %v2477 = vpop.f32.mrb[0].mxu0
  %v2478 = vpop.f32.mrb[0].mxu0
  %v2479 = vadd.f32 0.0, %v2478
  %v2480 = vpop.f32.mrb[0].mxu0
  %2481 = vmatprep.mubr.bf16.mxu0 0
  %2482 = vmatmul.mubr.bf16.gmra.mrb[0].mxu0 %v2416
  %v2483 = vpop.f32.mrb[0].mxu0
  %v2484 = vadd.f32 0.0, %v2483
  %v2485 = vpop.f32.mrb[0].mxu0
  %v2486 = vpop.f32.mrb[0].mxu0
  %v2487 = vadd.f32 0.0, %v2486
  %v2488 = vpop.f32.mrb[0].mxu0
  %2489 = vmatprep.mubr.bf16.mxu0 0
  %2490 = vmatmul.mubr.bf16.gmra.mrb[0].mxu0 %v2419
  %v2491 = vpop.f32.mrb[0].mxu0
  %v2492 = vadd.f32 0.0, %v2491
  %v2493 = vpop.f32.mrb[0].mxu0
  %v2494 = vpop.f32.mrb[0].mxu0
  %v2495 = vadd.f32 0.0, %v2494
  %v2496 = vpop.f32.mrb[0].mxu0
  %2497 = vdwg.mxu0
  %v2498 = vsel %vm765, %v2363, -inf
  %2499 = vmax.xlane.f32.xlu0 %v2498
  %v2500 = vpop.xlane.xlu0 %2499
  %v2501 = vsel %vm765, %v2366, -inf
  %2502 = vmax.xlane.f32.xlu0 %v2501
  %v2503 = vpop.xlane.xlu0 %2502
  %v2504 = vsel %vm765, %v2371, -inf
  %2505 = vmax.xlane.f32.xlu0 %v2504
  %v2506 = vpop.xlane.xlu0 %2505
  %v2507 = vsel %vm765, %v2374, -inf
  %2508 = vmax.xlane.f32.xlu0 %v2507
  %v2509 = vpop.xlane.xlu0 %2508
  %v2510 = vsel %vm765, %v2379, -inf
  %2511 = vmax.xlane.f32.xlu0 %v2510
  %v2512 = vpop.xlane.xlu0 %2511
  %v2513 = vsel %vm765, %v2382, -inf
  %2514 = vmax.xlane.f32.xlu0 %v2513
  %v2515 = vpop.xlane.xlu0 %2514
  %v2516 = vsel %vm765, %v2387, -inf
  %2517 = vmax.xlane.f32.xlu0 %v2516
  %v2518 = vpop.xlane.xlu0 %2517
  %v2519 = vsel %vm765, %v2390, -inf
  %2520 = vmax.xlane.f32.xlu0 %v2519
  %v2521 = vpop.xlane.xlu0 %2520
  %v2522 = vsel %vm765, %v2468, -inf
  %2523 = vmax.xlane.f32.xlu0 %v2522
  %v2524 = vpop.xlane.xlu0 %2523
  %v2525 = vsel %vm765, %v2471, -inf
  %2526 = vmax.xlane.f32.xlu0 %v2525
  %v2527 = vpop.xlane.xlu0 %2526
  %v2528 = vsel %vm765, %v2476, -inf
  %2529 = vmax.xlane.f32.xlu0 %v2528
  %v2530 = vpop.xlane.xlu0 %2529
  %v2531 = vsel %vm765, %v2479, -inf
  %2532 = vmax.xlane.f32.xlu0 %v2531
  %v2533 = vpop.xlane.xlu0 %2532
  %v2534 = vsel %vm765, %v2484, -inf
  %2535 = vmax.xlane.f32.xlu0 %v2534
  %v2536 = vpop.xlane.xlu0 %2535
  %v2537 = vsel %vm765, %v2487, -inf
  %2538 = vmax.xlane.f32.xlu0 %v2537
  %v2539 = vpop.xlane.xlu0 %2538
  %v2540 = vsel %vm765, %v2492, -inf
  %2541 = vmax.xlane.f32.xlu0 %v2540
  %v2542 = vpop.xlane.xlu0 %2541
  %v2543 = vsel %vm765, %v2495, -inf
  %2544 = vmax.xlane.f32.xlu0 %v2543
  %v2545 = vpop.xlane.xlu0 %2544
  %v2546 = vsub.f32 %v2363, %v2500
  %v2547 = vsub.f32 %v2366, %v2503
  %v2548 = vsub.f32 %v2371, %v2506
  %v2549 = vsub.f32 %v2374, %v2509
  %v2550 = vsub.f32 %v2379, %v2512
  %v2551 = vsub.f32 %v2382, %v2515
  %v2552 = vsub.f32 %v2387, %v2518
  %v2553 = vsub.f32 %v2390, %v2521
  %v2554 = vsub.f32 %v2468, %v2524
  %v2555 = vsub.f32 %v2471, %v2527
  %v2556 = vsub.f32 %v2476, %v2530
  %v2557 = vsub.f32 %v2479, %v2533
  %v2558 = vsub.f32 %v2484, %v2536
  %v2559 = vsub.f32 %v2487, %v2539
  %v2560 = vsub.f32 %v2492, %v2542
  %v2561 = vsub.f32 %v2495, %v2545
  %v2562 = vmul.f32 %v2546, 1.442695
  %v2563 = vpow.pop %v2562
  %v2564 = vmul.f32 %v2547, 1.442695
  %v2565 = vpow.pop %v2564
  %v2566 = vmul.f32 %v2548, 1.442695
  %v2567 = vpow.pop %v2566
  %v2568 = vmul.f32 %v2549, 1.442695
  %v2569 = vpow.pop %v2568
  %v2570 = vmul.f32 %v2550, 1.442695
  %v2571 = vpow.pop %v2570
  %v2572 = vmul.f32 %v2551, 1.442695
  %v2573 = vpow.pop %v2572
  %v2574 = vmul.f32 %v2552, 1.442695
  %v2575 = vpow.pop %v2574
  %v2576 = vmul.f32 %v2553, 1.442695
  %v2577 = vpow.pop %v2576
  %v2578 = vmul.f32 %v2554, 1.442695
  %v2579 = vpow.pop %v2578
  %v2580 = vmul.f32 %v2555, 1.442695
  %v2581 = vpow.pop %v2580
  %v2582 = vmul.f32 %v2556, 1.442695
  %v2583 = vpow.pop %v2582
  %v2584 = vmul.f32 %v2557, 1.442695
  %v2585 = vpow.pop %v2584
  %v2586 = vmul.f32 %v2558, 1.442695
  %v2587 = vpow.pop %v2586
  %v2588 = vmul.f32 %v2559, 1.442695
  %v2589 = vpow.pop %v2588
  %v2590 = vmul.f32 %v2560, 1.442695
  %v2591 = vpow.pop %v2590
  %v2592 = vmul.f32 %v2561, 1.442695
  %v2593 = vpow.pop %v2592
  %v2594 = vsel %vm765, %v2563, 0.0
  %2595 = vadd.xlane.f32.xlu0 %v2594
  %v2596 = vpop.xlane.xlu0 %2595
  %v2597 = vsel %vm765, %v2565, 0.0
  %2598 = vadd.xlane.f32.xlu0 %v2597
  %v2599 = vpop.xlane.xlu0 %2598
  %v2600 = vsel %vm765, %v2567, 0.0
  %2601 = vadd.xlane.f32.xlu0 %v2600
  %v2602 = vpop.xlane.xlu0 %2601
  %v2603 = vsel %vm765, %v2569, 0.0
  %2604 = vadd.xlane.f32.xlu0 %v2603
  %v2605 = vpop.xlane.xlu0 %2604
  %v2606 = vsel %vm765, %v2571, 0.0
  %2607 = vadd.xlane.f32.xlu0 %v2606
  %v2608 = vpop.xlane.xlu0 %2607
  %v2609 = vsel %vm765, %v2573, 0.0
  %2610 = vadd.xlane.f32.xlu0 %v2609
  %v2611 = vpop.xlane.xlu0 %2610
  %v2612 = vsel %vm765, %v2575, 0.0
  %2613 = vadd.xlane.f32.xlu0 %v2612
  %v2614 = vpop.xlane.xlu0 %2613
  %v2615 = vsel %vm765, %v2577, 0.0
  %2616 = vadd.xlane.f32.xlu0 %v2615
  %v2617 = vpop.xlane.xlu0 %2616
  %v2618 = vsel %vm765, %v2579, 0.0
  %2619 = vadd.xlane.f32.xlu0 %v2618
  %v2620 = vpop.xlane.xlu0 %2619
  %v2621 = vsel %vm765, %v2581, 0.0
  %2622 = vadd.xlane.f32.xlu0 %v2621
  %v2623 = vpop.xlane.xlu0 %2622
  %v2624 = vsel %vm765, %v2583, 0.0
  %2625 = vadd.xlane.f32.xlu0 %v2624
  %v2626 = vpop.xlane.xlu0 %2625
  %v2627 = vsel %vm765, %v2585, 0.0
  %2628 = vadd.xlane.f32.xlu0 %v2627
  %v2629 = vpop.xlane.xlu0 %2628
  %v2630 = vsel %vm765, %v2587, 0.0
  %2631 = vadd.xlane.f32.xlu0 %v2630
  %v2632 = vpop.xlane.xlu0 %2631
  %v2633 = vsel %vm765, %v2589, 0.0
  %2634 = vadd.xlane.f32.xlu0 %v2633
  %v2635 = vpop.xlane.xlu0 %2634
  %v2636 = vsel %vm765, %v2591, 0.0
  %2637 = vadd.xlane.f32.xlu0 %v2636
  %v2638 = vpop.xlane.xlu0 %2637
  %v2639 = vsel %vm765, %v2593, 0.0
  %2640 = vadd.xlane.f32.xlu0 %v2639
  %v2641 = vpop.xlane.xlu0 %2640
  %v2642 = vrcp.pop %v2596
  %v2643 = vrcp.pop %v2599
  %v2644 = vrcp.pop %v2602
  %v2645 = vrcp.pop %v2605
  %v2646 = vrcp.pop %v2608
  %v2647 = vrcp.pop %v2611
  %v2648 = vrcp.pop %v2614
  %v2649 = vrcp.pop %v2617
  %v2650 = vrcp.pop %v2620
  %v2651 = vrcp.pop %v2623
  %v2652 = vrcp.pop %v2626
  %v2653 = vrcp.pop %v2629
  %v2654 = vrcp.pop %v2632
  %v2655 = vrcp.pop %v2635
  %v2656 = vrcp.pop %v2638
  %v2657 = vrcp.pop %v2641
  %v2658 = vmul.f32 %v2563, %v2642
  %v2659 = vmul.f32 %v2565, %v2643
  %v2660 = vmul.f32 %v2567, %v2644
  %v2661 = vmul.f32 %v2569, %v2645
  %v2662 = vmul.f32 %v2571, %v2646
  %v2663 = vmul.f32 %v2573, %v2647
  %v2664 = vmul.f32 %v2575, %v2648
  %v2665 = vmul.f32 %v2577, %v2649
  %v2666 = vmul.f32 %v2579, %v2650
  %v2667 = vmul.f32 %v2581, %v2651
  %v2668 = vmul.f32 %v2583, %v2652
  %v2669 = vmul.f32 %v2585, %v2653
  %v2670 = vmul.f32 %v2587, %v2654
  %v2671 = vmul.f32 %v2589, %v2655
  %v2672 = vmul.f32 %v2591, %v2656
  %v2673 = vmul.f32 %v2593, %v2657
  %v2674 = vpack.c.bf16 %v2659, %v2658
  %v2675 = vpack.c.bf16 %v2661, %v2660
  %v2676 = vpack.c.bf16 %v2663, %v2662
  %v2677 = vpack.c.bf16 %v2665, %v2664
  %v2678 = vpack.c.bf16 %v2667, %v2666
  %v2679 = vpack.c.bf16 %v2669, %v2668
  %v2680 = vpack.c.bf16 %v2671, %v2670
  %v2681 = vpack.c.bf16 %v2673, %v2672
  %2682 = vrot.lane.b32.xlu0 %v554, 40
  %v2683 = vpop.permute.xlu0 %2682
  %2684 = vrot.lane.b32.xlu0 %v555, 40
  %v2685 = vpop.permute.xlu0 %2684
  %2686 = vrot.lane.b32.xlu0 %v556, 40
  %v2687 = vpop.permute.xlu0 %2686
  %2688 = vrot.lane.b32.xlu0 %v557, 40
  %v2689 = vpop.permute.xlu0 %2688
  %v2695 = vsel %vm765, %v2674, 0
  %v2698 = vsel %vm765, %v2675, 0
  %v2701 = vsel %vm765, %v2676, 0
  %v2704 = vsel %vm765, %v2677, 0
  %2706 = vmatprep.subr.bf16.mxu0 0
  %2707 = vmatpush1.bf16.msra.mxu0 %v2683
  %2708 = vmatprep.subr.bf16.mxu0 0
  %2709 = vmatpush1.bf16.msra.mxu0 %v2685
  %2710 = vmatprep.subr.bf16.mxu0 0
  %2711 = vmatpush1.bf16.msra.mxu0 %v2687
  %2712 = vmatprep.subr.bf16.mxu0 0
  %2713 = vmatpush1.bf16.msra.mxu0 %v2689
  %2714 = vmatprep.subr.bf16.mxu0 0
  %2715 = vmatpush1.bf16.msra.mxu0 0
  %2716 = vmatprep.subr.bf16.mxu0 0
  %2717 = vmatpush1.bf16.msra.mxu0 0
  %2718 = vmatprep.subr.bf16.mxu0 0
  %2719 = vmatpush1.bf16.msra.mxu0 0
  %2720 = vmatprep.subr.bf16.mxu0 0
  %2721 = vmatpush1.bf16.msra.mxu0 0
  %2722 = vmatprep.subr.bf16.mxu0 0
  %2723 = vmatpush1.bf16.msra.mxu0 0
  %2724 = vmatprep.subr.bf16.mxu0 0
  %2725 = vmatpush1.bf16.msra.mxu0 0
  %2726 = vmatprep.subr.bf16.mxu0 0
  %2727 = vmatpush1.bf16.msra.mxu0 0
  %2728 = vmatprep.subr.bf16.mxu0 0
  %2729 = vmatpush1.bf16.msra.mxu0 0
  %2730 = vmatprep.subr.bf16.mxu0 0
  %2731 = vmatpush1.bf16.msra.mxu0 0
  %2732 = vmatprep.subr.bf16.mxu0 0
  %2733 = vmatpush1.bf16.msra.mxu0 0
  %2734 = vmatprep.subr.bf16.mxu0 0
  %2735 = vmatpush1.bf16.msra.mxu0 0
  %2736 = vmatprep.subr.bf16.mxu0 0
  %2737 = vmatpush1.bf16.msra.mxu0 0
  %2738 = vmatprep.mubr.bf16.mxu0 0
  %2739 = vmatmul.mubr.bf16.gmra.mrb[0].mxu0 %v2695
  %v2740 = vpop.f32.mrb[0].mxu0
  %v2741 = vadd.f32 0.0, %v2740
  %v2742 = vpop.f32.mrb[0].mxu0
  %v2743 = vpop.f32.mrb[0].mxu0
  %v2744 = vadd.f32 0.0, %v2743
  %v2745 = vpop.f32.mrb[0].mxu0
  %2746 = vmatprep.mubr.bf16.mxu0 0
  %2747 = vmatmul.mubr.bf16.gmra.mrb[0].mxu0 %v2698
  %v2748 = vpop.f32.mrb[0].mxu0
  %v2749 = vadd.f32 0.0, %v2748
  %v2750 = vpop.f32.mrb[0].mxu0
  %v2751 = vpop.f32.mrb[0].mxu0
  %v2752 = vadd.f32 0.0, %v2751
  %v2753 = vpop.f32.mrb[0].mxu0
  %2754 = vmatprep.mubr.bf16.mxu0 0
  %2755 = vmatmul.mubr.bf16.gmra.mrb[0].mxu0 %v2701
  %v2756 = vpop.f32.mrb[0].mxu0
  %v2757 = vadd.f32 0.0, %v2756
  %v2758 = vpop.f32.mrb[0].mxu0
  %v2759 = vpop.f32.mrb[0].mxu0
  %v2760 = vadd.f32 0.0, %v2759
  %v2761 = vpop.f32.mrb[0].mxu0
  %2762 = vmatprep.mubr.bf16.mxu0 0
  %2763 = vmatmul.mubr.bf16.gmra.mrb[0].mxu0 %v2704
  %v2764 = vpop.f32.mrb[0].mxu0
  %v2765 = vadd.f32 0.0, %v2764
  %v2766 = vpop.f32.mrb[0].mxu0
  %v2767 = vpop.f32.mrb[0].mxu0
  %v2768 = vadd.f32 0.0, %v2767
  %v2769 = vpop.f32.mrb[0].mxu0
  %2770 = vdwg.mxu0
  %2771 = vrot.lane.b32.xlu0 %v558, 40
  %v2772 = vpop.permute.xlu0 %2771
  %2773 = vrot.lane.b32.xlu0 %v559, 40
  %v2774 = vpop.permute.xlu0 %2773
  %2775 = vrot.lane.b32.xlu0 %v560, 40
  %v2776 = vpop.permute.xlu0 %2775
  %2777 = vrot.lane.b32.xlu0 %v561, 40
  %v2778 = vpop.permute.xlu0 %2777
  %v2784 = vsel %vm765, %v2678, 0
  %v2787 = vsel %vm765, %v2679, 0
  %v2790 = vsel %vm765, %v2680, 0
  %v2793 = vsel %vm765, %v2681, 0
  %2795 = vmatprep.subr.bf16.mxu0 0
  %2796 = vmatpush1.bf16.msra.mxu0 %v2772
  %2797 = vmatprep.subr.bf16.mxu0 0
  %2798 = vmatpush1.bf16.msra.mxu0 %v2774
  %2799 = vmatprep.subr.bf16.mxu0 0
  %2800 = vmatpush1.bf16.msra.mxu0 %v2776
  %2801 = vmatprep.subr.bf16.mxu0 0
  %2802 = vmatpush1.bf16.msra.mxu0 %v2778
  %2803 = vmatprep.subr.bf16.mxu0 0
  %2804 = vmatpush1.bf16.msra.mxu0 0
  %2805 = vmatprep.subr.bf16.mxu0 0
  %2806 = vmatpush1.bf16.msra.mxu0 0
  %2807 = vmatprep.subr.bf16.mxu0 0
  %2808 = vmatpush1.bf16.msra.mxu0 0
  %2809 = vmatprep.subr.bf16.mxu0 0
  %2810 = vmatpush1.bf16.msra.mxu0 0
  %2811 = vmatprep.subr.bf16.mxu0 0
  %2812 = vmatpush1.bf16.msra.mxu0 0
  %2813 = vmatprep.subr.bf16.mxu0 0
  %2814 = vmatpush1.bf16.msra.mxu0 0
  %2815 = vmatprep.subr.bf16.mxu0 0
  %2816 = vmatpush1.bf16.msra.mxu0 0
  %2817 = vmatprep.subr.bf16.mxu0 0
  %2818 = vmatpush1.bf16.msra.mxu0 0
  %2819 = vmatprep.subr.bf16.mxu0 0
  %2820 = vmatpush1.bf16.msra.mxu0 0
  %2821 = vmatprep.subr.bf16.mxu0 0
  %2822 = vmatpush1.bf16.msra.mxu0 0
  %2823 = vmatprep.subr.bf16.mxu0 0
  %2824 = vmatpush1.bf16.msra.mxu0 0
  %2825 = vmatprep.subr.bf16.mxu0 0
  %2826 = vmatpush1.bf16.msra.mxu0 0
  %2827 = vmatprep.mubr.bf16.mxu0 0
  %2828 = vmatmul.mubr.bf16.gmra.mrb[0].mxu0 %v2784
  %v2829 = vpop.f32.mrb[0].mxu0
  %v2830 = vadd.f32 0.0, %v2829
  %v2831 = vpop.f32.mrb[0].mxu0
  %v2832 = vpop.f32.mrb[0].mxu0
  %v2833 = vadd.f32 0.0, %v2832
  %v2834 = vpop.f32.mrb[0].mxu0
  %2835 = vmatprep.mubr.bf16.mxu0 0
  %2836 = vmatmul.mubr.bf16.gmra.mrb[0].mxu0 %v2787
  %v2837 = vpop.f32.mrb[0].mxu0
  %v2838 = vadd.f32 0.0, %v2837
  %v2839 = vpop.f32.mrb[0].mxu0
  %v2840 = vpop.f32.mrb[0].mxu0
  %v2841 = vadd.f32 0.0, %v2840
  %v2842 = vpop.f32.mrb[0].mxu0
  %2843 = vmatprep.mubr.bf16.mxu0 0
  %2844 = vmatmul.mubr.bf16.gmra.mrb[0].mxu0 %v2790
  %v2845 = vpop.f32.mrb[0].mxu0
  %v2846 = vadd.f32 0.0, %v2845
  %v2847 = vpop.f32.mrb[0].mxu0
  %v2848 = vpop.f32.mrb[0].mxu0
  %v2849 = vadd.f32 0.0, %v2848
  %v2850 = vpop.f32.mrb[0].mxu0
  %2851 = vmatprep.mubr.bf16.mxu0 0
  %2852 = vmatmul.mubr.bf16.gmra.mrb[0].mxu0 %v2793
  %v2853 = vpop.f32.mrb[0].mxu0
  %v2854 = vadd.f32 0.0, %v2853
  %v2855 = vpop.f32.mrb[0].mxu0
  %v2856 = vpop.f32.mrb[0].mxu0
  %v2857 = vadd.f32 0.0, %v2856
  %v2858 = vpop.f32.mrb[0].mxu0
  %2859 = vdwg.mxu0
  %2876 = vrot.lane.b32.xlu0 %v1597, 8
  %v2877 = vpop.permute.xlu0 %2876
  %2878 = vrot.lane.b32.xlu0 %v1600, 8
  %v2879 = vpop.permute.xlu0 %2878
  %2880 = vrot.lane.b32.xlu0 %v1605, 8
  %v2881 = vpop.permute.xlu0 %2880
  %2882 = vrot.lane.b32.xlu0 %v1608, 8
  %v2883 = vpop.permute.xlu0 %2882
  %2884 = vrot.lane.b32.xlu0 %v1613, 8
  %v2885 = vpop.permute.xlu0 %2884
  %2886 = vrot.lane.b32.xlu0 %v1616, 8
  %v2887 = vpop.permute.xlu0 %2886
  %2888 = vrot.lane.b32.xlu0 %v1621, 8
  %v2889 = vpop.permute.xlu0 %2888
  %2890 = vrot.lane.b32.xlu0 %v1624, 8
  %v2891 = vpop.permute.xlu0 %2890
  %2892 = vrot.lane.b32.xlu0 %v1686, 8
  %v2893 = vpop.permute.xlu0 %2892
  %2894 = vrot.lane.b32.xlu0 %v1689, 8
  %v2895 = vpop.permute.xlu0 %2894
  %2896 = vrot.lane.b32.xlu0 %v1694, 8
  %v2897 = vpop.permute.xlu0 %2896
  %2898 = vrot.lane.b32.xlu0 %v1697, 8
  %v2899 = vpop.permute.xlu0 %2898
  %2900 = vrot.lane.b32.xlu0 %v1702, 8
  %v2901 = vpop.permute.xlu0 %2900
  %2902 = vrot.lane.b32.xlu0 %v1705, 8
  %v2903 = vpop.permute.xlu0 %2902
  %2904 = vrot.lane.b32.xlu0 %v1710, 8
  %v2905 = vpop.permute.xlu0 %2904
  %2906 = vrot.lane.b32.xlu0 %v1713, 8
  %v2907 = vpop.permute.xlu0 %2906
  %2940 = vrot.lane.b32.xlu0 %v2169, 16
  %v2941 = vpop.permute.xlu0 %2940
  %2942 = vrot.lane.b32.xlu0 %v2172, 16
  %v2943 = vpop.permute.xlu0 %2942
  %2944 = vrot.lane.b32.xlu0 %v2177, 16
  %v2945 = vpop.permute.xlu0 %2944
  %2946 = vrot.lane.b32.xlu0 %v2180, 16
  %v2947 = vpop.permute.xlu0 %2946
  %2948 = vrot.lane.b32.xlu0 %v2185, 16
  %v2949 = vpop.permute.xlu0 %2948
  %2950 = vrot.lane.b32.xlu0 %v2188, 16
  %v2951 = vpop.permute.xlu0 %2950
  %2952 = vrot.lane.b32.xlu0 %v2193, 16
  %v2953 = vpop.permute.xlu0 %2952
  %2954 = vrot.lane.b32.xlu0 %v2196, 16
  %v2955 = vpop.permute.xlu0 %2954
  %2956 = vrot.lane.b32.xlu0 %v2258, 16
  %v2957 = vpop.permute.xlu0 %2956
  %2958 = vrot.lane.b32.xlu0 %v2261, 16
  %v2959 = vpop.permute.xlu0 %2958
  %2960 = vrot.lane.b32.xlu0 %v2266, 16
  %v2961 = vpop.permute.xlu0 %2960
  %2962 = vrot.lane.b32.xlu0 %v2269, 16
  %v2963 = vpop.permute.xlu0 %2962
  %2964 = vrot.lane.b32.xlu0 %v2274, 16
  %v2965 = vpop.permute.xlu0 %2964
  %2966 = vrot.lane.b32.xlu0 %v2277, 16
  %v2967 = vpop.permute.xlu0 %2966
  %2968 = vrot.lane.b32.xlu0 %v2282, 16
  %v2969 = vpop.permute.xlu0 %2968
  %2970 = vrot.lane.b32.xlu0 %v2285, 16
  %v2971 = vpop.permute.xlu0 %2970
  %3004 = vrot.lane.b32.xlu0 %v2741, 24
  %v3005 = vpop.permute.xlu0 %3004
  %3006 = vrot.lane.b32.xlu0 %v2744, 24
  %v3007 = vpop.permute.xlu0 %3006
  %3008 = vrot.lane.b32.xlu0 %v2749, 24
  %v3009 = vpop.permute.xlu0 %3008
  %3010 = vrot.lane.b32.xlu0 %v2752, 24
  %v3011 = vpop.permute.xlu0 %3010
  %3012 = vrot.lane.b32.xlu0 %v2757, 24
  %v3013 = vpop.permute.xlu0 %3012
  %3014 = vrot.lane.b32.xlu0 %v2760, 24
  %v3015 = vpop.permute.xlu0 %3014
  %3016 = vrot.lane.b32.xlu0 %v2765, 24
  %v3017 = vpop.permute.xlu0 %3016
  %3018 = vrot.lane.b32.xlu0 %v2768, 24
  %v3019 = vpop.permute.xlu0 %3018
  %3020 = vrot.lane.b32.xlu0 %v2830, 24
  %v3021 = vpop.permute.xlu0 %3020
  %3022 = vrot.lane.b32.xlu0 %v2833, 24
  %v3023 = vpop.permute.xlu0 %3022
  %3024 = vrot.lane.b32.xlu0 %v2838, 24
  %v3025 = vpop.permute.xlu0 %3024
  %3026 = vrot.lane.b32.xlu0 %v2841, 24
  %v3027 = vpop.permute.xlu0 %3026
  %3028 = vrot.lane.b32.xlu0 %v2846, 24
  %v3029 = vpop.permute.xlu0 %3028
  %3030 = vrot.lane.b32.xlu0 %v2849, 24
  %v3031 = vpop.permute.xlu0 %3030
  %3032 = vrot.lane.b32.xlu0 %v2854, 24
  %v3033 = vpop.permute.xlu0 %3032
  %3034 = vrot.lane.b32.xlu0 %v2857, 24
  %v3035 = vpop.permute.xlu0 %3034
  %v3052 = vsel %vm574, %v1013, %v2877
  %v3053 = vsel %vm574, %v1016, %v2879
  %v3054 = vsel %vm574, %v1021, %v2881
  %v3055 = vsel %vm574, %v1024, %v2883
  %v3056 = vsel %vm574, %v1029, %v2885
  %v3057 = vsel %vm574, %v1032, %v2887
  %v3058 = vsel %vm574, %v1037, %v2889
  %v3059 = vsel %vm574, %v1040, %v2891
  %v3060 = vsel %vm574, %v1106, %v2893
  %v3061 = vsel %vm574, %v1109, %v2895
  %v3062 = vsel %vm574, %v1114, %v2897
  %v3063 = vsel %vm574, %v1117, %v2899
  %v3064 = vsel %vm574, %v1122, %v2901
  %v3065 = vsel %vm574, %v1125, %v2903
  %v3066 = vsel %vm574, %v1130, %v2905
  %v3067 = vsel %vm574, %v1133, %v2907
  %vm3068 = vcmask 130048
  %v3069 = vsel %vm3068, %v3052, %v2941
  %v3070 = vsel %vm3068, %v3053, %v2943
  %v3071 = vsel %vm3068, %v3054, %v2945
  %v3072 = vsel %vm3068, %v3055, %v2947
  %v3073 = vsel %vm3068, %v3056, %v2949
  %v3074 = vsel %vm3068, %v3057, %v2951
  %v3075 = vsel %vm3068, %v3058, %v2953
  %v3076 = vsel %vm3068, %v3059, %v2955
  %v3077 = vsel %vm3068, %v3060, %v2957
  %v3078 = vsel %vm3068, %v3061, %v2959
  %v3079 = vsel %vm3068, %v3062, %v2961
  %v3080 = vsel %vm3068, %v3063, %v2963
  %v3081 = vsel %vm3068, %v3064, %v2965
  %v3082 = vsel %vm3068, %v3065, %v2967
  %v3083 = vsel %vm3068, %v3066, %v2969
  %v3084 = vsel %vm3068, %v3067, %v2971
  %vm3085 = vcmask 195584
  %v3086 = vsel %vm3085, %v3069, %v3005
  %v3087 = vsel %vm3085, %v3070, %v3007
  %v3088 = vsel %vm3085, %v3071, %v3009
  %v3089 = vsel %vm3085, %v3072, %v3011
  %v3090 = vsel %vm3085, %v3073, %v3013
  %v3091 = vsel %vm3085, %v3074, %v3015
  %v3092 = vsel %vm3085, %v3075, %v3017
  %v3093 = vsel %vm3085, %v3076, %v3019
  %v3094 = vsel %vm3085, %v3077, %v3021
  %v3095 = vsel %vm3085, %v3078, %v3023
  %v3096 = vsel %vm3085, %v3079, %v3025
  %v3097 = vsel %vm3085, %v3080, %v3027
  %v3098 = vsel %vm3085, %v3081, %v3029
  %v3099 = vsel %vm3085, %v3082, %v3031
  %v3100 = vsel %vm3085, %v3083, %v3033
  %v3101 = vsel %vm3085, %v3084, %v3035
  %v3102 = vpack.c.bf16 %v3087, %v3086
  %v3103 = vpack.c.bf16 %v3089, %v3088
  %v3104 = vpack.c.bf16 %v3091, %v3090
  %v3105 = vpack.c.bf16 %v3093, %v3092
  %v3106 = vpack.c.bf16 %v3095, %v3094
  %v3107 = vpack.c.bf16 %v3097, %v3096
  %v3108 = vpack.c.bf16 %v3099, %v3098
  %v3109 = vpack.c.bf16 %v3101, %v3100
  %v3110 = vld [vmem:[%s3] sm:$0xf]
  %v3111 = vld [vmem:[%s3 + $0x4] sm:$0xf]
  %v3112 = vld [vmem:[%s3 + $0x8] sm:$0xf]
  %v3113 = vld [vmem:[%s3 + $0xc] sm:$0xf]
  %v3114 = vlaneseq
  %v3115 = vshrl.u32 %v3114, 7
  %v3116 = vsub.s32 6, %v3115
  %v3117 = vrot.slane %v97, %v3116
  %v3122 = vunpack.c.l.b16 %v3110
  %v3123 = vunpack.c.l.b16 %v3111
  %v3124 = vunpack.c.l.b16 %v3112
  %v3125 = vunpack.c.l.b16 %v3113
  %v3126 = vpack.c.b16 %v3123, %v3122
  %v3127 = vpack.c.b16 %v3125, %v3124
  %v3131 = vsel %vm99, %v3102, 0
  %v3134 = vsel %vm99, %v3103, 0
  %v3137 = vsel %vm99, %v3104, 0
  %v3140 = vsel %vm99, %v3105, 0
  %v3143 = vsel %vm99, %v3106, 0
  %v3146 = vsel %vm99, %v3107, 0
  %v3149 = vsel %vm99, %v3108, 0
  %v3152 = vsel %vm99, %v3109, 0
  %3154 = vmatprep.subr.bf16.mxu0 0
  %3155 = vmatpush1.bf16.msra.mxu0 %v3126
  %3156 = vmatprep.subr.bf16.mxu0 0
  %3157 = vmatpush1.bf16.msra.mxu0 %v3127
  %3158 = vmatprep.subr.bf16.mxu0 0
  %3159 = vmatpush1.bf16.msra.mxu0 0
  %3160 = vmatprep.subr.bf16.mxu0 0
  %3161 = vmatpush1.bf16.msra.mxu0 0
  %3162 = vmatprep.subr.bf16.mxu0 0
  %3163 = vmatpush1.bf16.msra.mxu0 0
  %3164 = vmatprep.subr.bf16.mxu0 0
  %3165 = vmatpush1.bf16.msra.mxu0 0
  %3166 = vmatprep.subr.bf16.mxu0 0
  %3167 = vmatpush1.bf16.msra.mxu0 0
  %3168 = vmatprep.subr.bf16.mxu0 0
  %3169 = vmatpush1.bf16.msra.mxu0 0
  %3170 = vmatprep.subr.bf16.mxu0 0
  %3171 = vmatpush1.bf16.msra.mxu0 0
  %3172 = vmatprep.subr.bf16.mxu0 0
  %3173 = vmatpush1.bf16.msra.mxu0 0
  %3174 = vmatprep.subr.bf16.mxu0 0
  %3175 = vmatpush1.bf16.msra.mxu0 0
  %3176 = vmatprep.subr.bf16.mxu0 0
  %3177 = vmatpush1.bf16.msra.mxu0 0
  %3178 = vmatprep.subr.bf16.mxu0 0
  %3179 = vmatpush1.bf16.msra.mxu0 0
  %3180 = vmatprep.subr.bf16.mxu0 0
  %3181 = vmatpush1.bf16.msra.mxu0 0
  %3182 = vmatprep.subr.bf16.mxu0 0
  %3183 = vmatpush1.bf16.msra.mxu0 0
  %3184 = vmatprep.subr.bf16.mxu0 0
  %3185 = vmatpush1.bf16.msra.mxu0 0
  %3186 = vmatprep.mubr.bf16.mxu0 0
  %3187 = vmatmul.mubr.bf16.gmra.mrb[0].mxu0 %v3131
  %v3188 = vpop.f32.mrb[0].mxu0
  %v3189 = vadd.f32 %v3117, %v3188
  %v3190 = vpop.f32.mrb[0].mxu0
  %v3191 = vpop.f32.mrb[0].mxu0
  %v3192 = vadd.f32 %v3117, %v3191
  %v3193 = vpop.f32.mrb[0].mxu0
  %3194 = vmatprep.mubr.bf16.mxu0 0
  %3195 = vmatmul.mubr.bf16.gmra.mrb[0].mxu0 %v3134
  %v3196 = vpop.f32.mrb[0].mxu0
  %v3197 = vadd.f32 %v3117, %v3196
  %v3198 = vpop.f32.mrb[0].mxu0
  %v3199 = vpop.f32.mrb[0].mxu0
  %v3200 = vadd.f32 %v3117, %v3199
  %v3201 = vpop.f32.mrb[0].mxu0
  %3202 = vmatprep.mubr.bf16.mxu0 0
  %3203 = vmatmul.mubr.bf16.gmra.mrb[0].mxu0 %v3137
  %v3204 = vpop.f32.mrb[0].mxu0
  %v3205 = vadd.f32 %v3117, %v3204
  %v3206 = vpop.f32.mrb[0].mxu0
  %v3207 = vpop.f32.mrb[0].mxu0
  %v3208 = vadd.f32 %v3117, %v3207
  %v3209 = vpop.f32.mrb[0].mxu0
  %3210 = vmatprep.mubr.bf16.mxu0 0
  %3211 = vmatmul.mubr.bf16.gmra.mrb[0].mxu0 %v3140
  %v3212 = vpop.f32.mrb[0].mxu0
  %v3213 = vadd.f32 %v3117, %v3212
  %v3214 = vpop.f32.mrb[0].mxu0
  %v3215 = vpop.f32.mrb[0].mxu0
  %v3216 = vadd.f32 %v3117, %v3215
  %v3217 = vpop.f32.mrb[0].mxu0
  %3218 = vmatprep.mubr.bf16.mxu0 0
  %3219 = vmatmul.mubr.bf16.gmra.mrb[0].mxu0 %v3143
  %v3220 = vpop.f32.mrb[0].mxu0
  %v3221 = vadd.f32 %v3117, %v3220
  %v3222 = vpop.f32.mrb[0].mxu0
  %v3223 = vpop.f32.mrb[0].mxu0
  %v3224 = vadd.f32 %v3117, %v3223
  %v3225 = vpop.f32.mrb[0].mxu0
  %3226 = vmatprep.mubr.bf16.mxu0 0
  %3227 = vmatmul.mubr.bf16.gmra.mrb[0].mxu0 %v3146
  %v3228 = vpop.f32.mrb[0].mxu0
  %v3229 = vadd.f32 %v3117, %v3228
  %v3230 = vpop.f32.mrb[0].mxu0
  %v3231 = vpop.f32.mrb[0].mxu0
  %v3232 = vadd.f32 %v3117, %v3231
  %v3233 = vpop.f32.mrb[0].mxu0
  %3234 = vmatprep.mubr.bf16.mxu0 0
  %3235 = vmatmul.mubr.bf16.gmra.mrb[0].mxu0 %v3149
  %v3236 = vpop.f32.mrb[0].mxu0
  %v3237 = vadd.f32 %v3117, %v3236
  %v3238 = vpop.f32.mrb[0].mxu0
  %v3239 = vpop.f32.mrb[0].mxu0
  %v3240 = vadd.f32 %v3117, %v3239
  %v3241 = vpop.f32.mrb[0].mxu0
  %3242 = vmatprep.mubr.bf16.mxu0 0
  %3243 = vmatmul.mubr.bf16.gmra.mrb[0].mxu0 %v3152
  %v3244 = vpop.f32.mrb[0].mxu0
  %v3245 = vadd.f32 %v3117, %v3244
  %v3246 = vpop.f32.mrb[0].mxu0
  %v3247 = vpop.f32.mrb[0].mxu0
  %v3248 = vadd.f32 %v3117, %v3247
  %v3249 = vpop.f32.mrb[0].mxu0
  %3250 = vdwg.mxu0
  %v3251 = vadd.f32 %v44, %v3189
  %v3252 = vadd.f32 %v45, %v3192
  %v3253 = vadd.f32 %v46, %v3197
  %v3254 = vadd.f32 %v47, %v3200
  %v3255 = vadd.f32 %v48, %v3205
  %v3256 = vadd.f32 %v49, %v3208
  %v3257 = vadd.f32 %v50, %v3213
  %v3258 = vadd.f32 %v51, %v3216
  %v3259 = vadd.f32 %v81, %v3221
  %v3260 = vadd.f32 %v82, %v3224
  %v3261 = vadd.f32 %v83, %v3229
  %v3262 = vadd.f32 %v84, %v3232
  %v3263 = vadd.f32 %v85, %v3237
  %v3264 = vadd.f32 %v86, %v3240
  %v3265 = vadd.f32 %v87, %v3245
  %v3266 = vadd.f32 %v88, %v3248
  %v3267 = vsel %vm99, %v3251, 0.0
  %3268 = vadd.xlane.f32.xlu0 %v3267
  %v3269 = vpop.xlane.xlu0 %3268
  %v3270 = vsel %vm99, %v3252, 0.0
  %3271 = vadd.xlane.f32.xlu0 %v3270
  %v3272 = vpop.xlane.xlu0 %3271
  %v3273 = vsel %vm99, %v3253, 0.0
  %3274 = vadd.xlane.f32.xlu0 %v3273
  %v3275 = vpop.xlane.xlu0 %3274
  %v3276 = vsel %vm99, %v3254, 0.0
  %3277 = vadd.xlane.f32.xlu0 %v3276
  %v3278 = vpop.xlane.xlu0 %3277
  %v3279 = vsel %vm99, %v3255, 0.0
  %3280 = vadd.xlane.f32.xlu0 %v3279
  %v3281 = vpop.xlane.xlu0 %3280
  %v3282 = vsel %vm99, %v3256, 0.0
  %3283 = vadd.xlane.f32.xlu0 %v3282
  %v3284 = vpop.xlane.xlu0 %3283
  %v3285 = vsel %vm99, %v3257, 0.0
  %3286 = vadd.xlane.f32.xlu0 %v3285
  %v3287 = vpop.xlane.xlu0 %3286
  %v3288 = vsel %vm99, %v3258, 0.0
  %3289 = vadd.xlane.f32.xlu0 %v3288
  %v3290 = vpop.xlane.xlu0 %3289
  %v3291 = vsel %vm99, %v3259, 0.0
  %3292 = vadd.xlane.f32.xlu0 %v3291
  %v3293 = vpop.xlane.xlu0 %3292
  %v3294 = vsel %vm99, %v3260, 0.0
  %3295 = vadd.xlane.f32.xlu0 %v3294
  %v3296 = vpop.xlane.xlu0 %3295
  %v3297 = vsel %vm99, %v3261, 0.0
  %3298 = vadd.xlane.f32.xlu0 %v3297
  %v3299 = vpop.xlane.xlu0 %3298
  %v3300 = vsel %vm99, %v3262, 0.0
  %3301 = vadd.xlane.f32.xlu0 %v3300
  %v3302 = vpop.xlane.xlu0 %3301
  %v3303 = vsel %vm99, %v3263, 0.0
  %3304 = vadd.xlane.f32.xlu0 %v3303
  %v3305 = vpop.xlane.xlu0 %3304
  %v3306 = vsel %vm99, %v3264, 0.0
  %3307 = vadd.xlane.f32.xlu0 %v3306
  %v3308 = vpop.xlane.xlu0 %3307
  %v3309 = vsel %vm99, %v3265, 0.0
  %3310 = vadd.xlane.f32.xlu0 %v3309
  %v3311 = vpop.xlane.xlu0 %3310
  %v3312 = vsel %vm99, %v3266, 0.0
  %3313 = vadd.xlane.f32.xlu0 %v3312
  %v3314 = vpop.xlane.xlu0 %3313
  %v3315 = vmul.f32 %v3269, %v148
  %v3316 = vmul.f32 %v3272, %v148
  %v3317 = vmul.f32 %v3275, %v148
  %v3318 = vmul.f32 %v3278, %v148
  %v3319 = vmul.f32 %v3281, %v148
  %v3320 = vmul.f32 %v3284, %v148
  %v3321 = vmul.f32 %v3287, %v148
  %v3322 = vmul.f32 %v3290, %v148
  %v3323 = vmul.f32 %v3293, %v148
  %v3324 = vmul.f32 %v3296, %v148
  %v3325 = vmul.f32 %v3299, %v148
  %v3326 = vmul.f32 %v3302, %v148
  %v3327 = vmul.f32 %v3305, %v148
  %v3328 = vmul.f32 %v3308, %v148
  %v3329 = vmul.f32 %v3311, %v148
  %v3330 = vmul.f32 %v3314, %v148
  %v3331 = vsub.f32 %v3251, %v3315
  %v3332 = vsub.f32 %v3252, %v3316
  %v3333 = vsub.f32 %v3253, %v3317
  %v3334 = vsub.f32 %v3254, %v3318
  %v3335 = vsub.f32 %v3255, %v3319
  %v3336 = vsub.f32 %v3256, %v3320
  %v3337 = vsub.f32 %v3257, %v3321
  %v3338 = vsub.f32 %v3258, %v3322
  %v3339 = vsub.f32 %v3259, %v3323
  %v3340 = vsub.f32 %v3260, %v3324
  %v3341 = vsub.f32 %v3261, %v3325
  %v3342 = vsub.f32 %v3262, %v3326
  %v3343 = vsub.f32 %v3263, %v3327
  %v3344 = vsub.f32 %v3264, %v3328
  %v3345 = vsub.f32 %v3265, %v3329
  %v3346 = vsub.f32 %v3266, %v3330
  %v3347 = vmul.f32 %v3331, %v3331
  %v3348 = vmul.f32 %v3332, %v3332
  %v3349 = vmul.f32 %v3333, %v3333
  %v3350 = vmul.f32 %v3334, %v3334
  %v3351 = vmul.f32 %v3335, %v3335
  %v3352 = vmul.f32 %v3336, %v3336
  %v3353 = vmul.f32 %v3337, %v3337
  %v3354 = vmul.f32 %v3338, %v3338
  %v3355 = vmul.f32 %v3339, %v3339
  %v3356 = vmul.f32 %v3340, %v3340
  %v3357 = vmul.f32 %v3341, %v3341
  %v3358 = vmul.f32 %v3342, %v3342
  %v3359 = vmul.f32 %v3343, %v3343
  %v3360 = vmul.f32 %v3344, %v3344
  %v3361 = vmul.f32 %v3345, %v3345
  %v3362 = vmul.f32 %v3346, %v3346
  %v3363 = vsel %vm99, %v3347, 0.0
  %3364 = vadd.xlane.f32.xlu0 %v3363
  %v3365 = vpop.xlane.xlu0 %3364
  %v3366 = vsel %vm99, %v3348, 0.0
  %3367 = vadd.xlane.f32.xlu0 %v3366
  %v3368 = vpop.xlane.xlu0 %3367
  %v3369 = vsel %vm99, %v3349, 0.0
  %3370 = vadd.xlane.f32.xlu0 %v3369
  %v3371 = vpop.xlane.xlu0 %3370
  %v3372 = vsel %vm99, %v3350, 0.0
  %3373 = vadd.xlane.f32.xlu0 %v3372
  %v3374 = vpop.xlane.xlu0 %3373
  %v3375 = vsel %vm99, %v3351, 0.0
  %3376 = vadd.xlane.f32.xlu0 %v3375
  %v3377 = vpop.xlane.xlu0 %3376
  %v3378 = vsel %vm99, %v3352, 0.0
  %3379 = vadd.xlane.f32.xlu0 %v3378
  %v3380 = vpop.xlane.xlu0 %3379
  %v3381 = vsel %vm99, %v3353, 0.0
  %3382 = vadd.xlane.f32.xlu0 %v3381
  %v3383 = vpop.xlane.xlu0 %3382
  %v3384 = vsel %vm99, %v3354, 0.0
  %3385 = vadd.xlane.f32.xlu0 %v3384
  %v3386 = vpop.xlane.xlu0 %3385
  %v3387 = vsel %vm99, %v3355, 0.0
  %3388 = vadd.xlane.f32.xlu0 %v3387
  %v3389 = vpop.xlane.xlu0 %3388
  %v3390 = vsel %vm99, %v3356, 0.0
  %3391 = vadd.xlane.f32.xlu0 %v3390
  %v3392 = vpop.xlane.xlu0 %3391
  %v3393 = vsel %vm99, %v3357, 0.0
  %3394 = vadd.xlane.f32.xlu0 %v3393
  %v3395 = vpop.xlane.xlu0 %3394
  %v3396 = vsel %vm99, %v3358, 0.0
  %3397 = vadd.xlane.f32.xlu0 %v3396
  %v3398 = vpop.xlane.xlu0 %3397
  %v3399 = vsel %vm99, %v3359, 0.0
  %3400 = vadd.xlane.f32.xlu0 %v3399
  %v3401 = vpop.xlane.xlu0 %3400
  %v3402 = vsel %vm99, %v3360, 0.0
  %3403 = vadd.xlane.f32.xlu0 %v3402
  %v3404 = vpop.xlane.xlu0 %3403
  %v3405 = vsel %vm99, %v3361, 0.0
  %3406 = vadd.xlane.f32.xlu0 %v3405
  %v3407 = vpop.xlane.xlu0 %3406
  %v3408 = vsel %vm99, %v3362, 0.0
  %3409 = vadd.xlane.f32.xlu0 %v3408
  %v3410 = vpop.xlane.xlu0 %3409
  %v3411 = vmul.f32 %v3365, %v148
  %v3412 = vmul.f32 %v3368, %v148
  %v3413 = vmul.f32 %v3371, %v148
  %v3414 = vmul.f32 %v3374, %v148
  %v3415 = vmul.f32 %v3377, %v148
  %v3416 = vmul.f32 %v3380, %v148
  %v3417 = vmul.f32 %v3383, %v148
  %v3418 = vmul.f32 %v3386, %v148
  %v3419 = vmul.f32 %v3389, %v148
  %v3420 = vmul.f32 %v3392, %v148
  %v3421 = vmul.f32 %v3395, %v148
  %v3422 = vmul.f32 %v3398, %v148
  %v3423 = vmul.f32 %v3401, %v148
  %v3424 = vmul.f32 %v3404, %v148
  %v3425 = vmul.f32 %v3407, %v148
  %v3426 = vmul.f32 %v3410, %v148
  %v3427 = vadd.f32 %v3411, 1e-05
  %v3428 = vadd.f32 %v3412, 1e-05
  %v3429 = vadd.f32 %v3413, 1e-05
  %v3430 = vadd.f32 %v3414, 1e-05
  %v3431 = vadd.f32 %v3415, 1e-05
  %v3432 = vadd.f32 %v3416, 1e-05
  %v3433 = vadd.f32 %v3417, 1e-05
  %v3434 = vadd.f32 %v3418, 1e-05
  %v3435 = vadd.f32 %v3419, 1e-05
  %v3436 = vadd.f32 %v3420, 1e-05
  %v3437 = vadd.f32 %v3421, 1e-05
  %v3438 = vadd.f32 %v3422, 1e-05
  %v3439 = vadd.f32 %v3423, 1e-05
  %v3440 = vadd.f32 %v3424, 1e-05
  %v3441 = vadd.f32 %v3425, 1e-05
  %v3442 = vadd.f32 %v3426, 1e-05
  %v3443 = vrsqrt.pop %v3427
  %v3444 = vrsqrt.pop %v3428
  %v3445 = vrsqrt.pop %v3429
  %v3446 = vrsqrt.pop %v3430
  %v3447 = vrsqrt.pop %v3431
  %v3448 = vrsqrt.pop %v3432
  %v3449 = vrsqrt.pop %v3433
  %v3450 = vrsqrt.pop %v3434
  %v3451 = vrsqrt.pop %v3435
  %v3452 = vrsqrt.pop %v3436
  %v3453 = vrsqrt.pop %v3437
  %v3454 = vrsqrt.pop %v3438
  %v3455 = vrsqrt.pop %v3439
  %v3456 = vrsqrt.pop %v3440
  %v3457 = vrsqrt.pop %v3441
  %v3458 = vrsqrt.pop %v3442
  %v3459 = vmul.f32 %v3331, %v3443
  %v3460 = vmul.f32 %v3332, %v3444
  %v3461 = vmul.f32 %v3333, %v3445
  %v3462 = vmul.f32 %v3334, %v3446
  %v3463 = vmul.f32 %v3335, %v3447
  %v3464 = vmul.f32 %v3336, %v3448
  %v3465 = vmul.f32 %v3337, %v3449
  %v3466 = vmul.f32 %v3338, %v3450
  %v3467 = vmul.f32 %v3339, %v3451
  %v3468 = vmul.f32 %v3340, %v3452
  %v3469 = vmul.f32 %v3341, %v3453
  %v3470 = vmul.f32 %v3342, %v3454
  %v3471 = vmul.f32 %v3343, %v3455
  %v3472 = vmul.f32 %v3344, %v3456
  %v3473 = vmul.f32 %v3345, %v3457
  %v3474 = vmul.f32 %v3346, %v3458
  %v3475 = vlaneseq
  %v3476 = vshrl.u32 %v3475, 7
  %v3477 = vsub.s32 2, %v3476
  %v3478 = vrot.slane %v97, %v3477
  %v3479 = vmul.f32 %v3459, %v3478
  %v3480 = vmul.f32 %v3460, %v3478
  %v3481 = vmul.f32 %v3461, %v3478
  %v3482 = vmul.f32 %v3462, %v3478
  %v3483 = vmul.f32 %v3463, %v3478
  %v3484 = vmul.f32 %v3464, %v3478
  %v3485 = vmul.f32 %v3465, %v3478
  %v3486 = vmul.f32 %v3466, %v3478
  %v3487 = vmul.f32 %v3467, %v3478
  %v3488 = vmul.f32 %v3468, %v3478
  %v3489 = vmul.f32 %v3469, %v3478
  %v3490 = vmul.f32 %v3470, %v3478
  %v3491 = vmul.f32 %v3471, %v3478
  %v3492 = vmul.f32 %v3472, %v3478
  %v3493 = vmul.f32 %v3473, %v3478
  %v3494 = vmul.f32 %v3474, %v3478
  %v3495 = vlaneseq
  %v3496 = vshrl.u32 %v3495, 7
  %v3497 = vsub.s32 3, %v3496
  %v3498 = vrot.slane %v97, %v3497
  %v3499 = vadd.f32 %v3479, %v3498
  %v3500 = vadd.f32 %v3480, %v3498
  %v3501 = vadd.f32 %v3481, %v3498
  %v3502 = vadd.f32 %v3482, %v3498
  %v3503 = vadd.f32 %v3483, %v3498
  %v3504 = vadd.f32 %v3484, %v3498
  %v3505 = vadd.f32 %v3485, %v3498
  %v3506 = vadd.f32 %v3486, %v3498
  %v3507 = vadd.f32 %v3487, %v3498
  %v3508 = vadd.f32 %v3488, %v3498
  %v3509 = vadd.f32 %v3489, %v3498
  %v3510 = vadd.f32 %v3490, %v3498
  %v3511 = vadd.f32 %v3491, %v3498
  %v3512 = vadd.f32 %v3492, %v3498
  %v3513 = vadd.f32 %v3493, %v3498
  %v3514 = vadd.f32 %v3494, %v3498
  %v3515 = vpack.c.bf16 %v3500, %v3499
  %v3516 = vpack.c.bf16 %v3502, %v3501
  %v3517 = vpack.c.bf16 %v3504, %v3503
  %v3518 = vpack.c.bf16 %v3506, %v3505
  %v3519 = vpack.c.bf16 %v3508, %v3507
  %v3520 = vpack.c.bf16 %v3510, %v3509
  %v3521 = vpack.c.bf16 %v3512, %v3511
  %v3522 = vpack.c.bf16 %v3514, %v3513
  %v3523 = vld [vmem:[%s4] sm:$0xf]
  %v3524 = vld [vmem:[%s4 + $0x4] sm:$0xf]
  %v3525 = vld [vmem:[%s4 + $0x8] sm:$0xf]
  %v3526 = vld [vmem:[%s4 + $0xc] sm:$0xf]
  %v3527 = vlaneseq
  %v3528 = vshrl.u32 %v3527, 7
  %v3529 = vsub.s32 0, %v3528
  %v3530 = vrot.slane %v98, %v3529
  %v3535 = vunpack.c.l.b16 %v3523
  %v3536 = vunpack.c.l.b16 %v3524
  %v3537 = vunpack.c.l.b16 %v3525
  %v3538 = vunpack.c.l.b16 %v3526
  %v3539 = vpack.c.b16 %v3536, %v3535
  %v3540 = vpack.c.b16 %v3538, %v3537
  %v3544 = vsel %vm99, %v3515, 0
  %v3547 = vsel %vm99, %v3516, 0
  %v3550 = vsel %vm99, %v3517, 0
  %v3553 = vsel %vm99, %v3518, 0
  %v3556 = vsel %vm99, %v3519, 0
  %v3559 = vsel %vm99, %v3520, 0
  %v3562 = vsel %vm99, %v3521, 0
  %v3565 = vsel %vm99, %v3522, 0
  %3567 = vmatprep.subr.bf16.mxu0 0
  %3568 = vmatpush1.bf16.msra.mxu0 %v3539
  %3569 = vmatprep.subr.bf16.mxu0 0
  %3570 = vmatpush1.bf16.msra.mxu0 %v3540
  %3571 = vmatprep.subr.bf16.mxu0 0
  %3572 = vmatpush1.bf16.msra.mxu0 0
  %3573 = vmatprep.subr.bf16.mxu0 0
  %3574 = vmatpush1.bf16.msra.mxu0 0
  %3575 = vmatprep.subr.bf16.mxu0 0
  %3576 = vmatpush1.bf16.msra.mxu0 0
  %3577 = vmatprep.subr.bf16.mxu0 0
  %3578 = vmatpush1.bf16.msra.mxu0 0
  %3579 = vmatprep.subr.bf16.mxu0 0
  %3580 = vmatpush1.bf16.msra.mxu0 0
  %3581 = vmatprep.subr.bf16.mxu0 0
  %3582 = vmatpush1.bf16.msra.mxu0 0
  %3583 = vmatprep.subr.bf16.mxu0 0
  %3584 = vmatpush1.bf16.msra.mxu0 0
  %3585 = vmatprep.subr.bf16.mxu0 0
  %3586 = vmatpush1.bf16.msra.mxu0 0
  %3587 = vmatprep.subr.bf16.mxu0 0
  %3588 = vmatpush1.bf16.msra.mxu0 0
  %3589 = vmatprep.subr.bf16.mxu0 0
  %3590 = vmatpush1.bf16.msra.mxu0 0
  %3591 = vmatprep.subr.bf16.mxu0 0
  %3592 = vmatpush1.bf16.msra.mxu0 0
  %3593 = vmatprep.subr.bf16.mxu0 0
  %3594 = vmatpush1.bf16.msra.mxu0 0
  %3595 = vmatprep.subr.bf16.mxu0 0
  %3596 = vmatpush1.bf16.msra.mxu0 0
  %3597 = vmatprep.subr.bf16.mxu0 0
  %3598 = vmatpush1.bf16.msra.mxu0 0
  %3599 = vmatprep.mubr.bf16.mxu0 0
  %3600 = vmatmul.mubr.bf16.gmra.mrb[0].mxu0 %v3544
  %v3601 = vpop.f32.mrb[0].mxu0
  %v3602 = vadd.f32 %v3530, %v3601
  %v3603 = vpop.f32.mrb[0].mxu0
  %v3604 = vpop.f32.mrb[0].mxu0
  %v3605 = vadd.f32 %v3530, %v3604
  %v3606 = vpop.f32.mrb[0].mxu0
  %3607 = vmatprep.mubr.bf16.mxu0 0
  %3608 = vmatmul.mubr.bf16.gmra.mrb[0].mxu0 %v3547
  %v3609 = vpop.f32.mrb[0].mxu0
  %v3610 = vadd.f32 %v3530, %v3609
  %v3611 = vpop.f32.mrb[0].mxu0
  %v3612 = vpop.f32.mrb[0].mxu0
  %v3613 = vadd.f32 %v3530, %v3612
  %v3614 = vpop.f32.mrb[0].mxu0
  %3615 = vmatprep.mubr.bf16.mxu0 0
  %3616 = vmatmul.mubr.bf16.gmra.mrb[0].mxu0 %v3550
  %v3617 = vpop.f32.mrb[0].mxu0
  %v3618 = vadd.f32 %v3530, %v3617
  %v3619 = vpop.f32.mrb[0].mxu0
  %v3620 = vpop.f32.mrb[0].mxu0
  %v3621 = vadd.f32 %v3530, %v3620
  %v3622 = vpop.f32.mrb[0].mxu0
  %3623 = vmatprep.mubr.bf16.mxu0 0
  %3624 = vmatmul.mubr.bf16.gmra.mrb[0].mxu0 %v3553
  %v3625 = vpop.f32.mrb[0].mxu0
  %v3626 = vadd.f32 %v3530, %v3625
  %v3627 = vpop.f32.mrb[0].mxu0
  %v3628 = vpop.f32.mrb[0].mxu0
  %v3629 = vadd.f32 %v3530, %v3628
  %v3630 = vpop.f32.mrb[0].mxu0
  %3631 = vmatprep.mubr.bf16.mxu0 0
  %3632 = vmatmul.mubr.bf16.gmra.mrb[0].mxu0 %v3556
  %v3633 = vpop.f32.mrb[0].mxu0
  %v3634 = vadd.f32 %v3530, %v3633
  %v3635 = vpop.f32.mrb[0].mxu0
  %v3636 = vpop.f32.mrb[0].mxu0
  %v3637 = vadd.f32 %v3530, %v3636
  %v3638 = vpop.f32.mrb[0].mxu0
  %3639 = vmatprep.mubr.bf16.mxu0 0
  %3640 = vmatmul.mubr.bf16.gmra.mrb[0].mxu0 %v3559
  %v3641 = vpop.f32.mrb[0].mxu0
  %v3642 = vadd.f32 %v3530, %v3641
  %v3643 = vpop.f32.mrb[0].mxu0
  %v3644 = vpop.f32.mrb[0].mxu0
  %v3645 = vadd.f32 %v3530, %v3644
  %v3646 = vpop.f32.mrb[0].mxu0
  %3647 = vmatprep.mubr.bf16.mxu0 0
  %3648 = vmatmul.mubr.bf16.gmra.mrb[0].mxu0 %v3562
  %v3649 = vpop.f32.mrb[0].mxu0
  %v3650 = vadd.f32 %v3530, %v3649
  %v3651 = vpop.f32.mrb[0].mxu0
  %v3652 = vpop.f32.mrb[0].mxu0
  %v3653 = vadd.f32 %v3530, %v3652
  %v3654 = vpop.f32.mrb[0].mxu0
  %3655 = vmatprep.mubr.bf16.mxu0 0
  %3656 = vmatmul.mubr.bf16.gmra.mrb[0].mxu0 %v3565
  %v3657 = vpop.f32.mrb[0].mxu0
  %v3658 = vadd.f32 %v3530, %v3657
  %v3659 = vpop.f32.mrb[0].mxu0
  %v3660 = vpop.f32.mrb[0].mxu0
  %v3661 = vadd.f32 %v3530, %v3660
  %v3662 = vpop.f32.mrb[0].mxu0
  %3663 = vdwg.mxu0
  %v3664 = vmul.f32 %v3602, 0.5
  %v3665 = vmul.f32 %v3605, 0.5
  %v3666 = vmul.f32 %v3610, 0.5
  %v3667 = vmul.f32 %v3613, 0.5
  %v3668 = vmul.f32 %v3618, 0.5
  %v3669 = vmul.f32 %v3621, 0.5
  %v3670 = vmul.f32 %v3626, 0.5
  %v3671 = vmul.f32 %v3629, 0.5
  %v3672 = vmul.f32 %v3634, 0.5
  %v3673 = vmul.f32 %v3637, 0.5
  %v3674 = vmul.f32 %v3642, 0.5
  %v3675 = vmul.f32 %v3645, 0.5
  %v3676 = vmul.f32 %v3650, 0.5
  %v3677 = vmul.f32 %v3653, 0.5
  %v3678 = vmul.f32 %v3658, 0.5
  %v3679 = vmul.f32 %v3661, 0.5
  %v3680 = vmul.f32 %v3602, 0.044715
  %v3681 = vmul.f32 %v3605, 0.044715
  %v3682 = vmul.f32 %v3610, 0.044715
  %v3683 = vmul.f32 %v3613, 0.044715
  %v3684 = vmul.f32 %v3618, 0.044715
  %v3685 = vmul.f32 %v3621, 0.044715
  %v3686 = vmul.f32 %v3626, 0.044715
  %v3687 = vmul.f32 %v3629, 0.044715
  %v3688 = vmul.f32 %v3634, 0.044715
  %v3689 = vmul.f32 %v3637, 0.044715
  %v3690 = vmul.f32 %v3642, 0.044715
  %v3691 = vmul.f32 %v3645, 0.044715
  %v3692 = vmul.f32 %v3650, 0.044715
  %v3693 = vmul.f32 %v3653, 0.044715
  %v3694 = vmul.f32 %v3658, 0.044715
  %v3695 = vmul.f32 %v3661, 0.044715
  %v3696 = vmul.f32 %v3680, %v3602
  %v3697 = vmul.f32 %v3681, %v3605
  %v3698 = vmul.f32 %v3682, %v3610
  %v3699 = vmul.f32 %v3683, %v3613
  %v3700 = vmul.f32 %v3684, %v3618
  %v3701 = vmul.f32 %v3685, %v3621
  %v3702 = vmul.f32 %v3686, %v3626
  %v3703 = vmul.f32 %v3687, %v3629
  %v3704 = vmul.f32 %v3688, %v3634
  %v3705 = vmul.f32 %v3689, %v3637
  %v3706 = vmul.f32 %v3690, %v3642
  %v3707 = vmul.f32 %v3691, %v3645
  %v3708 = vmul.f32 %v3692, %v3650
  %v3709 = vmul.f32 %v3693, %v3653
  %v3710 = vmul.f32 %v3694, %v3658
  %v3711 = vmul.f32 %v3695, %v3661
  %v3712 = vmul.f32 %v3696, %v3602
  %v3713 = vmul.f32 %v3697, %v3605
  %v3714 = vmul.f32 %v3698, %v3610
  %v3715 = vmul.f32 %v3699, %v3613
  %v3716 = vmul.f32 %v3700, %v3618
  %v3717 = vmul.f32 %v3701, %v3621
  %v3718 = vmul.f32 %v3702, %v3626
  %v3719 = vmul.f32 %v3703, %v3629
  %v3720 = vmul.f32 %v3704, %v3634
  %v3721 = vmul.f32 %v3705, %v3637
  %v3722 = vmul.f32 %v3706, %v3642
  %v3723 = vmul.f32 %v3707, %v3645
  %v3724 = vmul.f32 %v3708, %v3650
  %v3725 = vmul.f32 %v3709, %v3653
  %v3726 = vmul.f32 %v3710, %v3658
  %v3727 = vmul.f32 %v3711, %v3661
  %v3728 = vadd.f32 %v3602, %v3712
  %v3729 = vadd.f32 %v3605, %v3713
  %v3730 = vadd.f32 %v3610, %v3714
  %v3731 = vadd.f32 %v3613, %v3715
  %v3732 = vadd.f32 %v3618, %v3716
  %v3733 = vadd.f32 %v3621, %v3717
  %v3734 = vadd.f32 %v3626, %v3718
  %v3735 = vadd.f32 %v3629, %v3719
  %v3736 = vadd.f32 %v3634, %v3720
  %v3737 = vadd.f32 %v3637, %v3721
  %v3738 = vadd.f32 %v3642, %v3722
  %v3739 = vadd.f32 %v3645, %v3723
  %v3740 = vadd.f32 %v3650, %v3724
  %v3741 = vadd.f32 %v3653, %v3725
  %v3742 = vadd.f32 %v3658, %v3726
  %v3743 = vadd.f32 %v3661, %v3727
  %v3744 = vmul.f32 %v3728, 0.7978846
  %v3745 = vmul.f32 %v3729, 0.7978846
  %v3746 = vmul.f32 %v3730, 0.7978846
  %v3747 = vmul.f32 %v3731, 0.7978846
  %v3748 = vmul.f32 %v3732, 0.7978846
  %v3749 = vmul.f32 %v3733, 0.7978846
  %v3750 = vmul.f32 %v3734, 0.7978846
  %v3751 = vmul.f32 %v3735, 0.7978846
  %v3752 = vmul.f32 %v3736, 0.7978846
  %v3753 = vmul.f32 %v3737, 0.7978846
  %v3754 = vmul.f32 %v3738, 0.7978846
  %v3755 = vmul.f32 %v3739, 0.7978846
  %v3756 = vmul.f32 %v3740, 0.7978846
  %v3757 = vmul.f32 %v3741, 0.7978846
  %v3758 = vmul.f32 %v3742, 0.7978846
  %v3759 = vmul.f32 %v3743, 0.7978846
  %v3760 = vtanh.pop %v3744
  %v3761 = vtanh.pop %v3745
  %v3762 = vtanh.pop %v3746
  %v3763 = vtanh.pop %v3747
  %v3764 = vtanh.pop %v3748
  %v3765 = vtanh.pop %v3749
  %v3766 = vtanh.pop %v3750
  %v3767 = vtanh.pop %v3751
  %v3768 = vtanh.pop %v3752
  %v3769 = vtanh.pop %v3753
  %v3770 = vtanh.pop %v3754
  %v3771 = vtanh.pop %v3755
  %v3772 = vtanh.pop %v3756
  %v3773 = vtanh.pop %v3757
  %v3774 = vtanh.pop %v3758
  %v3775 = vtanh.pop %v3759
  %v3776 = vadd.f32 %v3760, 1.0
  %v3777 = vadd.f32 %v3761, 1.0
  %v3778 = vadd.f32 %v3762, 1.0
  %v3779 = vadd.f32 %v3763, 1.0
  %v3780 = vadd.f32 %v3764, 1.0
  %v3781 = vadd.f32 %v3765, 1.0
  %v3782 = vadd.f32 %v3766, 1.0
  %v3783 = vadd.f32 %v3767, 1.0
  %v3784 = vadd.f32 %v3768, 1.0
  %v3785 = vadd.f32 %v3769, 1.0
  %v3786 = vadd.f32 %v3770, 1.0
  %v3787 = vadd.f32 %v3771, 1.0
  %v3788 = vadd.f32 %v3772, 1.0
  %v3789 = vadd.f32 %v3773, 1.0
  %v3790 = vadd.f32 %v3774, 1.0
  %v3791 = vadd.f32 %v3775, 1.0
  %v3792 = vmul.f32 %v3664, %v3776
  %v3793 = vmul.f32 %v3665, %v3777
  %v3794 = vmul.f32 %v3666, %v3778
  %v3795 = vmul.f32 %v3667, %v3779
  %v3796 = vmul.f32 %v3668, %v3780
  %v3797 = vmul.f32 %v3669, %v3781
  %v3798 = vmul.f32 %v3670, %v3782
  %v3799 = vmul.f32 %v3671, %v3783
  %v3800 = vmul.f32 %v3672, %v3784
  %v3801 = vmul.f32 %v3673, %v3785
  %v3802 = vmul.f32 %v3674, %v3786
  %v3803 = vmul.f32 %v3675, %v3787
  %v3804 = vmul.f32 %v3676, %v3788
  %v3805 = vmul.f32 %v3677, %v3789
  %v3806 = vmul.f32 %v3678, %v3790
  %v3807 = vmul.f32 %v3679, %v3791
  %v3808 = vpack.c.bf16 %v3793, %v3792
  %v3809 = vpack.c.bf16 %v3795, %v3794
  %v3810 = vpack.c.bf16 %v3797, %v3796
  %v3811 = vpack.c.bf16 %v3799, %v3798
  %v3812 = vpack.c.bf16 %v3801, %v3800
  %v3813 = vpack.c.bf16 %v3803, %v3802
  %v3814 = vpack.c.bf16 %v3805, %v3804
  %v3815 = vpack.c.bf16 %v3807, %v3806
  %v3816 = vld [vmem:[%s5] sm:$0xf]
  %v3817 = vld [vmem:[%s5 + $0x4] sm:$0xf]
  %v3818 = vld [vmem:[%s5 + $0x8] sm:$0xf]
  %v3819 = vld [vmem:[%s5 + $0xc] sm:$0xf]
  %v3820 = vld [vmem:[%s5 + $0x10] sm:$0xf]
  %v3821 = vld [vmem:[%s5 + $0x14] sm:$0xf]
  %v3822 = vld [vmem:[%s5 + $0x18] sm:$0xf]
  %v3823 = vld [vmem:[%s5 + $0x1c] sm:$0xf]
  %v3824 = vld [vmem:[%s5 + $0x20] sm:$0xf]
  %v3825 = vld [vmem:[%s5 + $0x24] sm:$0xf]
  %v3826 = vld [vmem:[%s5 + $0x28] sm:$0xf]
  %v3827 = vld [vmem:[%s5 + $0x2c] sm:$0xf]
  %v3828 = vld [vmem:[%s5 + $0x30] sm:$0xf]
  %v3829 = vld [vmem:[%s5 + $0x34] sm:$0xf]
  %v3830 = vld [vmem:[%s5 + $0x38] sm:$0xf]
  %v3831 = vld [vmem:[%s5 + $0x3c] sm:$0xf]
  %v3832 = vlaneseq
  %v3833 = vshrl.u32 %v3832, 7
  %v3834 = vsub.s32 7, %v3833
  %v3835 = vrot.slane %v97, %v3834
  %v3852 = vunpack.c.l.b16 %v3816
  %v3853 = vunpack.c.l.b16 %v3817
  %v3854 = vunpack.c.l.b16 %v3818
  %v3855 = vunpack.c.l.b16 %v3819
  %v3856 = vunpack.c.l.b16 %v3820
  %v3857 = vunpack.c.l.b16 %v3821
  %v3858 = vunpack.c.l.b16 %v3822
  %v3859 = vunpack.c.l.b16 %v3823
  %v3860 = vunpack.c.l.b16 %v3824
  %v3861 = vunpack.c.l.b16 %v3825
  %v3862 = vunpack.c.l.b16 %v3826
  %v3863 = vunpack.c.l.b16 %v3827
  %v3864 = vunpack.c.l.b16 %v3828
  %v3865 = vunpack.c.l.b16 %v3829
  %v3866 = vunpack.c.l.b16 %v3830
  %v3867 = vunpack.c.l.b16 %v3831
  %v3868 = vpack.c.b16 %v3853, %v3852
  %v3869 = vpack.c.b16 %v3855, %v3854
  %v3870 = vpack.c.b16 %v3857, %v3856
  %v3871 = vpack.c.b16 %v3859, %v3858
  %v3872 = vpack.c.b16 %v3861, %v3860
  %v3873 = vpack.c.b16 %v3863, %v3862
  %v3874 = vpack.c.b16 %v3865, %v3864
  %v3875 = vpack.c.b16 %v3867, %v3866
  %3884 = vmatprep.subr.bf16.mxu0 0
  %3885 = vmatpush1.bf16.msra.mxu0 %v3868
  %3886 = vmatprep.subr.bf16.mxu0 0
  %3887 = vmatpush1.bf16.msra.mxu0 %v3869
  %3888 = vmatprep.subr.bf16.mxu0 0
  %3889 = vmatpush1.bf16.msra.mxu0 %v3870
  %3890 = vmatprep.subr.bf16.mxu0 0
  %3891 = vmatpush1.bf16.msra.mxu0 %v3871
  %3892 = vmatprep.subr.bf16.mxu0 0
  %3893 = vmatpush1.bf16.msra.mxu0 %v3872
  %3894 = vmatprep.subr.bf16.mxu0 0
  %3895 = vmatpush1.bf16.msra.mxu0 %v3873
  %3896 = vmatprep.subr.bf16.mxu0 0
  %3897 = vmatpush1.bf16.msra.mxu0 %v3874
  %3898 = vmatprep.subr.bf16.mxu0 0
  %3899 = vmatpush1.bf16.msra.mxu0 %v3875
  %3900 = vmatprep.subr.bf16.mxu0 0
  %3901 = vmatpush1.bf16.msra.mxu0 0
  %3902 = vmatprep.subr.bf16.mxu0 0
  %3903 = vmatpush1.bf16.msra.mxu0 0
  %3904 = vmatprep.subr.bf16.mxu0 0
  %3905 = vmatpush1.bf16.msra.mxu0 0
  %3906 = vmatprep.subr.bf16.mxu0 0
  %3907 = vmatpush1.bf16.msra.mxu0 0
  %3908 = vmatprep.subr.bf16.mxu0 0
  %3909 = vmatpush1.bf16.msra.mxu0 0
  %3910 = vmatprep.subr.bf16.mxu0 0
  %3911 = vmatpush1.bf16.msra.mxu0 0
  %3912 = vmatprep.subr.bf16.mxu0 0
  %3913 = vmatpush1.bf16.msra.mxu0 0
  %3914 = vmatprep.subr.bf16.mxu0 0
  %3915 = vmatpush1.bf16.msra.mxu0 0
  %3916 = vmatprep.mubr.bf16.mxu0 0
  %3917 = vmatmul.mubr.bf16.gmra.mrb[0].mxu0 %v3808
  %v3918 = vpop.f32.mrb[0].mxu0
  %v3919 = vadd.f32 %v3835, %v3918
  %v3920 = vpop.f32.mrb[0].mxu0
  %v3921 = vpop.f32.mrb[0].mxu0
  %v3922 = vadd.f32 %v3835, %v3921
  %v3923 = vpop.f32.mrb[0].mxu0
  %3924 = vmatprep.mubr.bf16.mxu0 0
  %3925 = vmatmul.mubr.bf16.gmra.mrb[0].mxu0 %v3809
  %v3926 = vpop.f32.mrb[0].mxu0
  %v3927 = vadd.f32 %v3835, %v3926
  %v3928 = vpop.f32.mrb[0].mxu0
  %v3929 = vpop.f32.mrb[0].mxu0
  %v3930 = vadd.f32 %v3835, %v3929
  %v3931 = vpop.f32.mrb[0].mxu0
  %3932 = vmatprep.mubr.bf16.mxu0 0
  %3933 = vmatmul.mubr.bf16.gmra.mrb[0].mxu0 %v3810
  %v3934 = vpop.f32.mrb[0].mxu0
  %v3935 = vadd.f32 %v3835, %v3934
  %v3936 = vpop.f32.mrb[0].mxu0
  %v3937 = vpop.f32.mrb[0].mxu0
  %v3938 = vadd.f32 %v3835, %v3937
  %v3939 = vpop.f32.mrb[0].mxu0
  %3940 = vmatprep.mubr.bf16.mxu0 0
  %3941 = vmatmul.mubr.bf16.gmra.mrb[0].mxu0 %v3811
  %v3942 = vpop.f32.mrb[0].mxu0
  %v3943 = vadd.f32 %v3835, %v3942
  %v3944 = vpop.f32.mrb[0].mxu0
  %v3945 = vpop.f32.mrb[0].mxu0
  %v3946 = vadd.f32 %v3835, %v3945
  %v3947 = vpop.f32.mrb[0].mxu0
  %3948 = vmatprep.mubr.bf16.mxu0 0
  %3949 = vmatmul.mubr.bf16.gmra.mrb[0].mxu0 %v3812
  %v3950 = vpop.f32.mrb[0].mxu0
  %v3951 = vadd.f32 %v3835, %v3950
  %v3952 = vpop.f32.mrb[0].mxu0
  %v3953 = vpop.f32.mrb[0].mxu0
  %v3954 = vadd.f32 %v3835, %v3953
  %v3955 = vpop.f32.mrb[0].mxu0
  %3956 = vmatprep.mubr.bf16.mxu0 0
  %3957 = vmatmul.mubr.bf16.gmra.mrb[0].mxu0 %v3813
  %v3958 = vpop.f32.mrb[0].mxu0
  %v3959 = vadd.f32 %v3835, %v3958
  %v3960 = vpop.f32.mrb[0].mxu0
  %v3961 = vpop.f32.mrb[0].mxu0
  %v3962 = vadd.f32 %v3835, %v3961
  %v3963 = vpop.f32.mrb[0].mxu0
  %3964 = vmatprep.mubr.bf16.mxu0 0
  %3965 = vmatmul.mubr.bf16.gmra.mrb[0].mxu0 %v3814
  %v3966 = vpop.f32.mrb[0].mxu0
  %v3967 = vadd.f32 %v3835, %v3966
  %v3968 = vpop.f32.mrb[0].mxu0
  %v3969 = vpop.f32.mrb[0].mxu0
  %v3970 = vadd.f32 %v3835, %v3969
  %v3971 = vpop.f32.mrb[0].mxu0
  %3972 = vmatprep.mubr.bf16.mxu0 0
  %3973 = vmatmul.mubr.bf16.gmra.mrb[0].mxu0 %v3815
  %v3974 = vpop.f32.mrb[0].mxu0
  %v3975 = vadd.f32 %v3835, %v3974
  %v3976 = vpop.f32.mrb[0].mxu0
  %v3977 = vpop.f32.mrb[0].mxu0
  %v3978 = vadd.f32 %v3835, %v3977
  %v3979 = vpop.f32.mrb[0].mxu0
  %3980 = vdwg.mxu0
  %v3981 = vadd.f32 %v3251, %v3919
  %v3982 = vadd.f32 %v3252, %v3922
  %v3983 = vadd.f32 %v3253, %v3927
  %v3984 = vadd.f32 %v3254, %v3930
  %v3985 = vadd.f32 %v3255, %v3935
  %v3986 = vadd.f32 %v3256, %v3938
  %v3987 = vadd.f32 %v3257, %v3943
  %v3988 = vadd.f32 %v3258, %v3946
  %v3989 = vadd.f32 %v3259, %v3951
  %v3990 = vadd.f32 %v3260, %v3954
  %v3991 = vadd.f32 %v3261, %v3959
  %v3992 = vadd.f32 %v3262, %v3962
  %v3993 = vadd.f32 %v3263, %v3967
  %v3994 = vadd.f32 %v3264, %v3970
  %v3995 = vadd.f32 %v3265, %v3975
  %v3996 = vadd.f32 %v3266, %v3978
  %3997 = vxpose.xlu0.b32.start [1/16] %v3981, 128
  %3998 = vxpose.xlu0.b32.cont [2/16] %v3982, 128
  %3999 = vxpose.xlu0.b32.cont [3/16] %v3983, 128
  %4000 = vxpose.xlu0.b32.cont [4/16] %v3984, 128
  %4001 = vxpose.xlu0.b32.cont [5/16] %v3985, 128
  %4002 = vxpose.xlu0.b32.cont [6/16] %v3986, 128
  %4003 = vxpose.xlu0.b32.cont [7/16] %v3987, 128
  %4004 = vxpose.xlu0.b32.cont [8/16] %v3988, 128
  %4005 = vxpose.xlu0.b32.cont [9/16] 0.0, 128
  %4006 = vxpose.xlu0.b32.cont [10/16] 0.0, 128
  %4007 = vxpose.xlu0.b32.cont [11/16] 0.0, 128
  %4008 = vxpose.xlu0.b32.cont [12/16] 0.0, 128
  %4009 = vxpose.xlu0.b32.cont [13/16] 0.0, 128
  %4010 = vxpose.xlu0.b32.cont [14/16] 0.0, 128
  %4011 = vxpose.xlu0.b32.cont [15/16] 0.0, 128
  %4012 = vxpose.xlu0.b32.end [16/16] 0.0, 128
  %v4013 = vpop.trf.xlu0
  %v4014 = vpop.trf.xlu0
  %v4015 = vpop.trf.xlu0
  %v4016 = vpop.trf.xlu0
  %v4017 = vpop.trf.xlu0
  %v4018 = vpop.trf.xlu0
  %v4019 = vpop.trf.xlu0
  %v4020 = vpop.trf.xlu0
  %v4021 = vpop.trf.xlu0
  %v4022 = vpop.trf.xlu0
  %v4023 = vpop.trf.xlu0
  %v4024 = vpop.trf.xlu0
  %v4025 = vpop.trf.xlu0
  %v4026 = vpop.trf.xlu0
  %v4027 = vpop.trf.xlu0
  %v4028 = vpop.trf.xlu0
  %4029 = vst.msk [vmem:[%s6] sm:$0xff] %vm765, %v4013
  %4030 = vst.msk [vmem:[%s6 + $0x8] sm:$0xff] %vm765, %v4014
  %4031 = vst.msk [vmem:[%s6 + $0x10] sm:$0xff] %vm765, %v4015
  %4032 = vst.msk [vmem:[%s6 + $0x18] sm:$0xff] %vm765, %v4016
  %4033 = vxpose.xlu0.b32.start [1/16] %v3989, 128
  %4034 = vxpose.xlu0.b32.cont [2/16] %v3990, 128
  %4035 = vxpose.xlu0.b32.cont [3/16] %v3991, 128
  %4036 = vxpose.xlu0.b32.cont [4/16] %v3992, 128
  %4037 = vxpose.xlu0.b32.cont [5/16] %v3993, 128
  %4038 = vxpose.xlu0.b32.cont [6/16] %v3994, 128
  %4039 = vxpose.xlu0.b32.cont [7/16] %v3995, 128
  %4040 = vxpose.xlu0.b32.cont [8/16] %v3996, 128
  %4041 = vxpose.xlu0.b32.cont [9/16] 0.0, 128
  %4042 = vxpose.xlu0.b32.cont [10/16] 0.0, 128
  %4043 = vxpose.xlu0.b32.cont [11/16] 0.0, 128
  %4044 = vxpose.xlu0.b32.cont [12/16] 0.0, 128
  %4045 = vxpose.xlu0.b32.cont [13/16] 0.0, 128
  %4046 = vxpose.xlu0.b32.cont [14/16] 0.0, 128
  %4047 = vxpose.xlu0.b32.cont [15/16] 0.0, 128
  %4048 = vxpose.xlu0.b32.end [16/16] 0.0, 128
  %v4049 = vpop.trf.xlu0
  %v4050 = vpop.trf.xlu0
  %v4051 = vpop.trf.xlu0
  %v4052 = vpop.trf.xlu0
  %v4053 = vpop.trf.xlu0
  %v4054 = vpop.trf.xlu0
  %v4055 = vpop.trf.xlu0
  %v4056 = vpop.trf.xlu0
  %v4057 = vpop.trf.xlu0
  %v4058 = vpop.trf.xlu0
  %v4059 = vpop.trf.xlu0
  %v4060 = vpop.trf.xlu0
  %v4061 = vpop.trf.xlu0
  %v4062 = vpop.trf.xlu0
  %v4063 = vpop.trf.xlu0
  %v4064 = vpop.trf.xlu0
  %s4065 = scalar_lea.vmem %s6, 32
  %4066 = vst.msk [vmem:[%s4065] sm:$0xff] %vm765, %v4049
  %4067 = vst.msk [vmem:[%s4065 + $0x8] sm:$0xff] %vm765, %v4050
  %4068 = vst.msk [vmem:[%s4065 + $0x10] sm:$0xff] %vm765, %v4051
  %4069 = vst.msk [vmem:[%s4065 + $0x18] sm:$0xff] %vm765, %v4052
  // Predicated region
  $region26: #{basic_block_forward.1} parent=0 // pred_check
    _
  $region27: #{basic_block_forward.1} parent=0 // pred_check_branch
    %4071 = sbr.rel (0) target = $region29
  $region28: #{basic_block_forward.1} parent=0 // pred_region
    _
  $region29: #{basic_block_forward.1} parent=0 // pred_fallthru
    _
  // Predicated region
  $region30: #{basic_block_forward.1} parent=0 // pred_check
    _
  $region31: #{basic_block_forward.1} parent=0 // pred_check_branch
    %4073 = sbr.rel (0) target = $region33
  $region32: #{basic_block_forward.1} parent=0 // pred_region
    _
  $region33: #{basic_block_forward.1} parent=0 // pred_fallthru
    _

</llo_original>
